<compile_context>
chip_gen: v7x
topology: tpu7x:2x2x1
jax: 0.10.0
libtpu: 0.0.40
codegen_flags: <defaults>
</compile_context>

<pallas_src>
import jax
import jax.numpy as jnp
from jax import lax
from jax.experimental import pallas as pl
from jax.experimental.pallas import tpu as pltpu


def _round_up(x, m):
    return ((x + m - 1) // m) * m


# Contract the last dim of both operands (NT form): (Cp, CH) x (TBL, CH) -> (Cp, TBL).
_NT_DIMS = (((1,), (1,)), ((), ()))


def _critic_kernel(s_ref, a_ref, w1s_ref, w1a_ref, b1g_ref, w2t_ref, b2_ref,
                   o_ref):
    """One row tile of B*L; all K actions, G gammas, C critics fused.

    s_ref  : (TBL, S)             state rows (compute dtype)
    a_ref  : (K, G, TBL, A)       action rows (compute dtype)
    w1s_ref: (S, C*H)             fused first-layer weights, state part
    w1a_ref: (A, C*H)             fused first-layer weights, action part
    b1g_ref: (G, 1, C*H)   f32    per-gamma bias (gamma one-hot @ W1_g + b1)
    w2t_ref: (Cp, C*H)     f32    block-diagonal second layer, pre-transposed
    b2_ref : (Cp, 1)       f32    second-layer bias (rows >= C are zero)
    o_ref  : (K, G, Cp, TBL) f32  lane-dense output block
    """
    n_k = a_ref.shape[0]
    n_g = a_ref.shape[1]

    # Deepest contraction (S): computed exactly once per row tile, reused for
    # every (k, gamma) pair below.
    h_s = jnp.dot(s_ref[...], w1s_ref[...], preferred_element_type=jnp.float32)

    w1a = w1a_ref[...]
    w2t = w2t_ref[...]
    b2 = b2_ref[...]

    # K*G is small (e.g. 6): static unroll keeps indexing static and gives the
    # scheduler full visibility.
    for ki in range(n_k):
        for gi in range(n_g):
            h = h_s + jnp.dot(a_ref[ki, gi], w1a,
                              preferred_element_type=jnp.float32)
            h = h + b1g_ref[gi]                    # (1, C*H) broadcast
            h = jnp.where(h >= 0, h, 0.01 * h)     # LeakyReLU(0.01)
            # Second layer directly as (Cp, TBL): tiny-M LHS, TBL lane-dense N,
            # no XLU transpose of the result.
            q = lax.dot_general(w2t, h, _NT_DIMS,
                                preferred_element_type=jnp.float32)
            o_ref[ki, gi] = (q + b2).astype(o_ref.dtype)


def ensemble_critic_pallas(state2d, action4d, w1s, w1a, bias1, w2t, b2col, *,
                           compute_dtype=jnp.float32, max_tile_bl=2048,
                           min_row_tiles=1,
                           vmem_budget_bytes=20 * 1024 * 1024):
    """state2d: (BL, S); action4d: (K, G, BL, A).  Returns (K, G, Cp, BL) f32."""
    bl, s_dim = state2d.shape
    k, g, bl_a, a_dim = action4d.shape
    assert bl_a == bl
    c_pad, ch = w2t.shape

    # Balanced row tiles (<=127 rows of padding), multiples of 128.
    # On v7x pass min_row_tiles=2 for large BL so both TensorCores get work.
    n_tiles = max(min_row_tiles, pl.cdiv(bl, max_tile_bl))
    tile_bl = _round_up(pl.cdiv(bl, n_tiles), 128)

    itemsize = jnp.dtype(compute_dtype).itemsize

    def _vmem_footprint(t):
        in_blk = 2 * t * (s_dim + k * g * a_dim) * itemsize   # dbl-buffered in
        out_blk = 2 * t * k * g * c_pad * 4                    # dbl-buffered out
        interm = 2 * t * ch * 4                                 # h_s + h (f32)
        weights = (s_dim + a_dim) * ch * itemsize + (g + c_pad) * ch * 4
        return in_blk + out_blk + interm + weights

    while tile_bl > 128 and _vmem_footprint(tile_bl) > vmem_budget_bytes:
        tile_bl -= 128

    bl_pad = _round_up(bl, tile_bl)
    if bl_pad != bl:
        state2d = jnp.pad(state2d, ((0, bl_pad - bl), (0, 0)))
        action4d = jnp.pad(action4d, ((0, 0), (0, 0), (0, bl_pad - bl), (0, 0)))
    n_i = bl_pad // tile_bl

    # bf16 option (v6e/v7x): halves HBM bytes for the dominant streams and
    # avoids the multi-pass f32 MXU path.  Bias / LeakyReLU / second layer and
    # accumulation stay f32.
    state2d = state2d.astype(compute_dtype)
    action4d = action4d.astype(compute_dtype)
    w1s = w1s.astype(compute_dtype)
    w1a = w1a.astype(compute_dtype)

    flops = (2 * bl_pad * s_dim * ch
             + 2 * bl_pad * k * g * (a_dim * ch + ch * c_pad))
    bytes_accessed = ((bl_pad * s_dim + k * g * bl_pad * a_dim) * itemsize
                      + k * g * c_pad * bl_pad * 4
                      + (s_dim + a_dim) * ch * itemsize
                      + (g * ch + c_pad * ch + c_pad) * 4)

    out = pl.pallas_call(
        _critic_kernel,
        out_shape=jax.ShapeDtypeStruct((k, g, c_pad, bl_pad), jnp.float32),
        grid_spec=pltpu.PrefetchScalarGridSpec(
            num_scalar_prefetch=0,
            grid=(n_i,),
            in_specs=[
                pl.BlockSpec((tile_bl, s_dim), lambda i: (i, 0)),
                pl.BlockSpec((k, g, tile_bl, a_dim), lambda i: (0, 0, i, 0)),
                # weights / biases: constant block index -> VMEM-resident.
                pl.BlockSpec((s_dim, ch), lambda i: (0, 0)),
                pl.BlockSpec((a_dim, ch), lambda i: (0, 0)),
                pl.BlockSpec((g, 1, ch), lambda i: (0, 0, 0)),
                pl.BlockSpec((c_pad, ch), lambda i: (0, 0)),
                pl.BlockSpec((c_pad, 1), lambda i: (0, 0)),
            ],
            out_specs=pl.BlockSpec((k, g, c_pad, tile_bl),
                                   lambda i: (0, 0, 0, i)),
        ),
        compiler_params=pltpu.CompilerParams(
            dimension_semantics=("parallel",),
            vmem_limit_bytes=32 * 1024 * 1024),
        cost_estimate=pl.CostEstimate(flops=flops, transcendentals=0,
                                      bytes_accessed=bytes_accessed),
    )(state2d, action4d, w1s, w1a, bias1, w2t, b2col)

    return out[:, :, :, :bl]


class PallasCriticHead:
    """Concrete BaseCriticHead: ensemble of num_critics 2-layer MLP critics."""

    def __init__(self, state_dim, action_dim, discrete, gammas, num_critics,
                 d_hidden=64, key=None, compute_dtype=jnp.float32):
        self.state_dim = state_dim
        self.action_dim = action_dim
        self.discrete = discrete
        self.gammas = jnp.asarray(gammas, dtype=jnp.float32)
        self.num_gammas = int(self.gammas.shape[0])
        self.num_critics = num_critics
        self.d_hidden = d_hidden
        self.compute_dtype = compute_dtype

        din = state_dim + action_dim + self.num_gammas
        if key is None:
            key = jax.random.PRNGKey(0)
        k1, k2, k3, k4 = jax.random.split(key, 4)
        lim1 = 1.0 / (din ** 0.5)
        lim2 = 1.0 / (d_hidden ** 0.5)
        self.w1 = jax.random.uniform(k1, (num_critics, din, d_hidden),
                                     jnp.float32, -lim1, lim1)
        self.b1 = jax.random.uniform(k2, (num_critics, d_hidden),
                                     jnp.float32, -lim1, lim1)
        self.w2 = jax.random.uniform(k3, (num_critics, d_hidden, 1),
                                     jnp.float32, -lim2, lim2)
        self.b2 = jax.random.uniform(k4, (num_critics, 1),
                                     jnp.float32, -lim2, lim2)

        # ---- fused parameter views for the Pallas kernel ------------------
        c, h = num_critics, d_hidden
        s, a, g = state_dim, action_dim, self.num_gammas
        # Fused first layer: column index = c*H + j.
        w1f = jnp.transpose(self.w1, (1, 0, 2)).reshape(din, c * h)
        self.w1s_f = w1f[:s]                               # (S, C*H)
        self.w1a_f = w1f[s:s + a]                          # (A, C*H)
        w1g_f = w1f[s + a:]                                # (G, C*H)
        b1_f = self.b1.reshape(c * h)
        # gamma one-hot contribution folds into a per-gamma bias row.
        self.bias1_f = (w1g_f + b1_f[None, :]).reshape(g, 1, c * h)
        # Block-diagonal second layer, pre-transposed and padded to 8 sublanes:
        # w2t[cp, ci*H + j] = (cp == ci) * w2[ci, j, 0].
        c_pad = _round_up(c, 8)
        eye_pc = jnp.eye(c_pad, c, dtype=jnp.float32)               # (Cp, C)
        self.w2t_f = (eye_pc[:, :, None] *
                      self.w2[None, :, :, 0]).reshape(c_pad, c * h)  # (Cp, C*H)
        self.b2col_f = jnp.pad(self.b2.reshape(c, 1),
                               ((0, c_pad - c), (0, 0)))             # (Cp, 1)
        self.num_critics_padded = c_pad

    # ---- BaseCriticHead.forward semantics --------------------------------
    def __call__(self, state, action, log_dict=None):
        assert state.ndim == 3       # (B, L, S)
        assert action.ndim == 5      # (K, B, L, G, A)
        return self.critic_network_forward(state, action, log_dict=log_dict)

    def critic_network_forward(self, state, action, log_dict=None):
        k, b, l, g, a = action.shape
        assert g == self.num_gammas
        assert a == self.action_dim
        assert state.shape == (b, l, self.state_dim)

        # No K*G-duplicated concat tensor is ever built in HBM.
        state2d = state.astype(jnp.float32).reshape(b * l, self.state_dim)
        action4d = jnp.transpose(action.astype(jnp.float32),
                                 (0, 3, 1, 2, 4)).reshape(k, g, b * l, a)

        out = ensemble_critic_pallas(state2d, action4d, self.w1s_f, self.w1a_f,
                                     self.bias1_f, self.w2t_f, self.b2col_f,
                                     compute_dtype=self.compute_dtype)
        out = out[:, :, :self.num_critics, :]        # drop sublane padding of C
        # (K, G, C, B*L) -> (K, B, L, G, C, 1)
        out = out.reshape(k, g, self.num_critics, b, l)
        out = jnp.transpose(out, (0, 3, 4, 1, 2))[..., None]
        return out

    # pure-JAX reference for correctness check
    def _reference(self, state, action):
        k, b, l, g, a = action.shape
        s = jnp.broadcast_to(state[None, :, :, None, :],
                             (k, b, l, g, self.state_dim))
        gamma_onehot = jnp.broadcast_to(
            jnp.eye(g, dtype=jnp.float32)[None, None, None], (k, b, l, g, g))
        inp = jnp.concatenate([s, action, gamma_onehot], axis=-1)
        x = inp.reshape(k * b * l * g, -1)
        hp = jnp.einsum("nd,cdh->cnh", x, self.w1,
                        precision=jax.lax.Precision.HIGHEST) \
            + self.b1[:, None, :]
        hp = jnp.where(hp >= 0, hp, 0.01 * hp)
        q = jnp.einsum("cnh,cho->cno", hp, self.w2,
                       precision=jax.lax.Precision.HIGHEST) \
            + self.b2[:, None, :]
        q = q.reshape(self.num_critics, k, b, l, g, 1)
        return jnp.transpose(q, (1, 2, 3, 4, 0, 5))


if __name__ == "__main__":
    key = jax.random.PRNGKey(0)
    k_state, k_action, k_params = jax.random.split(key, 3)

    B, L = 2, 8            # batch, sequence
    S, A = 32, 8           # state_dim, action_dim
    K = 2                  # sampled actions per (b, l, gamma)
    gammas = jnp.array([0.9, 0.99, 0.999], dtype=jnp.float32)
    G = int(gammas.shape[0])
    C = 4                  # num_critics

    head = PallasCriticHead(state_dim=S, action_dim=A, discrete=False,
                            gammas=gammas, num_critics=C, d_hidden=64,
                            key=k_params)

    state = jax.random.normal(k_state, (B, L, S), dtype=jnp.float32)
    action = jax.random.normal(k_action, (K, B, L, G, A), dtype=jnp.float32)

    ref = jax.block_until_ready(head._reference(state, action))

    # f32 compute path: strict check.
    out = jax.block_until_ready(head(state, action))
    assert out.shape == (K, B, L, G, C, 1), out.shape
    assert jnp.allclose(out, ref, atol=1e-4, rtol=1e-4), (
        float(jnp.max(jnp.abs(out - ref))))

    # bf16 compute path (v6e/v7x recommendation): loosened tolerance.
    head.compute_dtype = jnp.bfloat16
    out_bf16 = jax.block_until_ready(head(state, action))
    assert out_bf16.shape == (K, B, L, G, C, 1), out_bf16.shape
    assert jnp.allclose(out_bf16, ref, atol=5e-2, rtol=5e-2), (
        float(jnp.max(jnp.abs(out_bf16 - ref))))

    print("KERNEL_OK")
</pallas_src>

<mosaic_0001>
module attributes {stable_mosaic.version = 11 : i64} {
  func.func @_critic_kernel(%arg0: i32, %arg1: memref<128x32xf32, #tpu.memory_space<vmem>>, %arg2: memref<2x3x128x8xf32, #tpu.memory_space<vmem>>, %arg3: memref<32x256xf32, #tpu.memory_space<vmem>>, %arg4: memref<8x256xf32, #tpu.memory_space<vmem>>, %arg5: memref<3x1x256xf32, #tpu.memory_space<vmem>>, %arg6: memref<8x256xf32, #tpu.memory_space<vmem>>, %arg7: memref<8x1xf32, #tpu.memory_space<vmem>>, %arg8: memref<2x3x8x128xf32, #tpu.memory_space<vmem>>) attributes {dimension_semantics = [#tpu.dimension_semantics<parallel>], iteration_bounds = array<i64: 1>, scalar_prefetch = 0 : i64, scratch_operands = 0 : i64, tpu.core_type = #tpu.core_type<tc>, window_params = [{transform_indices = @transform_0, window_bounds = array<i64: 128, 32>}, {transform_indices = @transform_1, window_bounds = array<i64: 2, 3, 128, 8>}, {pipeline_mode = #tpu.pipeline_mode<synchronous>, transform_indices = @transform_2, window_bounds = array<i64: 32, 256>}, {pipeline_mode = #tpu.pipeline_mode<synchronous>, transform_indices = @transform_3, window_bounds = array<i64: 8, 256>}, {pipeline_mode = #tpu.pipeline_mode<synchronous>, transform_indices = @transform_4, window_bounds = array<i64: 3, 1, 256>}, {pipeline_mode = #tpu.pipeline_mode<synchronous>, transform_indices = @transform_5, window_bounds = array<i64: 8, 256>}, {pipeline_mode = #tpu.pipeline_mode<synchronous>, transform_indices = @transform_6, window_bounds = array<i64: 8, 1>}, {transform_indices = @transform_7, window_bounds = array<i64: 2, 3, 8, 128>}]} {
    %c0 = arith.constant 0 : index
    %c0_0 = arith.constant 0 : index
    %0 = vector.load %arg1[%c0, %c0_0] : memref<128x32xf32, #tpu.memory_space<vmem>>, vector<128x32xf32>
    %c0_1 = arith.constant 0 : index
    %c0_2 = arith.constant 0 : index
    %1 = vector.load %arg3[%c0_1, %c0_2] : memref<32x256xf32, #tpu.memory_space<vmem>>, vector<32x256xf32>
    %cst = arith.constant dense<0.000000e+00> : vector<128x256xf32>
    %2 = tpu.matmul %0, %1, %cst {dimension_numbers = #tpu.dot_dimension_numbers<[1], [0], [0], [1], [0, 0, 1, 1], [], []>} : vector<128x32xf32>, vector<32x256xf32>, vector<128x256xf32> -> vector<128x256xf32>
    %c0_3 = arith.constant 0 : index
    %c0_4 = arith.constant 0 : index
    %3 = vector.load %arg4[%c0_3, %c0_4] : memref<8x256xf32, #tpu.memory_space<vmem>>, vector<8x256xf32>
    %c0_5 = arith.constant 0 : index
    %c0_6 = arith.constant 0 : index
    %4 = vector.load %arg6[%c0_5, %c0_6] : memref<8x256xf32, #tpu.memory_space<vmem>>, vector<8x256xf32>
    %c0_7 = arith.constant 0 : index
    %c0_8 = arith.constant 0 : index
    %5 = vector.load %arg7[%c0_7, %c0_8] : memref<8x1xf32, #tpu.memory_space<vmem>>, vector<8x1xf32>
    %c0_9 = arith.constant 0 : index
    %c0_10 = arith.constant 0 : index
    %c0_11 = arith.constant 0 : index
    %c0_12 = arith.constant 0 : index
    %6 = vector.load %arg2[%c0_9, %c0_10, %c0_11, %c0_12] : memref<2x3x128x8xf32, #tpu.memory_space<vmem>>, vector<1x1x128x8xf32>
    %7 = vector.shape_cast %6 : vector<1x1x128x8xf32> to vector<128x8xf32>
    %cst_13 = arith.constant dense<0.000000e+00> : vector<128x256xf32>
    %8 = tpu.matmul %7, %3, %cst_13 {dimension_numbers = #tpu.dot_dimension_numbers<[1], [0], [0], [1], [0, 0, 1, 1], [], []>} : vector<128x8xf32>, vector<8x256xf32>, vector<128x256xf32> -> vector<128x256xf32>
    %9 = arith.addf %2, %8 : vector<128x256xf32>
    %c0_14 = arith.constant 0 : index
    %c0_15 = arith.constant 0 : index
    %c0_16 = arith.constant 0 : index
    %10 = vector.load %arg5[%c0_14, %c0_15, %c0_16] : memref<3x1x256xf32, #tpu.memory_space<vmem>>, vector<1x1x256xf32>
    %11 = vector.shape_cast %10 : vector<1x1x256xf32> to vector<1x256xf32>
    %12 = vector.broadcast %11 : vector<1x256xf32> to vector<128x256xf32>
    %13 = arith.addf %9, %12 : vector<128x256xf32>
    %cst_17 = arith.constant 0.000000e+00 : f32
    %14 = vector.broadcast %cst_17 : f32 to vector<128x256xf32>
    %15 = arith.cmpf oge, %13, %14 : vector<128x256xf32>
    %cst_18 = arith.constant 0.00999999977 : f32
    %16 = vector.broadcast %cst_18 : f32 to vector<128x256xf32>
    %17 = arith.mulf %16, %13 : vector<128x256xf32>
    %18 = arith.select %15, %13, %17 : vector<128x256xi1>, vector<128x256xf32>
    %cst_19 = arith.constant dense<0.000000e+00> : vector<8x128xf32>
    %19 = tpu.matmul %4, %18, %cst_19 {dimension_numbers = #tpu.dot_dimension_numbers<[1], [1], [0], [0], [0, 0, 1, 0], [], []>} : vector<8x256xf32>, vector<128x256xf32>, vector<8x128xf32> -> vector<8x128xf32>
    %20 = vector.broadcast %5 : vector<8x1xf32> to vector<8x128xf32>
    %21 = arith.addf %19, %20 : vector<8x128xf32>
    %c0_20 = arith.constant 0 : index
    %c0_21 = arith.constant 0 : index
    %c0_22 = arith.constant 0 : index
    %c0_23 = arith.constant 0 : index
    %22 = vector.load %arg8[%c0_20, %c0_21, %c0_22, %c0_23] : memref<2x3x8x128xf32, #tpu.memory_space<vmem>>, vector<1x1x8x128xf32>
    %23 = vector.shape_cast %22 : vector<1x1x8x128xf32> to vector<8x128xf32>
    %24 = vector.shape_cast %21 : vector<8x128xf32> to vector<1x1x8x128xf32>
    tpu.vector_store %arg8[%c0_20, %c0_21, %c0_22, %c0_23], %24 {strides = array<i32>} : memref<2x3x8x128xf32, #tpu.memory_space<vmem>>, vector<1x1x8x128xf32>,
    %c0_24 = arith.constant 0 : index
    %c1 = arith.constant 1 : index
    %c0_25 = arith.constant 0 : index
    %c0_26 = arith.constant 0 : index
    %25 = vector.load %arg2[%c0_24, %c1, %c0_25, %c0_26] : memref<2x3x128x8xf32, #tpu.memory_space<vmem>>, vector<1x1x128x8xf32>
    %26 = vector.shape_cast %25 : vector<1x1x128x8xf32> to vector<128x8xf32>
    %cst_27 = arith.constant dense<0.000000e+00> : vector<128x256xf32>
    %27 = tpu.matmul %26, %3, %cst_27 {dimension_numbers = #tpu.dot_dimension_numbers<[1], [0], [0], [1], [0, 0, 1, 1], [], []>} : vector<128x8xf32>, vector<8x256xf32>, vector<128x256xf32> -> vector<128x256xf32>
    %28 = arith.addf %2, %27 : vector<128x256xf32>
    %c1_28 = arith.constant 1 : index
    %c0_29 = arith.constant 0 : index
    %c0_30 = arith.constant 0 : index
    %29 = vector.load %arg5[%c1_28, %c0_29, %c0_30] : memref<3x1x256xf32, #tpu.memory_space<vmem>>, vector<1x1x256xf32>
    %30 = vector.shape_cast %29 : vector<1x1x256xf32> to vector<1x256xf32>
    %31 = vector.broadcast %30 : vector<1x256xf32> to vector<128x256xf32>
    %32 = arith.addf %28, %31 : vector<128x256xf32>
    %cst_31 = arith.constant 0.000000e+00 : f32
    %33 = vector.broadcast %cst_31 : f32 to vector<128x256xf32>
    %34 = arith.cmpf oge, %32, %33 : vector<128x256xf32>
    %cst_32 = arith.constant 0.00999999977 : f32
    %35 = vector.broadcast %cst_32 : f32 to vector<128x256xf32>
    %36 = arith.mulf %35, %32 : vector<128x256xf32>
    %37 = arith.select %34, %32, %36 : vector<128x256xi1>, vector<128x256xf32>
    %cst_33 = arith.constant dense<0.000000e+00> : vector<8x128xf32>
    %38 = tpu.matmul %4, %37, %cst_33 {dimension_numbers = #tpu.dot_dimension_numbers<[1], [1], [0], [0], [0, 0, 1, 0], [], []>} : vector<8x256xf32>, vector<128x256xf32>, vector<8x128xf32> -> vector<8x128xf32>
    %39 = vector.broadcast %5 : vector<8x1xf32> to vector<8x128xf32>
    %40 = arith.addf %38, %39 : vector<8x128xf32>
    %c0_34 = arith.constant 0 : index
    %c1_35 = arith.constant 1 : index
    %c0_36 = arith.constant 0 : index
    %c0_37 = arith.constant 0 : index
    %41 = vector.load %arg8[%c0_34, %c1_35, %c0_36, %c0_37] : memref<2x3x8x128xf32, #tpu.memory_space<vmem>>, vector<1x1x8x128xf32>
    %42 = vector.shape_cast %41 : vector<1x1x8x128xf32> to vector<8x128xf32>
    %43 = vector.shape_cast %40 : vector<8x128xf32> to vector<1x1x8x128xf32>
    tpu.vector_store %arg8[%c0_34, %c1_35, %c0_36, %c0_37], %43 {strides = array<i32>} : memref<2x3x8x128xf32, #tpu.memory_space<vmem>>, vector<1x1x8x128xf32>,
    %c0_38 = arith.constant 0 : index
    %c2 = arith.constant 2 : index
    %c0_39 = arith.constant 0 : index
    %c0_40 = arith.constant 0 : index
    %44 = vector.load %arg2[%c0_38, %c2, %c0_39, %c0_40] : memref<2x3x128x8xf32, #tpu.memory_space<vmem>>, vector<1x1x128x8xf32>
    %45 = vector.shape_cast %44 : vector<1x1x128x8xf32> to vector<128x8xf32>
    %cst_41 = arith.constant dense<0.000000e+00> : vector<128x256xf32>
    %46 = tpu.matmul %45, %3, %cst_41 {dimension_numbers = #tpu.dot_dimension_numbers<[1], [0], [0], [1], [0, 0, 1, 1], [], []>} : vector<128x8xf32>, vector<8x256xf32>, vector<128x256xf32> -> vector<128x256xf32>
    %47 = arith.addf %2, %46 : vector<128x256xf32>
    %c2_42 = arith.constant 2 : index
    %c0_43 = arith.constant 0 : index
    %c0_44 = arith.constant 0 : index
    %48 = vector.load %arg5[%c2_42, %c0_43, %c0_44] : memref<3x1x256xf32, #tpu.memory_space<vmem>>, vector<1x1x256xf32>
    %49 = vector.shape_cast %48 : vector<1x1x256xf32> to vector<1x256xf32>
    %50 = vector.broadcast %49 : vector<1x256xf32> to vector<128x256xf32>
    %51 = arith.addf %47, %50 : vector<128x256xf32>
    %cst_45 = arith.constant 0.000000e+00 : f32
    %52 = vector.broadcast %cst_45 : f32 to vector<128x256xf32>
    %53 = arith.cmpf oge, %51, %52 : vector<128x256xf32>
    %cst_46 = arith.constant 0.00999999977 : f32
    %54 = vector.broadcast %cst_46 : f32 to vector<128x256xf32>
    %55 = arith.mulf %54, %51 : vector<128x256xf32>
    %56 = arith.select %53, %51, %55 : vector<128x256xi1>, vector<128x256xf32>
    %cst_47 = arith.constant dense<0.000000e+00> : vector<8x128xf32>
    %57 = tpu.matmul %4, %56, %cst_47 {dimension_numbers = #tpu.dot_dimension_numbers<[1], [1], [0], [0], [0, 0, 1, 0], [], []>} : vector<8x256xf32>, vector<128x256xf32>, vector<8x128xf32> -> vector<8x128xf32>
    %58 = vector.broadcast %5 : vector<8x1xf32> to vector<8x128xf32>
    %59 = arith.addf %57, %58 : vector<8x128xf32>
    %c0_48 = arith.constant 0 : index
    %c2_49 = arith.constant 2 : index
    %c0_50 = arith.constant 0 : index
    %c0_51 = arith.constant 0 : index
    %60 = vector.load %arg8[%c0_48, %c2_49, %c0_50, %c0_51] : memref<2x3x8x128xf32, #tpu.memory_space<vmem>>, vector<1x1x8x128xf32>
    %61 = vector.shape_cast %60 : vector<1x1x8x128xf32> to vector<8x128xf32>
    %62 = vector.shape_cast %59 : vector<8x128xf32> to vector<1x1x8x128xf32>
    tpu.vector_store %arg8[%c0_48, %c2_49, %c0_50, %c0_51], %62 {strides = array<i32>} : memref<2x3x8x128xf32, #tpu.memory_space<vmem>>, vector<1x1x8x128xf32>,
    %c1_52 = arith.constant 1 : index
    %c0_53 = arith.constant 0 : index
    %c0_54 = arith.constant 0 : index
    %c0_55 = arith.constant 0 : index
    %63 = vector.load %arg2[%c1_52, %c0_53, %c0_54, %c0_55] : memref<2x3x128x8xf32, #tpu.memory_space<vmem>>, vector<1x1x128x8xf32>
    %64 = vector.shape_cast %63 : vector<1x1x128x8xf32> to vector<128x8xf32>
    %cst_56 = arith.constant dense<0.000000e+00> : vector<128x256xf32>
    %65 = tpu.matmul %64, %3, %cst_56 {dimension_numbers = #tpu.dot_dimension_numbers<[1], [0], [0], [1], [0, 0, 1, 1], [], []>} : vector<128x8xf32>, vector<8x256xf32>, vector<128x256xf32> -> vector<128x256xf32>
    %66 = arith.addf %2, %65 : vector<128x256xf32>
    %c0_57 = arith.constant 0 : index
    %c0_58 = arith.constant 0 : index
    %c0_59 = arith.constant 0 : index
    %67 = vector.load %arg5[%c0_57, %c0_58, %c0_59] : memref<3x1x256xf32, #tpu.memory_space<vmem>>, vector<1x1x256xf32>
    %68 = vector.shape_cast %67 : vector<1x1x256xf32> to vector<1x256xf32>
    %69 = vector.broadcast %68 : vector<1x256xf32> to vector<128x256xf32>
    %70 = arith.addf %66, %69 : vector<128x256xf32>
    %cst_60 = arith.constant 0.000000e+00 : f32
    %71 = vector.broadcast %cst_60 : f32 to vector<128x256xf32>
    %72 = arith.cmpf oge, %70, %71 : vector<128x256xf32>
    %cst_61 = arith.constant 0.00999999977 : f32
    %73 = vector.broadcast %cst_61 : f32 to vector<128x256xf32>
    %74 = arith.mulf %73, %70 : vector<128x256xf32>
    %75 = arith.select %72, %70, %74 : vector<128x256xi1>, vector<128x256xf32>
    %cst_62 = arith.constant dense<0.000000e+00> : vector<8x128xf32>
    %76 = tpu.matmul %4, %75, %cst_62 {dimension_numbers = #tpu.dot_dimension_numbers<[1], [1], [0], [0], [0, 0, 1, 0], [], []>} : vector<8x256xf32>, vector<128x256xf32>, vector<8x128xf32> -> vector<8x128xf32>
    %77 = vector.broadcast %5 : vector<8x1xf32> to vector<8x128xf32>
    %78 = arith.addf %76, %77 : vector<8x128xf32>
    %c1_63 = arith.constant 1 : index
    %c0_64 = arith.constant 0 : index
    %c0_65 = arith.constant 0 : index
    %c0_66 = arith.constant 0 : index
    %79 = vector.load %arg8[%c1_63, %c0_64, %c0_65, %c0_66] : memref<2x3x8x128xf32, #tpu.memory_space<vmem>>, vector<1x1x8x128xf32>
    %80 = vector.shape_cast %79 : vector<1x1x8x128xf32> to vector<8x128xf32>
    %81 = vector.shape_cast %78 : vector<8x128xf32> to vector<1x1x8x128xf32>
    tpu.vector_store %arg8[%c1_63, %c0_64, %c0_65, %c0_66], %81 {strides = array<i32>} : memref<2x3x8x128xf32, #tpu.memory_space<vmem>>, vector<1x1x8x128xf32>,
    %c1_67 = arith.constant 1 : index
    %c1_68 = arith.constant 1 : index
    %c0_69 = arith.constant 0 : index
    %c0_70 = arith.constant 0 : index
    %82 = vector.load %arg2[%c1_67, %c1_68, %c0_69, %c0_70] : memref<2x3x128x8xf32, #tpu.memory_space<vmem>>, vector<1x1x128x8xf32>
    %83 = vector.shape_cast %82 : vector<1x1x128x8xf32> to vector<128x8xf32>
    %cst_71 = arith.constant dense<0.000000e+00> : vector<128x256xf32>
    %84 = tpu.matmul %83, %3, %cst_71 {dimension_numbers = #tpu.dot_dimension_numbers<[1], [0], [0], [1], [0, 0, 1, 1], [], []>} : vector<128x8xf32>, vector<8x256xf32>, vector<128x256xf32> -> vector<128x256xf32>
    %85 = arith.addf %2, %84 : vector<128x256xf32>
    %c1_72 = arith.constant 1 : index
    %c0_73 = arith.constant 0 : index
    %c0_74 = arith.constant 0 : index
    %86 = vector.load %arg5[%c1_72, %c0_73, %c0_74] : memref<3x1x256xf32, #tpu.memory_space<vmem>>, vector<1x1x256xf32>
    %87 = vector.shape_cast %86 : vector<1x1x256xf32> to vector<1x256xf32>
    %88 = vector.broadcast %87 : vector<1x256xf32> to vector<128x256xf32>
    %89 = arith.addf %85, %88 : vector<128x256xf32>
    %cst_75 = arith.constant 0.000000e+00 : f32
    %90 = vector.broadcast %cst_75 : f32 to vector<128x256xf32>
    %91 = arith.cmpf oge, %89, %90 : vector<128x256xf32>
    %cst_76 = arith.constant 0.00999999977 : f32
    %92 = vector.broadcast %cst_76 : f32 to vector<128x256xf32>
    %93 = arith.mulf %92, %89 : vector<128x256xf32>
    %94 = arith.select %91, %89, %93 : vector<128x256xi1>, vector<128x256xf32>
    %cst_77 = arith.constant dense<0.000000e+00> : vector<8x128xf32>
    %95 = tpu.matmul %4, %94, %cst_77 {dimension_numbers = #tpu.dot_dimension_numbers<[1], [1], [0], [0], [0, 0, 1, 0], [], []>} : vector<8x256xf32>, vector<128x256xf32>, vector<8x128xf32> -> vector<8x128xf32>
    %96 = vector.broadcast %5 : vector<8x1xf32> to vector<8x128xf32>
    %97 = arith.addf %95, %96 : vector<8x128xf32>
    %c1_78 = arith.constant 1 : index
    %c1_79 = arith.constant 1 : index
    %c0_80 = arith.constant 0 : index
    %c0_81 = arith.constant 0 : index
    %98 = vector.load %arg8[%c1_78, %c1_79, %c0_80, %c0_81] : memref<2x3x8x128xf32, #tpu.memory_space<vmem>>, vector<1x1x8x128xf32>
    %99 = vector.shape_cast %98 : vector<1x1x8x128xf32> to vector<8x128xf32>
    %100 = vector.shape_cast %97 : vector<8x128xf32> to vector<1x1x8x128xf32>
    tpu.vector_store %arg8[%c1_78, %c1_79, %c0_80, %c0_81], %100 {strides = array<i32>} : memref<2x3x8x128xf32, #tpu.memory_space<vmem>>, vector<1x1x8x128xf32>,
    %c1_82 = arith.constant 1 : index
    %c2_83 = arith.constant 2 : index
    %c0_84 = arith.constant 0 : index
    %c0_85 = arith.constant 0 : index
    %101 = vector.load %arg2[%c1_82, %c2_83, %c0_84, %c0_85] : memref<2x3x128x8xf32, #tpu.memory_space<vmem>>, vector<1x1x128x8xf32>
    %102 = vector.shape_cast %101 : vector<1x1x128x8xf32> to vector<128x8xf32>
    %cst_86 = arith.constant dense<0.000000e+00> : vector<128x256xf32>
    %103 = tpu.matmul %102, %3, %cst_86 {dimension_numbers = #tpu.dot_dimension_numbers<[1], [0], [0], [1], [0, 0, 1, 1], [], []>} : vector<128x8xf32>, vector<8x256xf32>, vector<128x256xf32> -> vector<128x256xf32>
    %104 = arith.addf %2, %103 : vector<128x256xf32>
    %c2_87 = arith.constant 2 : index
    %c0_88 = arith.constant 0 : index
    %c0_89 = arith.constant 0 : index
    %105 = vector.load %arg5[%c2_87, %c0_88, %c0_89] : memref<3x1x256xf32, #tpu.memory_space<vmem>>, vector<1x1x256xf32>
    %106 = vector.shape_cast %105 : vector<1x1x256xf32> to vector<1x256xf32>
    %107 = vector.broadcast %106 : vector<1x256xf32> to vector<128x256xf32>
    %108 = arith.addf %104, %107 : vector<128x256xf32>
    %cst_90 = arith.constant 0.000000e+00 : f32
    %109 = vector.broadcast %cst_90 : f32 to vector<128x256xf32>
    %110 = arith.cmpf oge, %108, %109 : vector<128x256xf32>
    %cst_91 = arith.constant 0.00999999977 : f32
    %111 = vector.broadcast %cst_91 : f32 to vector<128x256xf32>
    %112 = arith.mulf %111, %108 : vector<128x256xf32>
    %113 = arith.select %110, %108, %112 : vector<128x256xi1>, vector<128x256xf32>
    %cst_92 = arith.constant dense<0.000000e+00> : vector<8x128xf32>
    %114 = tpu.matmul %4, %113, %cst_92 {dimension_numbers = #tpu.dot_dimension_numbers<[1], [1], [0], [0], [0, 0, 1, 0], [], []>} : vector<8x256xf32>, vector<128x256xf32>, vector<8x128xf32> -> vector<8x128xf32>
    %115 = vector.broadcast %5 : vector<8x1xf32> to vector<8x128xf32>
    %116 = arith.addf %114, %115 : vector<8x128xf32>
    %c1_93 = arith.constant 1 : index
    %c2_94 = arith.constant 2 : index
    %c0_95 = arith.constant 0 : index
    %c0_96 = arith.constant 0 : index
    %117 = vector.load %arg8[%c1_93, %c2_94, %c0_95, %c0_96] : memref<2x3x8x128xf32, #tpu.memory_space<vmem>>, vector<1x1x8x128xf32>
    %118 = vector.shape_cast %117 : vector<1x1x8x128xf32> to vector<8x128xf32>
    %119 = vector.shape_cast %116 : vector<8x128xf32> to vector<1x1x8x128xf32>
    tpu.vector_store %arg8[%c1_93, %c2_94, %c0_95, %c0_96], %119 {strides = array<i32>} : memref<2x3x8x128xf32, #tpu.memory_space<vmem>>, vector<1x1x8x128xf32>,
    return
  }
  func.func @transform_0(%arg0: i32) -> (i32, i32) {
    %c0_i32 = arith.constant 0 : i32
    %c0_i32_0 = arith.constant 0 : i32
    return %arg0, %c0_i32 : i32, i32
  }
  func.func @transform_1(%arg0: i32) -> (i32, i32, i32, i32) {
    %c0_i32 = arith.constant 0 : i32
    %c0_i32_0 = arith.constant 0 : i32
    %c0_i32_1 = arith.constant 0 : i32
    %c0_i32_2 = arith.constant 0 : i32
    return %c0_i32, %c0_i32_0, %arg0, %c0_i32_1 : i32, i32, i32, i32
  }
  func.func @transform_2(%arg0: i32) -> (i32, i32) {
    %c0_i32 = arith.constant 0 : i32
    %c0_i32_0 = arith.constant 0 : i32
    %c0_i32_1 = arith.constant 0 : i32
    return %c0_i32, %c0_i32_0 : i32, i32
  }
  func.func @transform_3(%arg0: i32) -> (i32, i32) {
    %c0_i32 = arith.constant 0 : i32
    %c0_i32_0 = arith.constant 0 : i32
    %c0_i32_1 = arith.constant 0 : i32
    return %c0_i32, %c0_i32_0 : i32, i32
  }
  func.func @transform_4(%arg0: i32) -> (i32, i32, i32) {
    %c0_i32 = arith.constant 0 : i32
    %c0_i32_0 = arith.constant 0 : i32
    %c0_i32_1 = arith.constant 0 : i32
    %c0_i32_2 = arith.constant 0 : i32
    return %c0_i32, %c0_i32_0, %c0_i32_1 : i32, i32, i32
  }
  func.func @transform_5(%arg0: i32) -> (i32, i32) {
    %c0_i32 = arith.constant 0 : i32
    %c0_i32_0 = arith.constant 0 : i32
    %c0_i32_1 = arith.constant 0 : i32
    return %c0_i32, %c0_i32_0 : i32, i32
  }
  func.func @transform_6(%arg0: i32) -> (i32, i32) {
    %c0_i32 = arith.constant 0 : i32
    %c0_i32_0 = arith.constant 0 : i32
    %c0_i32_1 = arith.constant 0 : i32
    return %c0_i32, %c0_i32_0 : i32, i32
  }
  func.func @transform_7(%arg0: i32) -> (i32, i32, i32, i32) {
    %c0_i32 = arith.constant 0 : i32
    %c0_i32_0 = arith.constant 0 : i32
    %c0_i32_1 = arith.constant 0 : i32
    %c0_i32_2 = arith.constant 0 : i32
    return %c0_i32, %c0_i32_0, %c0_i32_1, %arg0 : i32, i32, i32, i32
  }
}

</mosaic_0001>

<llo_original>
// kernel: tpu_custom_call.1
$region0: #{tpu_custom_call.1}
  #allocation0 [shape = 'u32[]', space=smem, size = 0x4, offset = 0x4, fixed_abs, tag = 'smem constant byte address 0x4 - core index']
  #allocation1 [shape = 'u32[144,128]{1,0:T(1,128)}', space=vmem, size = 0x12000, scoped, tag = 'internal scratch']
  %s0 = inlined_call_operand.vmem [shape: f32[128,32], index: 0, kind: input, shape index: {}]
  %s1 = inlined_call_operand.vmem [shape: f32[2,3,128,8], index: 1, kind: input, shape index: {}]
  %s2 = inlined_call_operand.vmem [shape: f32[32,256], index: 2, kind: input, shape index: {}]
  %s3 = inlined_call_operand.vmem [shape: f32[8,256], index: 3, kind: input, shape index: {}]
  %s4 = inlined_call_operand.vmem [shape: f32[3,1,256], index: 4, kind: input, shape index: {}]
  %s5 = inlined_call_operand.vmem [shape: f32[8,256], index: 5, kind: input, shape index: {}]
  %s6 = inlined_call_operand.vmem [shape: f32[8,1], index: 6, kind: input, shape index: {}]
  %s7 = inlined_call_operand.hbm [shape: f32[2,3,8,128], index: 7, kind: output, shape index: {}]
  %s8 = sld [smem:[#allocation0]]
  $region38: #{tpu_custom_call.1} parent=0
    _
  %s10 = ssub.s32 1, %s8
  %s11 = scalar_select 0, %s10, %s8
  $region1: #{tpu_custom_call.1} parent=0
    #allocation2 [shape = 'u8[24576]{0}', space=vmem, size = 0x6000, scoped, tag = 'output window, operand 0, single buffered']
    #allocation3 [shape = 's32[1]{0}', space=sflag, size = 0x4, scoped, tag = 'scoped memory for tpu_custom_call.1']
    %12 = vsyncpa [#allocation3], 0
    // Predicated region
    $region2: #{tpu_custom_call.1} parent=1 // pred_check
      _
    $region3: #{tpu_custom_call.1} parent=1 // pred_check_branch
      %14 = sbr.rel (0) target = $region5
    $region4: #{tpu_custom_call.1} parent=1 // pred_region
      _
    $region5: #{tpu_custom_call.1} parent=1 // pred_fallthru
      _
    // Predicated region
    $region6: #{tpu_custom_call.1} parent=1 // pred_check
      _
    $region7: #{tpu_custom_call.1} parent=1 // pred_check_branch
      %16 = sbr.rel (0) target = $region9
    $region8: #{tpu_custom_call.1} parent=1 // pred_region
      _
    $region9: #{tpu_custom_call.1} parent=1 // pred_fallthru
      _
    // Predicated region
    $region10: #{tpu_custom_call.1} parent=1 // pred_check
      _
    $region11: #{tpu_custom_call.1} parent=1 // pred_check_branch
      %18 = sbr.rel (0) target = $region13
    $region12: #{tpu_custom_call.1} parent=1 // pred_region
      _
    $region13: #{tpu_custom_call.1} parent=1 // pred_fallthru
      _
    // Predicated region
    $region14: #{tpu_custom_call.1} parent=1 // pred_check
      _
    $region15: #{tpu_custom_call.1} parent=1 // pred_check_branch
      %20 = sbr.rel (0) target = $region17
    $region16: #{tpu_custom_call.1} parent=1 // pred_region
      _
    $region17: #{tpu_custom_call.1} parent=1 // pred_fallthru
      _
    // Predicated region
    $region18: #{tpu_custom_call.1} parent=1 // pred_check
      _
    $region19: #{tpu_custom_call.1} parent=1 // pred_check_branch
      %22 = sbr.rel (0) target = $region21
    $region20: #{tpu_custom_call.1} parent=1 // pred_region
      _
    $region21: #{tpu_custom_call.1} parent=1 // pred_fallthru
      _
    // Predicated region
    $region22: #{tpu_custom_call.1} parent=1 // pred_check
      _
    $region23: #{tpu_custom_call.1} parent=1 // pred_check_branch
      %24 = sbr.rel (0) target = $region25
    $region24: #{tpu_custom_call.1} parent=1 // pred_region
      _
    $region25: #{tpu_custom_call.1} parent=1 // pred_fallthru
      _
    // Predicated region
    $region26: #{tpu_custom_call.1} parent=1 // pred_check
      _
    $region27: #{tpu_custom_call.1} parent=1 // pred_check_branch
      %26 = sbr.rel (0) target = $region29
    $region28: #{tpu_custom_call.1} parent=1 // pred_region
      _
    $region29: #{tpu_custom_call.1} parent=1 // pred_fallthru
      _
    %v27 = vld [vmem:[%s0] sm:$0xff]
    %v28 = vld [vmem:[%s0 + $0x8] sm:$0xff]
    %v29 = vld [vmem:[%s0 + $0x10] sm:$0xff]
    %v30 = vld [vmem:[%s0 + $0x18] sm:$0xff]
    %v31 = vld [vmem:[%s0 + $0x20] sm:$0xff]
    %v32 = vld [vmem:[%s0 + $0x28] sm:$0xff]
    %v33 = vld [vmem:[%s0 + $0x30] sm:$0xff]
    %v34 = vld [vmem:[%s0 + $0x38] sm:$0xff]
    %v35 = vld [vmem:[%s0 + $0x40] sm:$0xff]
    %v36 = vld [vmem:[%s0 + $0x48] sm:$0xff]
    %v37 = vld [vmem:[%s0 + $0x50] sm:$0xff]
    %v38 = vld [vmem:[%s0 + $0x58] sm:$0xff]
    %v39 = vld [vmem:[%s0 + $0x60] sm:$0xff]
    %v40 = vld [vmem:[%s0 + $0x68] sm:$0xff]
    %v41 = vld [vmem:[%s0 + $0x70] sm:$0xff]
    %v42 = vld [vmem:[%s0 + $0x78] sm:$0xff]
    %v43 = vld [vmem:[%s2] sm:$0xff]
    %v44 = vld [vmem:[%s2 + $0x8] sm:$0xff]
    %v45 = vld [vmem:[%s2 + $0x10] sm:$0xff]
    %v46 = vld [vmem:[%s2 + $0x18] sm:$0xff]
    %v47 = vld [vmem:[%s2 + $0x20] sm:$0xff]
    %v48 = vld [vmem:[%s2 + $0x28] sm:$0xff]
    %v49 = vld [vmem:[%s2 + $0x30] sm:$0xff]
    %v50 = vld [vmem:[%s2 + $0x38] sm:$0xff]
    %vm51 = vcmask 261120
    %v53 = vsel %vm51, %v27, 0
    %v56 = vsel %vm51, %v28, 0
    %v59 = vsel %vm51, %v29, 0
    %v62 = vsel %vm51, %v30, 0
    %v65 = vsel %vm51, %v31, 0
    %v68 = vsel %vm51, %v32, 0
    %v71 = vsel %vm51, %v33, 0
    %v74 = vsel %vm51, %v34, 0
    %v77 = vsel %vm51, %v35, 0
    %v80 = vsel %vm51, %v36, 0
    %v83 = vsel %vm51, %v37, 0
    %v86 = vsel %vm51, %v38, 0
    %v89 = vsel %vm51, %v39, 0
    %v92 = vsel %vm51, %v40, 0
    %v95 = vsel %vm51, %v41, 0
    %v98 = vsel %vm51, %v42, 0
    %100 = vmatprep.subr.mxu0 %v44
    %101 = vmatpush1.msra.mxu0 %v43
    %102 = vmatprep.subr.mxu0 %v46
    %103 = vmatpush1.msra.mxu0 %v45
    %104 = vmatprep.subr.mxu0 %v48
    %105 = vmatpush1.msra.mxu0 %v47
    %106 = vmatprep.subr.mxu0 %v50
    %107 = vmatpush1.msra.mxu0 %v49
    %108 = vmatprep.subr.mxu0 0.0
    %109 = vmatpush1.msra.mxu0 0.0
    %110 = vmatprep.subr.mxu0 0.0
    %111 = vmatpush1.msra.mxu0 0.0
    %112 = vmatprep.subr.mxu0 0.0
    %113 = vmatpush1.msra.mxu0 0.0
    %114 = vmatprep.subr.mxu0 0.0
    %115 = vmatpush1.msra.mxu0 0.0
    %116 = vmatprep.subr.mxu0 0.0
    %117 = vmatpush1.msra.mxu0 0.0
    %118 = vmatprep.subr.mxu0 0.0
    %119 = vmatpush1.msra.mxu0 0.0
    %120 = vmatprep.subr.mxu0 0.0
    %121 = vmatpush1.msra.mxu0 0.0
    %122 = vmatprep.subr.mxu0 0.0
    %123 = vmatpush1.msra.mxu0 0.0
    %124 = vmatprep.subr.mxu0 0.0
    %125 = vmatpush1.msra.mxu0 0.0
    %126 = vmatprep.subr.mxu0 0.0
    %127 = vmatpush1.msra.mxu0 0.0
    %128 = vmatprep.subr.mxu0 0.0
    %129 = vmatpush1.msra.mxu0 0.0
    %130 = vmatprep.subr.mxu0 0.0
    %131 = vmatpush1.msra.mxu0 0.0
    %132 = vmatprep.subr.mxu0 0.0
    %133 = vmatpush1.msra.mxu0 0.0
    %134 = vmatprep.subr.mxu0 0.0
    %135 = vmatpush1.msra.mxu0 0.0
    %136 = vmatprep.subr.mxu0 0.0
    %137 = vmatpush1.msra.mxu0 0.0
    %138 = vmatprep.subr.mxu0 0.0
    %139 = vmatpush1.msra.mxu0 0.0
    %140 = vmatprep.subr.mxu0 0.0
    %141 = vmatpush1.msra.mxu0 0.0
    %142 = vmatprep.subr.mxu0 0.0
    %143 = vmatpush1.msra.mxu0 0.0
    %144 = vmatprep.subr.mxu0 0.0
    %145 = vmatpush1.msra.mxu0 0.0
    %146 = vmatprep.subr.mxu0 0.0
    %147 = vmatpush1.msra.mxu0 0.0
    %148 = vmatprep.subr.mxu0 0.0
    %149 = vmatpush1.msra.mxu0 0.0
    %150 = vmatprep.subr.mxu0 0.0
    %151 = vmatpush1.msra.mxu0 0.0
    %152 = vmatprep.subr.mxu0 0.0
    %153 = vmatpush1.msra.mxu0 0.0
    %154 = vmatprep.subr.mxu0 0.0
    %155 = vmatpush1.msra.mxu0 0.0
    %156 = vmatprep.subr.mxu0 0.0
    %157 = vmatpush1.msra.mxu0 0.0
    %158 = vmatprep.subr.mxu0 0.0
    %159 = vmatpush1.msra.mxu0 0.0
    %160 = vmatprep.subr.mxu0 0.0
    %161 = vmatpush1.msra.mxu0 0.0
    %162 = vmatprep.subr.mxu0 0.0
    %163 = vmatpush1.msra.mxu0 0.0
    %164 = vmatprep.mubr.f32.mxu0 0.0
    %165 = vmatmul.mubr.f32.gmra.mrb[0].mxu0 %v53
    %v166 = vpop.f32.mrb[0].mxu0
    %v167 = vadd.f32 0.0, %v166
    %v168 = vpop.f32.mrb[0].mxu0
    %v169 = vadd.f32 0.0, %v168
    %170 = vmatprep.mubr.f32.mxu0 0.0
    %171 = vmatmul.mubr.f32.gmra.mrb[0].mxu0 %v56
    %v172 = vpop.f32.mrb[0].mxu0
    %v173 = vadd.f32 0.0, %v172
    %v174 = vpop.f32.mrb[0].mxu0
    %v175 = vadd.f32 0.0, %v174
    %176 = vmatprep.mubr.f32.mxu0 0.0
    %177 = vmatmul.mubr.f32.gmra.mrb[0].mxu0 %v59
    %v178 = vpop.f32.mrb[0].mxu0
    %v179 = vadd.f32 0.0, %v178
    %v180 = vpop.f32.mrb[0].mxu0
    %v181 = vadd.f32 0.0, %v180
    %182 = vmatprep.mubr.f32.mxu0 0.0
    %183 = vmatmul.mubr.f32.gmra.mrb[0].mxu0 %v62
    %v184 = vpop.f32.mrb[0].mxu0
    %v185 = vadd.f32 0.0, %v184
    %v186 = vpop.f32.mrb[0].mxu0
    %v187 = vadd.f32 0.0, %v186
    %188 = vmatprep.mubr.f32.mxu0 0.0
    %189 = vmatmul.mubr.f32.gmra.mrb[0].mxu0 %v65
    %v190 = vpop.f32.mrb[0].mxu0
    %v191 = vadd.f32 0.0, %v190
    %v192 = vpop.f32.mrb[0].mxu0
    %v193 = vadd.f32 0.0, %v192
    %194 = vmatprep.mubr.f32.mxu0 0.0
    %195 = vmatmul.mubr.f32.gmra.mrb[0].mxu0 %v68
    %v196 = vpop.f32.mrb[0].mxu0
    %v197 = vadd.f32 0.0, %v196
    %v198 = vpop.f32.mrb[0].mxu0
    %v199 = vadd.f32 0.0, %v198
    %200 = vmatprep.mubr.f32.mxu0 0.0
    %201 = vmatmul.mubr.f32.gmra.mrb[0].mxu0 %v71
    %v202 = vpop.f32.mrb[0].mxu0
    %v203 = vadd.f32 0.0, %v202
    %v204 = vpop.f32.mrb[0].mxu0
    %v205 = vadd.f32 0.0, %v204
    %206 = vmatprep.mubr.f32.mxu0 0.0
    %207 = vmatmul.mubr.f32.gmra.mrb[0].mxu0 %v74
    %v208 = vpop.f32.mrb[0].mxu0
    %v209 = vadd.f32 0.0, %v208
    %v210 = vpop.f32.mrb[0].mxu0
    %v211 = vadd.f32 0.0, %v210
    %212 = vmatprep.mubr.f32.mxu0 0.0
    %213 = vmatmul.mubr.f32.gmra.mrb[0].mxu0 %v77
    %v214 = vpop.f32.mrb[0].mxu0
    %v215 = vadd.f32 0.0, %v214
    %v216 = vpop.f32.mrb[0].mxu0
    %v217 = vadd.f32 0.0, %v216
    %218 = vmatprep.mubr.f32.mxu0 0.0
    %219 = vmatmul.mubr.f32.gmra.mrb[0].mxu0 %v80
    %v220 = vpop.f32.mrb[0].mxu0
    %v221 = vadd.f32 0.0, %v220
    %v222 = vpop.f32.mrb[0].mxu0
    %v223 = vadd.f32 0.0, %v222
    %224 = vmatprep.mubr.f32.mxu0 0.0
    %225 = vmatmul.mubr.f32.gmra.mrb[0].mxu0 %v83
    %v226 = vpop.f32.mrb[0].mxu0
    %v227 = vadd.f32 0.0, %v226
    %v228 = vpop.f32.mrb[0].mxu0
    %v229 = vadd.f32 0.0, %v228
    %230 = vmatprep.mubr.f32.mxu0 0.0
    %231 = vmatmul.mubr.f32.gmra.mrb[0].mxu0 %v86
    %v232 = vpop.f32.mrb[0].mxu0
    %v233 = vadd.f32 0.0, %v232
    %v234 = vpop.f32.mrb[0].mxu0
    %v235 = vadd.f32 0.0, %v234
    %236 = vmatprep.mubr.f32.mxu0 0.0
    %237 = vmatmul.mubr.f32.gmra.mrb[0].mxu0 %v89
    %v238 = vpop.f32.mrb[0].mxu0
    %v239 = vadd.f32 0.0, %v238
    %v240 = vpop.f32.mrb[0].mxu0
    %v241 = vadd.f32 0.0, %v240
    %242 = vmatprep.mubr.f32.mxu0 0.0
    %243 = vmatmul.mubr.f32.gmra.mrb[0].mxu0 %v92
    %v244 = vpop.f32.mrb[0].mxu0
    %v245 = vadd.f32 0.0, %v244
    %v246 = vpop.f32.mrb[0].mxu0
    %v247 = vadd.f32 0.0, %v246
    %248 = vmatprep.mubr.f32.mxu0 0.0
    %249 = vmatmul.mubr.f32.gmra.mrb[0].mxu0 %v95
    %v250 = vpop.f32.mrb[0].mxu0
    %v251 = vadd.f32 0.0, %v250
    %v252 = vpop.f32.mrb[0].mxu0
    %v253 = vadd.f32 0.0, %v252
    %254 = vmatprep.mubr.f32.mxu0 0.0
    %255 = vmatmul.mubr.f32.gmra.mrb[0].mxu0 %v98
    %v256 = vpop.f32.mrb[0].mxu0
    %v257 = vadd.f32 0.0, %v256
    %v258 = vpop.f32.mrb[0].mxu0
    %v259 = vadd.f32 0.0, %v258
    %260 = vdwg.mxu0
    %v261 = vld [vmem:[%s3] sm:$0xff]
    %v262 = vld [vmem:[%s3 + $0x8] sm:$0xff]
    %v263 = vld [vmem:[%s5] sm:$0xff]
    %v264 = vld [vmem:[%s5 + $0x8] sm:$0xff]
    %v265 = vld [vmem:[%s6] sm:$0xff]
    %v266 = vld [vmem:[%s1] sm:$0xff]
    %v267 = vld [vmem:[%s1 + $0x8] sm:$0xff]
    %v268 = vld [vmem:[%s1 + $0x10] sm:$0xff]
    %v269 = vld [vmem:[%s1 + $0x18] sm:$0xff]
    %v270 = vld [vmem:[%s1 + $0x20] sm:$0xff]
    %v271 = vld [vmem:[%s1 + $0x28] sm:$0xff]
    %v272 = vld [vmem:[%s1 + $0x30] sm:$0xff]
    %v273 = vld [vmem:[%s1 + $0x38] sm:$0xff]
    %v274 = vld [vmem:[%s1 + $0x40] sm:$0xff]
    %v275 = vld [vmem:[%s1 + $0x48] sm:$0xff]
    %v276 = vld [vmem:[%s1 + $0x50] sm:$0xff]
    %v277 = vld [vmem:[%s1 + $0x58] sm:$0xff]
    %v278 = vld [vmem:[%s1 + $0x60] sm:$0xff]
    %v279 = vld [vmem:[%s1 + $0x68] sm:$0xff]
    %v280 = vld [vmem:[%s1 + $0x70] sm:$0xff]
    %v281 = vld [vmem:[%s1 + $0x78] sm:$0xff]
    %vm282 = vcmask 64512
    %v284 = vsel %vm282, %v266, 0
    %v287 = vsel %vm282, %v267, 0
    %v290 = vsel %vm282, %v268, 0
    %v293 = vsel %vm282, %v269, 0
    %v296 = vsel %vm282, %v270, 0
    %v299 = vsel %vm282, %v271, 0
    %v302 = vsel %vm282, %v272, 0
    %v305 = vsel %vm282, %v273, 0
    %v308 = vsel %vm282, %v274, 0
    %v311 = vsel %vm282, %v275, 0
    %v314 = vsel %vm282, %v276, 0
    %v317 = vsel %vm282, %v277, 0
    %v320 = vsel %vm282, %v278, 0
    %v323 = vsel %vm282, %v279, 0
    %v326 = vsel %vm282, %v280, 0
    %v329 = vsel %vm282, %v281, 0
    %331 = vmatprep.subr.mxu0 %v262
    %332 = vmatpush1.msra.mxu0 %v261
    %333 = vmatprep.subr.mxu0 0.0
    %334 = vmatpush1.msra.mxu0 0.0
    %335 = vmatprep.subr.mxu0 0.0
    %336 = vmatpush1.msra.mxu0 0.0
    %337 = vmatprep.subr.mxu0 0.0
    %338 = vmatpush1.msra.mxu0 0.0
    %339 = vmatprep.subr.mxu0 0.0
    %340 = vmatpush1.msra.mxu0 0.0
    %341 = vmatprep.subr.mxu0 0.0
    %342 = vmatpush1.msra.mxu0 0.0
    %343 = vmatprep.subr.mxu0 0.0
    %344 = vmatpush1.msra.mxu0 0.0
    %345 = vmatprep.subr.mxu0 0.0
    %346 = vmatpush1.msra.mxu0 0.0
    %347 = vmatprep.subr.mxu0 0.0
    %348 = vmatpush1.msra.mxu0 0.0
    %349 = vmatprep.subr.mxu0 0.0
    %350 = vmatpush1.msra.mxu0 0.0
    %351 = vmatprep.subr.mxu0 0.0
    %352 = vmatpush1.msra.mxu0 0.0
    %353 = vmatprep.subr.mxu0 0.0
    %354 = vmatpush1.msra.mxu0 0.0
    %355 = vmatprep.subr.mxu0 0.0
    %356 = vmatpush1.msra.mxu0 0.0
    %357 = vmatprep.subr.mxu0 0.0
    %358 = vmatpush1.msra.mxu0 0.0
    %359 = vmatprep.subr.mxu0 0.0
    %360 = vmatpush1.msra.mxu0 0.0
    %361 = vmatprep.subr.mxu0 0.0
    %362 = vmatpush1.msra.mxu0 0.0
    %363 = vmatprep.subr.mxu0 0.0
    %364 = vmatpush1.msra.mxu0 0.0
    %365 = vmatprep.subr.mxu0 0.0
    %366 = vmatpush1.msra.mxu0 0.0
    %367 = vmatprep.subr.mxu0 0.0
    %368 = vmatpush1.msra.mxu0 0.0
    %369 = vmatprep.subr.mxu0 0.0
    %370 = vmatpush1.msra.mxu0 0.0
    %371 = vmatprep.subr.mxu0 0.0
    %372 = vmatpush1.msra.mxu0 0.0
    %373 = vmatprep.subr.mxu0 0.0
    %374 = vmatpush1.msra.mxu0 0.0
    %375 = vmatprep.subr.mxu0 0.0
    %376 = vmatpush1.msra.mxu0 0.0
    %377 = vmatprep.subr.mxu0 0.0
    %378 = vmatpush1.msra.mxu0 0.0
    %379 = vmatprep.subr.mxu0 0.0
    %380 = vmatpush1.msra.mxu0 0.0
    %381 = vmatprep.subr.mxu0 0.0
    %382 = vmatpush1.msra.mxu0 0.0
    %383 = vmatprep.subr.mxu0 0.0
    %384 = vmatpush1.msra.mxu0 0.0
    %385 = vmatprep.subr.mxu0 0.0
    %386 = vmatpush1.msra.mxu0 0.0
    %387 = vmatprep.subr.mxu0 0.0
    %388 = vmatpush1.msra.mxu0 0.0
    %389 = vmatprep.subr.mxu0 0.0
    %390 = vmatpush1.msra.mxu0 0.0
    %391 = vmatprep.subr.mxu0 0.0
    %392 = vmatpush1.msra.mxu0 0.0
    %393 = vmatprep.subr.mxu0 0.0
    %394 = vmatpush1.msra.mxu0 0.0
    %395 = vmatprep.mubr.f32.mxu0 0.0
    %396 = vmatmul.mubr.f32.gmra.mrb[0].mxu0 %v284
    %v397 = vpop.f32.mrb[0].mxu0
    %v398 = vadd.f32 0.0, %v397
    %v399 = vpop.f32.mrb[0].mxu0
    %v400 = vadd.f32 0.0, %v399
    %401 = vmatprep.mubr.f32.mxu0 0.0
    %402 = vmatmul.mubr.f32.gmra.mrb[0].mxu0 %v287
    %v403 = vpop.f32.mrb[0].mxu0
    %v404 = vadd.f32 0.0, %v403
    %v405 = vpop.f32.mrb[0].mxu0
    %v406 = vadd.f32 0.0, %v405
    %407 = vmatprep.mubr.f32.mxu0 0.0
    %408 = vmatmul.mubr.f32.gmra.mrb[0].mxu0 %v290
    %v409 = vpop.f32.mrb[0].mxu0
    %v410 = vadd.f32 0.0, %v409
    %v411 = vpop.f32.mrb[0].mxu0
    %v412 = vadd.f32 0.0, %v411
    %413 = vmatprep.mubr.f32.mxu0 0.0
    %414 = vmatmul.mubr.f32.gmra.mrb[0].mxu0 %v293
    %v415 = vpop.f32.mrb[0].mxu0
    %v416 = vadd.f32 0.0, %v415
    %v417 = vpop.f32.mrb[0].mxu0
    %v418 = vadd.f32 0.0, %v417
    %419 = vmatprep.mubr.f32.mxu0 0.0
    %420 = vmatmul.mubr.f32.gmra.mrb[0].mxu0 %v296
    %v421 = vpop.f32.mrb[0].mxu0
    %v422 = vadd.f32 0.0, %v421
    %v423 = vpop.f32.mrb[0].mxu0
    %v424 = vadd.f32 0.0, %v423
    %425 = vmatprep.mubr.f32.mxu0 0.0
    %426 = vmatmul.mubr.f32.gmra.mrb[0].mxu0 %v299
    %v427 = vpop.f32.mrb[0].mxu0
    %v428 = vadd.f32 0.0, %v427
    %v429 = vpop.f32.mrb[0].mxu0
    %v430 = vadd.f32 0.0, %v429
    %431 = vmatprep.mubr.f32.mxu0 0.0
    %432 = vmatmul.mubr.f32.gmra.mrb[0].mxu0 %v302
    %v433 = vpop.f32.mrb[0].mxu0
    %v434 = vadd.f32 0.0, %v433
    %v435 = vpop.f32.mrb[0].mxu0
    %v436 = vadd.f32 0.0, %v435
    %437 = vmatprep.mubr.f32.mxu0 0.0
    %438 = vmatmul.mubr.f32.gmra.mrb[0].mxu0 %v305
    %v439 = vpop.f32.mrb[0].mxu0
    %v440 = vadd.f32 0.0, %v439
    %v441 = vpop.f32.mrb[0].mxu0
    %v442 = vadd.f32 0.0, %v441
    %443 = vmatprep.mubr.f32.mxu0 0.0
    %444 = vmatmul.mubr.f32.gmra.mrb[0].mxu0 %v308
    %v445 = vpop.f32.mrb[0].mxu0
    %v446 = vadd.f32 0.0, %v445
    %v447 = vpop.f32.mrb[0].mxu0
    %v448 = vadd.f32 0.0, %v447
    %449 = vmatprep.mubr.f32.mxu0 0.0
    %450 = vmatmul.mubr.f32.gmra.mrb[0].mxu0 %v311
    %v451 = vpop.f32.mrb[0].mxu0
    %v452 = vadd.f32 0.0, %v451
    %v453 = vpop.f32.mrb[0].mxu0
    %v454 = vadd.f32 0.0, %v453
    %455 = vmatprep.mubr.f32.mxu0 0.0
    %456 = vmatmul.mubr.f32.gmra.mrb[0].mxu0 %v314
    %v457 = vpop.f32.mrb[0].mxu0
    %v458 = vadd.f32 0.0, %v457
    %v459 = vpop.f32.mrb[0].mxu0
    %v460 = vadd.f32 0.0, %v459
    %461 = vmatprep.mubr.f32.mxu0 0.0
    %462 = vmatmul.mubr.f32.gmra.mrb[0].mxu0 %v317
    %v463 = vpop.f32.mrb[0].mxu0
    %v464 = vadd.f32 0.0, %v463
    %v465 = vpop.f32.mrb[0].mxu0
    %v466 = vadd.f32 0.0, %v465
    %467 = vmatprep.mubr.f32.mxu0 0.0
    %468 = vmatmul.mubr.f32.gmra.mrb[0].mxu0 %v320
    %v469 = vpop.f32.mrb[0].mxu0
    %v470 = vadd.f32 0.0, %v469
    %v471 = vpop.f32.mrb[0].mxu0
    %v472 = vadd.f32 0.0, %v471
    %473 = vmatprep.mubr.f32.mxu0 0.0
    %474 = vmatmul.mubr.f32.gmra.mrb[0].mxu0 %v323
    %v475 = vpop.f32.mrb[0].mxu0
    %v476 = vadd.f32 0.0, %v475
    %v477 = vpop.f32.mrb[0].mxu0
    %v478 = vadd.f32 0.0, %v477
    %479 = vmatprep.mubr.f32.mxu0 0.0
    %480 = vmatmul.mubr.f32.gmra.mrb[0].mxu0 %v326
    %v481 = vpop.f32.mrb[0].mxu0
    %v482 = vadd.f32 0.0, %v481
    %v483 = vpop.f32.mrb[0].mxu0
    %v484 = vadd.f32 0.0, %v483
    %485 = vmatprep.mubr.f32.mxu0 0.0
    %486 = vmatmul.mubr.f32.gmra.mrb[0].mxu0 %v329
    %v487 = vpop.f32.mrb[0].mxu0
    %v488 = vadd.f32 0.0, %v487
    %v489 = vpop.f32.mrb[0].mxu0
    %v490 = vadd.f32 0.0, %v489
    %491 = vdwg.mxu0
    %v492 = vadd.f32 %v167, %v398
    %v493 = vadd.f32 %v169, %v400
    %v494 = vadd.f32 %v173, %v404
    %v495 = vadd.f32 %v175, %v406
    %v496 = vadd.f32 %v179, %v410
    %v497 = vadd.f32 %v181, %v412
    %v498 = vadd.f32 %v185, %v416
    %v499 = vadd.f32 %v187, %v418
    %v500 = vadd.f32 %v191, %v422
    %v501 = vadd.f32 %v193, %v424
    %v502 = vadd.f32 %v197, %v428
    %v503 = vadd.f32 %v199, %v430
    %v504 = vadd.f32 %v203, %v434
    %v505 = vadd.f32 %v205, %v436
    %v506 = vadd.f32 %v209, %v440
    %v507 = vadd.f32 %v211, %v442
    %v508 = vadd.f32 %v215, %v446
    %v509 = vadd.f32 %v217, %v448
    %v510 = vadd.f32 %v221, %v452
    %v511 = vadd.f32 %v223, %v454
    %v512 = vadd.f32 %v227, %v458
    %v513 = vadd.f32 %v229, %v460
    %v514 = vadd.f32 %v233, %v464
    %v515 = vadd.f32 %v235, %v466
    %v516 = vadd.f32 %v239, %v470
    %v517 = vadd.f32 %v241, %v472
    %v518 = vadd.f32 %v245, %v476
    %v519 = vadd.f32 %v247, %v478
    %v520 = vadd.f32 %v251, %v482
    %v521 = vadd.f32 %v253, %v484
    %v522 = vadd.f32 %v257, %v488
    %v523 = vadd.f32 %v259, %v490
    %v524 = vld [vmem:[%s4] sm:$0x3]
    %v526 = vlaneseq
    %v527 = vshrl.u32 %v526, 7
    %v528 = vsub.s32 0, %v527
    %v529 = vrot.slane %v524, %v528
    %v530 = vlaneseq
    %v531 = vshrl.u32 %v530, 7
    %v532 = vsub.s32 1, %v531
    %v533 = vrot.slane %v524, %v532
    %v536 = vadd.f32 %v492, %v529
    %v537 = vadd.f32 %v493, %v533
    %v538 = vadd.f32 %v494, %v529
    %v539 = vadd.f32 %v495, %v533
    %v540 = vadd.f32 %v496, %v529
    %v541 = vadd.f32 %v497, %v533
    %v542 = vadd.f32 %v498, %v529
    %v543 = vadd.f32 %v499, %v533
    %v544 = vadd.f32 %v500, %v529
    %v545 = vadd.f32 %v501, %v533
    %v546 = vadd.f32 %v502, %v529
    %v547 = vadd.f32 %v503, %v533
    %v548 = vadd.f32 %v504, %v529
    %v549 = vadd.f32 %v505, %v533
    %v550 = vadd.f32 %v506, %v529
    %v551 = vadd.f32 %v507, %v533
    %v552 = vadd.f32 %v508, %v529
    %v553 = vadd.f32 %v509, %v533
    %v554 = vadd.f32 %v510, %v529
    %v555 = vadd.f32 %v511, %v533
    %v556 = vadd.f32 %v512, %v529
    %v557 = vadd.f32 %v513, %v533
    %v558 = vadd.f32 %v514, %v529
    %v559 = vadd.f32 %v515, %v533
    %v560 = vadd.f32 %v516, %v529
    %v561 = vadd.f32 %v517, %v533
    %v562 = vadd.f32 %v518, %v529
    %v563 = vadd.f32 %v519, %v533
    %v564 = vadd.f32 %v520, %v529
    %v565 = vadd.f32 %v521, %v533
    %v566 = vadd.f32 %v522, %v529
    %v567 = vadd.f32 %v523, %v533
    %vm568 = vcmp.ge.f32.partialorder %v536, 0.0
    %vm569 = vcmp.ge.f32.partialorder %v537, 0.0
    %vm570 = vcmp.ge.f32.partialorder %v538, 0.0
    %vm571 = vcmp.ge.f32.partialorder %v539, 0.0
    %vm572 = vcmp.ge.f32.partialorder %v540, 0.0
    %vm573 = vcmp.ge.f32.partialorder %v541, 0.0
    %vm574 = vcmp.ge.f32.partialorder %v542, 0.0
    %vm575 = vcmp.ge.f32.partialorder %v543, 0.0
    %vm576 = vcmp.ge.f32.partialorder %v544, 0.0
    %vm577 = vcmp.ge.f32.partialorder %v545, 0.0
    %vm578 = vcmp.ge.f32.partialorder %v546, 0.0
    %vm579 = vcmp.ge.f32.partialorder %v547, 0.0
    %vm580 = vcmp.ge.f32.partialorder %v548, 0.0
    %vm581 = vcmp.ge.f32.partialorder %v549, 0.0
    %vm582 = vcmp.ge.f32.partialorder %v550, 0.0
    %vm583 = vcmp.ge.f32.partialorder %v551, 0.0
    %vm584 = vcmp.ge.f32.partialorder %v552, 0.0
    %vm585 = vcmp.ge.f32.partialorder %v553, 0.0
    %vm586 = vcmp.ge.f32.partialorder %v554, 0.0
    %vm587 = vcmp.ge.f32.partialorder %v555, 0.0
    %vm588 = vcmp.ge.f32.partialorder %v556, 0.0
    %vm589 = vcmp.ge.f32.partialorder %v557, 0.0
    %vm590 = vcmp.ge.f32.partialorder %v558, 0.0
    %vm591 = vcmp.ge.f32.partialorder %v559, 0.0
    %vm592 = vcmp.ge.f32.partialorder %v560, 0.0
    %vm593 = vcmp.ge.f32.partialorder %v561, 0.0
    %vm594 = vcmp.ge.f32.partialorder %v562, 0.0
    %vm595 = vcmp.ge.f32.partialorder %v563, 0.0
    %vm596 = vcmp.ge.f32.partialorder %v564, 0.0
    %vm597 = vcmp.ge.f32.partialorder %v565, 0.0
    %vm598 = vcmp.ge.f32.partialorder %v566, 0.0
    %vm599 = vcmp.ge.f32.partialorder %v567, 0.0
    %v600 = vmul.f32 %v536, 0.01
    %v601 = vmul.f32 %v537, 0.01
    %v602 = vmul.f32 %v538, 0.01
    %v603 = vmul.f32 %v539, 0.01
    %v604 = vmul.f32 %v540, 0.01
    %v605 = vmul.f32 %v541, 0.01
    %v606 = vmul.f32 %v542, 0.01
    %v607 = vmul.f32 %v543, 0.01
    %v608 = vmul.f32 %v544, 0.01
    %v609 = vmul.f32 %v545, 0.01
    %v610 = vmul.f32 %v546, 0.01
    %v611 = vmul.f32 %v547, 0.01
    %v612 = vmul.f32 %v548, 0.01
    %v613 = vmul.f32 %v549, 0.01
    %v614 = vmul.f32 %v550, 0.01
    %v615 = vmul.f32 %v551, 0.01
    %v616 = vmul.f32 %v552, 0.01
    %v617 = vmul.f32 %v553, 0.01
    %v618 = vmul.f32 %v554, 0.01
    %v619 = vmul.f32 %v555, 0.01
    %v620 = vmul.f32 %v556, 0.01
    %v621 = vmul.f32 %v557, 0.01
    %v622 = vmul.f32 %v558, 0.01
    %v623 = vmul.f32 %v559, 0.01
    %v624 = vmul.f32 %v560, 0.01
    %v625 = vmul.f32 %v561, 0.01
    %v626 = vmul.f32 %v562, 0.01
    %v627 = vmul.f32 %v563, 0.01
    %v628 = vmul.f32 %v564, 0.01
    %v629 = vmul.f32 %v565, 0.01
    %v630 = vmul.f32 %v566, 0.01
    %v631 = vmul.f32 %v567, 0.01
    %v632 = vsel %vm568, %v536, %v600
    %v633 = vsel %vm569, %v537, %v601
    %v634 = vsel %vm570, %v538, %v602
    %v635 = vsel %vm571, %v539, %v603
    %v636 = vsel %vm572, %v540, %v604
    %v637 = vsel %vm573, %v541, %v605
    %v638 = vsel %vm574, %v542, %v606
    %v639 = vsel %vm575, %v543, %v607
    %v640 = vsel %vm576, %v544, %v608
    %v641 = vsel %vm577, %v545, %v609
    %v642 = vsel %vm578, %v546, %v610
    %v643 = vsel %vm579, %v547, %v611
    %v644 = vsel %vm580, %v548, %v612
    %v645 = vsel %vm581, %v549, %v613
    %v646 = vsel %vm582, %v550, %v614
    %v647 = vsel %vm583, %v551, %v615
    %v648 = vsel %vm584, %v552, %v616
    %v649 = vsel %vm585, %v553, %v617
    %v650 = vsel %vm586, %v554, %v618
    %v651 = vsel %vm587, %v555, %v619
    %v652 = vsel %vm588, %v556, %v620
    %v653 = vsel %vm589, %v557, %v621
    %v654 = vsel %vm590, %v558, %v622
    %v655 = vsel %vm591, %v559, %v623
    %v656 = vsel %vm592, %v560, %v624
    %v657 = vsel %vm593, %v561, %v625
    %v658 = vsel %vm594, %v562, %v626
    %v659 = vsel %vm595, %v563, %v627
    %v660 = vsel %vm596, %v564, %v628
    %v661 = vsel %vm597, %v565, %v629
    %v662 = vsel %vm598, %v566, %v630
    %v663 = vsel %vm599, %v567, %v631
    %665 = vset.pattern.permute.xlu0 0
    %666 = vperm.xlu0 %665, %v265
    %v667 = vpop.permute.xlu0 %666
    %669 = vmatprep.subr.mxu0 %v633
    %670 = vmatpush1.xpose.msra.mxu0 %v632
    %671 = vmatprep.subr.mxu0 %v635
    %672 = vmatpush1.xpose.msra.mxu0 %v634
    %673 = vmatprep.subr.mxu0 %v637
    %674 = vmatpush1.xpose.msra.mxu0 %v636
    %675 = vmatprep.subr.mxu0 %v639
    %676 = vmatpush1.xpose.msra.mxu0 %v638
    %677 = vmatprep.subr.mxu0 %v641
    %678 = vmatpush1.xpose.msra.mxu0 %v640
    %679 = vmatprep.subr.mxu0 %v643
    %680 = vmatpush1.xpose.msra.mxu0 %v642
    %681 = vmatprep.subr.mxu0 %v645
    %682 = vmatpush1.xpose.msra.mxu0 %v644
    %683 = vmatprep.subr.mxu0 %v647
    %684 = vmatpush1.xpose.msra.mxu0 %v646
    %685 = vmatprep.subr.mxu0 %v649
    %686 = vmatpush1.xpose.msra.mxu0 %v648
    %687 = vmatprep.subr.mxu0 %v651
    %688 = vmatpush1.xpose.msra.mxu0 %v650
    %689 = vmatprep.subr.mxu0 %v653
    %690 = vmatpush1.xpose.msra.mxu0 %v652
    %691 = vmatprep.subr.mxu0 %v655
    %692 = vmatpush1.xpose.msra.mxu0 %v654
    %693 = vmatprep.subr.mxu0 %v657
    %694 = vmatpush1.xpose.msra.mxu0 %v656
    %695 = vmatprep.subr.mxu0 %v659
    %696 = vmatpush1.xpose.msra.mxu0 %v658
    %697 = vmatprep.subr.mxu0 %v661
    %698 = vmatpush1.xpose.msra.mxu0 %v660
    %699 = vmatprep.subr.mxu0 %v663
    %700 = vmatpush1.xpose.msra.mxu0 %v662
    %701 = vmatprep.subr.mxu0 0.0
    %702 = vmatpush1.xpose.msra.mxu0 0.0
    %703 = vmatprep.subr.mxu0 0.0
    %704 = vmatpush1.xpose.msra.mxu0 0.0
    %705 = vmatprep.subr.mxu0 0.0
    %706 = vmatpush1.xpose.msra.mxu0 0.0
    %707 = vmatprep.subr.mxu0 0.0
    %708 = vmatpush1.xpose.msra.mxu0 0.0
    %709 = vmatprep.subr.mxu0 0.0
    %710 = vmatpush1.xpose.msra.mxu0 0.0
    %711 = vmatprep.subr.mxu0 0.0
    %712 = vmatpush1.xpose.msra.mxu0 0.0
    %713 = vmatprep.subr.mxu0 0.0
    %714 = vmatpush1.xpose.msra.mxu0 0.0
    %715 = vmatprep.subr.mxu0 0.0
    %716 = vmatpush1.xpose.msra.mxu0 0.0
    %717 = vmatprep.subr.mxu0 0.0
    %718 = vmatpush1.xpose.msra.mxu0 0.0
    %719 = vmatprep.subr.mxu0 0.0
    %720 = vmatpush1.xpose.msra.mxu0 0.0
    %721 = vmatprep.subr.mxu0 0.0
    %722 = vmatpush1.xpose.msra.mxu0 0.0
    %723 = vmatprep.subr.mxu0 0.0
    %724 = vmatpush1.xpose.msra.mxu0 0.0
    %725 = vmatprep.subr.mxu0 0.0
    %726 = vmatpush1.xpose.msra.mxu0 0.0
    %727 = vmatprep.subr.mxu0 0.0
    %728 = vmatpush1.xpose.msra.mxu0 0.0
    %729 = vmatprep.subr.mxu0 0.0
    %730 = vmatpush1.xpose.msra.mxu0 0.0
    %731 = vmatprep.subr.mxu0 0.0
    %732 = vmatpush1.xpose.msra.mxu0 0.0
    %733 = vmatprep.mubr.f32.mxu0 %v264
    %734 = vmatmul.mubr.f32.gmra.mrb[0].mxu0 %v263
    %v735 = vpop.f32.mrb[0].mxu0
    %v736 = vadd.f32 %v667, %v735
    %v737 = vpop.f32.mrb[0].mxu0
    %738 = vdwg.mxu0
    %739 = vst [vmem:[#allocation2] sm:$0xff] %v736
    %s740 = scalar_lea.vmem %s1, 128
    %v741 = vld [vmem:[%s740] sm:$0xff]
    %v742 = vld [vmem:[%s740 + $0x8] sm:$0xff]
    %v743 = vld [vmem:[%s740 + $0x10] sm:$0xff]
    %v744 = vld [vmem:[%s740 + $0x18] sm:$0xff]
    %v745 = vld [vmem:[%s740 + $0x20] sm:$0xff]
    %v746 = vld [vmem:[%s740 + $0x28] sm:$0xff]
    %v747 = vld [vmem:[%s740 + $0x30] sm:$0xff]
    %v748 = vld [vmem:[%s740 + $0x38] sm:$0xff]
    %v749 = vld [vmem:[%s740 + $0x40] sm:$0xff]
    %v750 = vld [vmem:[%s740 + $0x48] sm:$0xff]
    %v751 = vld [vmem:[%s740 + $0x50] sm:$0xff]
    %v752 = vld [vmem:[%s740 + $0x58] sm:$0xff]
    %v753 = vld [vmem:[%s740 + $0x60] sm:$0xff]
    %v754 = vld [vmem:[%s740 + $0x68] sm:$0xff]
    %v755 = vld [vmem:[%s740 + $0x70] sm:$0xff]
    %v756 = vld [vmem:[%s740 + $0x78] sm:$0xff]
    %v758 = vsel %vm282, %v741, 0
    %v761 = vsel %vm282, %v742, 0
    %v764 = vsel %vm282, %v743, 0
    %v767 = vsel %vm282, %v744, 0
    %v770 = vsel %vm282, %v745, 0
    %v773 = vsel %vm282, %v746, 0
    %v776 = vsel %vm282, %v747, 0
    %v779 = vsel %vm282, %v748, 0
    %v782 = vsel %vm282, %v749, 0
    %v785 = vsel %vm282, %v750, 0
    %v788 = vsel %vm282, %v751, 0
    %v791 = vsel %vm282, %v752, 0
    %v794 = vsel %vm282, %v753, 0
    %v797 = vsel %vm282, %v754, 0
    %v800 = vsel %vm282, %v755, 0
    %v803 = vsel %vm282, %v756, 0
    %805 = vmatprep.subr.mxu0 %v262
    %806 = vmatpush1.msra.mxu0 %v261
    %807 = vmatprep.subr.mxu0 0.0
    %808 = vmatpush1.msra.mxu0 0.0
    %809 = vmatprep.subr.mxu0 0.0
    %810 = vmatpush1.msra.mxu0 0.0
    %811 = vmatprep.subr.mxu0 0.0
    %812 = vmatpush1.msra.mxu0 0.0
    %813 = vmatprep.subr.mxu0 0.0
    %814 = vmatpush1.msra.mxu0 0.0
    %815 = vmatprep.subr.mxu0 0.0
    %816 = vmatpush1.msra.mxu0 0.0
    %817 = vmatprep.subr.mxu0 0.0
    %818 = vmatpush1.msra.mxu0 0.0
    %819 = vmatprep.subr.mxu0 0.0
    %820 = vmatpush1.msra.mxu0 0.0
    %821 = vmatprep.subr.mxu0 0.0
    %822 = vmatpush1.msra.mxu0 0.0
    %823 = vmatprep.subr.mxu0 0.0
    %824 = vmatpush1.msra.mxu0 0.0
    %825 = vmatprep.subr.mxu0 0.0
    %826 = vmatpush1.msra.mxu0 0.0
    %827 = vmatprep.subr.mxu0 0.0
    %828 = vmatpush1.msra.mxu0 0.0
    %829 = vmatprep.subr.mxu0 0.0
    %830 = vmatpush1.msra.mxu0 0.0
    %831 = vmatprep.subr.mxu0 0.0
    %832 = vmatpush1.msra.mxu0 0.0
    %833 = vmatprep.subr.mxu0 0.0
    %834 = vmatpush1.msra.mxu0 0.0
    %835 = vmatprep.subr.mxu0 0.0
    %836 = vmatpush1.msra.mxu0 0.0
    %837 = vmatprep.subr.mxu0 0.0
    %838 = vmatpush1.msra.mxu0 0.0
    %839 = vmatprep.subr.mxu0 0.0
    %840 = vmatpush1.msra.mxu0 0.0
    %841 = vmatprep.subr.mxu0 0.0
    %842 = vmatpush1.msra.mxu0 0.0
    %843 = vmatprep.subr.mxu0 0.0
    %844 = vmatpush1.msra.mxu0 0.0
    %845 = vmatprep.subr.mxu0 0.0
    %846 = vmatpush1.msra.mxu0 0.0
    %847 = vmatprep.subr.mxu0 0.0
    %848 = vmatpush1.msra.mxu0 0.0
    %849 = vmatprep.subr.mxu0 0.0
    %850 = vmatpush1.msra.mxu0 0.0
    %851 = vmatprep.subr.mxu0 0.0
    %852 = vmatpush1.msra.mxu0 0.0
    %853 = vmatprep.subr.mxu0 0.0
    %854 = vmatpush1.msra.mxu0 0.0
    %855 = vmatprep.subr.mxu0 0.0
    %856 = vmatpush1.msra.mxu0 0.0
    %857 = vmatprep.subr.mxu0 0.0
    %858 = vmatpush1.msra.mxu0 0.0
    %859 = vmatprep.subr.mxu0 0.0
    %860 = vmatpush1.msra.mxu0 0.0
    %861 = vmatprep.subr.mxu0 0.0
    %862 = vmatpush1.msra.mxu0 0.0
    %863 = vmatprep.subr.mxu0 0.0
    %864 = vmatpush1.msra.mxu0 0.0
    %865 = vmatprep.subr.mxu0 0.0
    %866 = vmatpush1.msra.mxu0 0.0
    %867 = vmatprep.subr.mxu0 0.0
    %868 = vmatpush1.msra.mxu0 0.0
    %869 = vmatprep.mubr.f32.mxu0 0.0
    %870 = vmatmul.mubr.f32.gmra.mrb[0].mxu0 %v758
    %v871 = vpop.f32.mrb[0].mxu0
    %v872 = vadd.f32 0.0, %v871
    %v873 = vpop.f32.mrb[0].mxu0
    %v874 = vadd.f32 0.0, %v873
    %875 = vmatprep.mubr.f32.mxu0 0.0
    %876 = vmatmul.mubr.f32.gmra.mrb[0].mxu0 %v761
    %v877 = vpop.f32.mrb[0].mxu0
    %v878 = vadd.f32 0.0, %v877
    %v879 = vpop.f32.mrb[0].mxu0
    %v880 = vadd.f32 0.0, %v879
    %881 = vmatprep.mubr.f32.mxu0 0.0
    %882 = vmatmul.mubr.f32.gmra.mrb[0].mxu0 %v764
    %v883 = vpop.f32.mrb[0].mxu0
    %v884 = vadd.f32 0.0, %v883
    %v885 = vpop.f32.mrb[0].mxu0
    %v886 = vadd.f32 0.0, %v885
    %887 = vmatprep.mubr.f32.mxu0 0.0
    %888 = vmatmul.mubr.f32.gmra.mrb[0].mxu0 %v767
    %v889 = vpop.f32.mrb[0].mxu0
    %v890 = vadd.f32 0.0, %v889
    %v891 = vpop.f32.mrb[0].mxu0
    %v892 = vadd.f32 0.0, %v891
    %893 = vmatprep.mubr.f32.mxu0 0.0
    %894 = vmatmul.mubr.f32.gmra.mrb[0].mxu0 %v770
    %v895 = vpop.f32.mrb[0].mxu0
    %v896 = vadd.f32 0.0, %v895
    %v897 = vpop.f32.mrb[0].mxu0
    %v898 = vadd.f32 0.0, %v897
    %899 = vmatprep.mubr.f32.mxu0 0.0
    %900 = vmatmul.mubr.f32.gmra.mrb[0].mxu0 %v773
    %v901 = vpop.f32.mrb[0].mxu0
    %v902 = vadd.f32 0.0, %v901
    %v903 = vpop.f32.mrb[0].mxu0
    %v904 = vadd.f32 0.0, %v903
    %905 = vmatprep.mubr.f32.mxu0 0.0
    %906 = vmatmul.mubr.f32.gmra.mrb[0].mxu0 %v776
    %v907 = vpop.f32.mrb[0].mxu0
    %v908 = vadd.f32 0.0, %v907
    %v909 = vpop.f32.mrb[0].mxu0
    %v910 = vadd.f32 0.0, %v909
    %911 = vmatprep.mubr.f32.mxu0 0.0
    %912 = vmatmul.mubr.f32.gmra.mrb[0].mxu0 %v779
    %v913 = vpop.f32.mrb[0].mxu0
    %v914 = vadd.f32 0.0, %v913
    %v915 = vpop.f32.mrb[0].mxu0
    %v916 = vadd.f32 0.0, %v915
    %917 = vmatprep.mubr.f32.mxu0 0.0
    %918 = vmatmul.mubr.f32.gmra.mrb[0].mxu0 %v782
    %v919 = vpop.f32.mrb[0].mxu0
    %v920 = vadd.f32 0.0, %v919
    %v921 = vpop.f32.mrb[0].mxu0
    %v922 = vadd.f32 0.0, %v921
    %923 = vmatprep.mubr.f32.mxu0 0.0
    %924 = vmatmul.mubr.f32.gmra.mrb[0].mxu0 %v785
    %v925 = vpop.f32.mrb[0].mxu0
    %v926 = vadd.f32 0.0, %v925
    %v927 = vpop.f32.mrb[0].mxu0
    %v928 = vadd.f32 0.0, %v927
    %929 = vmatprep.mubr.f32.mxu0 0.0
    %930 = vmatmul.mubr.f32.gmra.mrb[0].mxu0 %v788
    %v931 = vpop.f32.mrb[0].mxu0
    %v932 = vadd.f32 0.0, %v931
    %v933 = vpop.f32.mrb[0].mxu0
    %v934 = vadd.f32 0.0, %v933
    %935 = vmatprep.mubr.f32.mxu0 0.0
    %936 = vmatmul.mubr.f32.gmra.mrb[0].mxu0 %v791
    %v937 = vpop.f32.mrb[0].mxu0
    %v938 = vadd.f32 0.0, %v937
    %v939 = vpop.f32.mrb[0].mxu0
    %v940 = vadd.f32 0.0, %v939
    %941 = vmatprep.mubr.f32.mxu0 0.0
    %942 = vmatmul.mubr.f32.gmra.mrb[0].mxu0 %v794
    %v943 = vpop.f32.mrb[0].mxu0
    %v944 = vadd.f32 0.0, %v943
    %v945 = vpop.f32.mrb[0].mxu0
    %v946 = vadd.f32 0.0, %v945
    %947 = vmatprep.mubr.f32.mxu0 0.0
    %948 = vmatmul.mubr.f32.gmra.mrb[0].mxu0 %v797
    %v949 = vpop.f32.mrb[0].mxu0
    %v950 = vadd.f32 0.0, %v949
    %v951 = vpop.f32.mrb[0].mxu0
    %v952 = vadd.f32 0.0, %v951
    %953 = vmatprep.mubr.f32.mxu0 0.0
    %954 = vmatmul.mubr.f32.gmra.mrb[0].mxu0 %v800
    %v955 = vpop.f32.mrb[0].mxu0
    %v956 = vadd.f32 0.0, %v955
    %v957 = vpop.f32.mrb[0].mxu0
    %v958 = vadd.f32 0.0, %v957
    %959 = vmatprep.mubr.f32.mxu0 0.0
    %960 = vmatmul.mubr.f32.gmra.mrb[0].mxu0 %v803
    %v961 = vpop.f32.mrb[0].mxu0
    %v962 = vadd.f32 0.0, %v961
    %v963 = vpop.f32.mrb[0].mxu0
    %v964 = vadd.f32 0.0, %v963
    %965 = vdwg.mxu0
    %v966 = vadd.f32 %v167, %v872
    %v967 = vadd.f32 %v169, %v874
    %v968 = vadd.f32 %v173, %v878
    %v969 = vadd.f32 %v175, %v880
    %v970 = vadd.f32 %v179, %v884
    %v971 = vadd.f32 %v181, %v886
    %v972 = vadd.f32 %v185, %v890
    %v973 = vadd.f32 %v187, %v892
    %v974 = vadd.f32 %v191, %v896
    %v975 = vadd.f32 %v193, %v898
    %v976 = vadd.f32 %v197, %v902
    %v977 = vadd.f32 %v199, %v904
    %v978 = vadd.f32 %v203, %v908
    %v979 = vadd.f32 %v205, %v910
    %v980 = vadd.f32 %v209, %v914
    %v981 = vadd.f32 %v211, %v916
    %v982 = vadd.f32 %v215, %v920
    %v983 = vadd.f32 %v217, %v922
    %v984 = vadd.f32 %v221, %v926
    %v985 = vadd.f32 %v223, %v928
    %v986 = vadd.f32 %v227, %v932
    %v987 = vadd.f32 %v229, %v934
    %v988 = vadd.f32 %v233, %v938
    %v989 = vadd.f32 %v235, %v940
    %v990 = vadd.f32 %v239, %v944
    %v991 = vadd.f32 %v241, %v946
    %v992 = vadd.f32 %v245, %v950
    %v993 = vadd.f32 %v247, %v952
    %v994 = vadd.f32 %v251, %v956
    %v995 = vadd.f32 %v253, %v958
    %v996 = vadd.f32 %v257, %v962
    %v997 = vadd.f32 %v259, %v964
    %s998 = scalar_lea.vmem %s4, 2
    %v999 = vld [vmem:[%s998] sm:$0x3]
    %v1001 = vlaneseq
    %v1002 = vshrl.u32 %v1001, 7
    %v1003 = vsub.s32 0, %v1002
    %v1004 = vrot.slane %v999, %v1003
    %v1005 = vlaneseq
    %v1006 = vshrl.u32 %v1005, 7
    %v1007 = vsub.s32 1, %v1006
    %v1008 = vrot.slane %v999, %v1007
    %v1011 = vadd.f32 %v966, %v1004
    %v1012 = vadd.f32 %v967, %v1008
    %v1013 = vadd.f32 %v968, %v1004
    %v1014 = vadd.f32 %v969, %v1008
    %v1015 = vadd.f32 %v970, %v1004
    %v1016 = vadd.f32 %v971, %v1008
    %v1017 = vadd.f32 %v972, %v1004
    %v1018 = vadd.f32 %v973, %v1008
    %v1019 = vadd.f32 %v974, %v1004
    %v1020 = vadd.f32 %v975, %v1008
    %v1021 = vadd.f32 %v976, %v1004
    %v1022 = vadd.f32 %v977, %v1008
    %v1023 = vadd.f32 %v978, %v1004
    %v1024 = vadd.f32 %v979, %v1008
    %v1025 = vadd.f32 %v980, %v1004
    %v1026 = vadd.f32 %v981, %v1008
    %v1027 = vadd.f32 %v982, %v1004
    %v1028 = vadd.f32 %v983, %v1008
    %v1029 = vadd.f32 %v984, %v1004
    %v1030 = vadd.f32 %v985, %v1008
    %v1031 = vadd.f32 %v986, %v1004
    %v1032 = vadd.f32 %v987, %v1008
    %v1033 = vadd.f32 %v988, %v1004
    %v1034 = vadd.f32 %v989, %v1008
    %v1035 = vadd.f32 %v990, %v1004
    %v1036 = vadd.f32 %v991, %v1008
    %v1037 = vadd.f32 %v992, %v1004
    %v1038 = vadd.f32 %v993, %v1008
    %v1039 = vadd.f32 %v994, %v1004
    %v1040 = vadd.f32 %v995, %v1008
    %v1041 = vadd.f32 %v996, %v1004
    %v1042 = vadd.f32 %v997, %v1008
    %vm1043 = vcmp.ge.f32.partialorder %v1011, 0.0
    %vm1044 = vcmp.ge.f32.partialorder %v1012, 0.0
    %vm1045 = vcmp.ge.f32.partialorder %v1013, 0.0
    %vm1046 = vcmp.ge.f32.partialorder %v1014, 0.0
    %vm1047 = vcmp.ge.f32.partialorder %v1015, 0.0
    %vm1048 = vcmp.ge.f32.partialorder %v1016, 0.0
    %vm1049 = vcmp.ge.f32.partialorder %v1017, 0.0
    %vm1050 = vcmp.ge.f32.partialorder %v1018, 0.0
    %vm1051 = vcmp.ge.f32.partialorder %v1019, 0.0
    %vm1052 = vcmp.ge.f32.partialorder %v1020, 0.0
    %vm1053 = vcmp.ge.f32.partialorder %v1021, 0.0
    %vm1054 = vcmp.ge.f32.partialorder %v1022, 0.0
    %vm1055 = vcmp.ge.f32.partialorder %v1023, 0.0
    %vm1056 = vcmp.ge.f32.partialorder %v1024, 0.0
    %vm1057 = vcmp.ge.f32.partialorder %v1025, 0.0
    %vm1058 = vcmp.ge.f32.partialorder %v1026, 0.0
    %vm1059 = vcmp.ge.f32.partialorder %v1027, 0.0
    %vm1060 = vcmp.ge.f32.partialorder %v1028, 0.0
    %vm1061 = vcmp.ge.f32.partialorder %v1029, 0.0
    %vm1062 = vcmp.ge.f32.partialorder %v1030, 0.0
    %vm1063 = vcmp.ge.f32.partialorder %v1031, 0.0
    %vm1064 = vcmp.ge.f32.partialorder %v1032, 0.0
    %vm1065 = vcmp.ge.f32.partialorder %v1033, 0.0
    %vm1066 = vcmp.ge.f32.partialorder %v1034, 0.0
    %vm1067 = vcmp.ge.f32.partialorder %v1035, 0.0
    %vm1068 = vcmp.ge.f32.partialorder %v1036, 0.0
    %vm1069 = vcmp.ge.f32.partialorder %v1037, 0.0
    %vm1070 = vcmp.ge.f32.partialorder %v1038, 0.0
    %vm1071 = vcmp.ge.f32.partialorder %v1039, 0.0
    %vm1072 = vcmp.ge.f32.partialorder %v1040, 0.0
    %vm1073 = vcmp.ge.f32.partialorder %v1041, 0.0
    %vm1074 = vcmp.ge.f32.partialorder %v1042, 0.0
    %v1075 = vmul.f32 %v1011, 0.01
    %v1076 = vmul.f32 %v1012, 0.01
    %v1077 = vmul.f32 %v1013, 0.01
    %v1078 = vmul.f32 %v1014, 0.01
    %v1079 = vmul.f32 %v1015, 0.01
    %v1080 = vmul.f32 %v1016, 0.01
    %v1081 = vmul.f32 %v1017, 0.01
    %v1082 = vmul.f32 %v1018, 0.01
    %v1083 = vmul.f32 %v1019, 0.01
    %v1084 = vmul.f32 %v1020, 0.01
    %v1085 = vmul.f32 %v1021, 0.01
    %v1086 = vmul.f32 %v1022, 0.01
    %v1087 = vmul.f32 %v1023, 0.01
    %v1088 = vmul.f32 %v1024, 0.01
    %v1089 = vmul.f32 %v1025, 0.01
    %v1090 = vmul.f32 %v1026, 0.01
    %v1091 = vmul.f32 %v1027, 0.01
    %v1092 = vmul.f32 %v1028, 0.01
    %v1093 = vmul.f32 %v1029, 0.01
    %v1094 = vmul.f32 %v1030, 0.01
    %v1095 = vmul.f32 %v1031, 0.01
    %v1096 = vmul.f32 %v1032, 0.01
    %v1097 = vmul.f32 %v1033, 0.01
    %v1098 = vmul.f32 %v1034, 0.01
    %v1099 = vmul.f32 %v1035, 0.01
    %v1100 = vmul.f32 %v1036, 0.01
    %v1101 = vmul.f32 %v1037, 0.01
    %v1102 = vmul.f32 %v1038, 0.01
    %v1103 = vmul.f32 %v1039, 0.01
    %v1104 = vmul.f32 %v1040, 0.01
    %v1105 = vmul.f32 %v1041, 0.01
    %v1106 = vmul.f32 %v1042, 0.01
    %v1107 = vsel %vm1043, %v1011, %v1075
    %v1108 = vsel %vm1044, %v1012, %v1076
    %v1109 = vsel %vm1045, %v1013, %v1077
    %v1110 = vsel %vm1046, %v1014, %v1078
    %v1111 = vsel %vm1047, %v1015, %v1079
    %v1112 = vsel %vm1048, %v1016, %v1080
    %v1113 = vsel %vm1049, %v1017, %v1081
    %v1114 = vsel %vm1050, %v1018, %v1082
    %v1115 = vsel %vm1051, %v1019, %v1083
    %v1116 = vsel %vm1052, %v1020, %v1084
    %v1117 = vsel %vm1053, %v1021, %v1085
    %v1118 = vsel %vm1054, %v1022, %v1086
    %v1119 = vsel %vm1055, %v1023, %v1087
    %v1120 = vsel %vm1056, %v1024, %v1088
    %v1121 = vsel %vm1057, %v1025, %v1089
    %v1122 = vsel %vm1058, %v1026, %v1090
    %v1123 = vsel %vm1059, %v1027, %v1091
    %v1124 = vsel %vm1060, %v1028, %v1092
    %v1125 = vsel %vm1061, %v1029, %v1093
    %v1126 = vsel %vm1062, %v1030, %v1094
    %v1127 = vsel %vm1063, %v1031, %v1095
    %v1128 = vsel %vm1064, %v1032, %v1096
    %v1129 = vsel %vm1065, %v1033, %v1097
    %v1130 = vsel %vm1066, %v1034, %v1098
    %v1131 = vsel %vm1067, %v1035, %v1099
    %v1132 = vsel %vm1068, %v1036, %v1100
    %v1133 = vsel %vm1069, %v1037, %v1101
    %v1134 = vsel %vm1070, %v1038, %v1102
    %v1135 = vsel %vm1071, %v1039, %v1103
    %v1136 = vsel %vm1072, %v1040, %v1104
    %v1137 = vsel %vm1073, %v1041, %v1105
    %v1138 = vsel %vm1074, %v1042, %v1106
    %1139 = vmatprep.subr.mxu0 %v1108
    %1140 = vmatpush1.xpose.msra.mxu0 %v1107
    %1141 = vmatprep.subr.mxu0 %v1110
    %1142 = vmatpush1.xpose.msra.mxu0 %v1109
    %1143 = vmatprep.subr.mxu0 %v1112
    %1144 = vmatpush1.xpose.msra.mxu0 %v1111
    %1145 = vmatprep.subr.mxu0 %v1114
    %1146 = vmatpush1.xpose.msra.mxu0 %v1113
    %1147 = vmatprep.subr.mxu0 %v1116
    %1148 = vmatpush1.xpose.msra.mxu0 %v1115
    %1149 = vmatprep.subr.mxu0 %v1118
    %1150 = vmatpush1.xpose.msra.mxu0 %v1117
    %1151 = vmatprep.subr.mxu0 %v1120
    %1152 = vmatpush1.xpose.msra.mxu0 %v1119
    %1153 = vmatprep.subr.mxu0 %v1122
    %1154 = vmatpush1.xpose.msra.mxu0 %v1121
    %1155 = vmatprep.subr.mxu0 %v1124
    %1156 = vmatpush1.xpose.msra.mxu0 %v1123
    %1157 = vmatprep.subr.mxu0 %v1126
    %1158 = vmatpush1.xpose.msra.mxu0 %v1125
    %1159 = vmatprep.subr.mxu0 %v1128
    %1160 = vmatpush1.xpose.msra.mxu0 %v1127
    %1161 = vmatprep.subr.mxu0 %v1130
    %1162 = vmatpush1.xpose.msra.mxu0 %v1129
    %1163 = vmatprep.subr.mxu0 %v1132
    %1164 = vmatpush1.xpose.msra.mxu0 %v1131
    %1165 = vmatprep.subr.mxu0 %v1134
    %1166 = vmatpush1.xpose.msra.mxu0 %v1133
    %1167 = vmatprep.subr.mxu0 %v1136
    %1168 = vmatpush1.xpose.msra.mxu0 %v1135
    %1169 = vmatprep.subr.mxu0 %v1138
    %1170 = vmatpush1.xpose.msra.mxu0 %v1137
    %1171 = vmatprep.subr.mxu0 0.0
    %1172 = vmatpush1.xpose.msra.mxu0 0.0
    %1173 = vmatprep.subr.mxu0 0.0
    %1174 = vmatpush1.xpose.msra.mxu0 0.0
    %1175 = vmatprep.subr.mxu0 0.0
    %1176 = vmatpush1.xpose.msra.mxu0 0.0
    %1177 = vmatprep.subr.mxu0 0.0
    %1178 = vmatpush1.xpose.msra.mxu0 0.0
    %1179 = vmatprep.subr.mxu0 0.0
    %1180 = vmatpush1.xpose.msra.mxu0 0.0
    %1181 = vmatprep.subr.mxu0 0.0
    %1182 = vmatpush1.xpose.msra.mxu0 0.0
    %1183 = vmatprep.subr.mxu0 0.0
    %1184 = vmatpush1.xpose.msra.mxu0 0.0
    %1185 = vmatprep.subr.mxu0 0.0
    %1186 = vmatpush1.xpose.msra.mxu0 0.0
    %1187 = vmatprep.subr.mxu0 0.0
    %1188 = vmatpush1.xpose.msra.mxu0 0.0
    %1189 = vmatprep.subr.mxu0 0.0
    %1190 = vmatpush1.xpose.msra.mxu0 0.0
    %1191 = vmatprep.subr.mxu0 0.0
    %1192 = vmatpush1.xpose.msra.mxu0 0.0
    %1193 = vmatprep.subr.mxu0 0.0
    %1194 = vmatpush1.xpose.msra.mxu0 0.0
    %1195 = vmatprep.subr.mxu0 0.0
    %1196 = vmatpush1.xpose.msra.mxu0 0.0
    %1197 = vmatprep.subr.mxu0 0.0
    %1198 = vmatpush1.xpose.msra.mxu0 0.0
    %1199 = vmatprep.subr.mxu0 0.0
    %1200 = vmatpush1.xpose.msra.mxu0 0.0
    %1201 = vmatprep.subr.mxu0 0.0
    %1202 = vmatpush1.xpose.msra.mxu0 0.0
    %1203 = vmatprep.mubr.f32.mxu0 %v264
    %1204 = vmatmul.mubr.f32.gmra.mrb[0].mxu0 %v263
    %v1205 = vpop.f32.mrb[0].mxu0
    %v1206 = vadd.f32 %v667, %v1205
    %v1207 = vpop.f32.mrb[0].mxu0
    %1208 = vdwg.mxu0
    %s1209 = scalar_lea.vmem [#allocation2], 8
    %1210 = vst [vmem:[%s1209] sm:$0xff] %v1206
    %s1211 = scalar_lea.vmem %s1, 256
    %v1212 = vld [vmem:[%s1211] sm:$0xff]
    %v1213 = vld [vmem:[%s1211 + $0x8] sm:$0xff]
    %v1214 = vld [vmem:[%s1211 + $0x10] sm:$0xff]
    %v1215 = vld [vmem:[%s1211 + $0x18] sm:$0xff]
    %v1216 = vld [vmem:[%s1211 + $0x20] sm:$0xff]
    %v1217 = vld [vmem:[%s1211 + $0x28] sm:$0xff]
    %v1218 = vld [vmem:[%s1211 + $0x30] sm:$0xff]
    %v1219 = vld [vmem:[%s1211 + $0x38] sm:$0xff]
    %v1220 = vld [vmem:[%s1211 + $0x40] sm:$0xff]
    %v1221 = vld [vmem:[%s1211 + $0x48] sm:$0xff]
    %v1222 = vld [vmem:[%s1211 + $0x50] sm:$0xff]
    %v1223 = vld [vmem:[%s1211 + $0x58] sm:$0xff]
    %v1224 = vld [vmem:[%s1211 + $0x60] sm:$0xff]
    %v1225 = vld [vmem:[%s1211 + $0x68] sm:$0xff]
    %v1226 = vld [vmem:[%s1211 + $0x70] sm:$0xff]
    %v1227 = vld [vmem:[%s1211 + $0x78] sm:$0xff]
    %v1229 = vsel %vm282, %v1212, 0
    %v1232 = vsel %vm282, %v1213, 0
    %v1235 = vsel %vm282, %v1214, 0
    %v1238 = vsel %vm282, %v1215, 0
    %v1241 = vsel %vm282, %v1216, 0
    %v1244 = vsel %vm282, %v1217, 0
    %v1247 = vsel %vm282, %v1218, 0
    %v1250 = vsel %vm282, %v1219, 0
    %v1253 = vsel %vm282, %v1220, 0
    %v1256 = vsel %vm282, %v1221, 0
    %v1259 = vsel %vm282, %v1222, 0
    %v1262 = vsel %vm282, %v1223, 0
    %v1265 = vsel %vm282, %v1224, 0
    %v1268 = vsel %vm282, %v1225, 0
    %v1271 = vsel %vm282, %v1226, 0
    %v1274 = vsel %vm282, %v1227, 0
    %1276 = vmatprep.subr.mxu0 %v262
    %1277 = vmatpush1.msra.mxu0 %v261
    %1278 = vmatprep.subr.mxu0 0.0
    %1279 = vmatpush1.msra.mxu0 0.0
    %1280 = vmatprep.subr.mxu0 0.0
    %1281 = vmatpush1.msra.mxu0 0.0
    %1282 = vmatprep.subr.mxu0 0.0
    %1283 = vmatpush1.msra.mxu0 0.0
    %1284 = vmatprep.subr.mxu0 0.0
    %1285 = vmatpush1.msra.mxu0 0.0
    %1286 = vmatprep.subr.mxu0 0.0
    %1287 = vmatpush1.msra.mxu0 0.0
    %1288 = vmatprep.subr.mxu0 0.0
    %1289 = vmatpush1.msra.mxu0 0.0
    %1290 = vmatprep.subr.mxu0 0.0
    %1291 = vmatpush1.msra.mxu0 0.0
    %1292 = vmatprep.subr.mxu0 0.0
    %1293 = vmatpush1.msra.mxu0 0.0
    %1294 = vmatprep.subr.mxu0 0.0
    %1295 = vmatpush1.msra.mxu0 0.0
    %1296 = vmatprep.subr.mxu0 0.0
    %1297 = vmatpush1.msra.mxu0 0.0
    %1298 = vmatprep.subr.mxu0 0.0
    %1299 = vmatpush1.msra.mxu0 0.0
    %1300 = vmatprep.subr.mxu0 0.0
    %1301 = vmatpush1.msra.mxu0 0.0
    %1302 = vmatprep.subr.mxu0 0.0
    %1303 = vmatpush1.msra.mxu0 0.0
    %1304 = vmatprep.subr.mxu0 0.0
    %1305 = vmatpush1.msra.mxu0 0.0
    %1306 = vmatprep.subr.mxu0 0.0
    %1307 = vmatpush1.msra.mxu0 0.0
    %1308 = vmatprep.subr.mxu0 0.0
    %1309 = vmatpush1.msra.mxu0 0.0
    %1310 = vmatprep.subr.mxu0 0.0
    %1311 = vmatpush1.msra.mxu0 0.0
    %1312 = vmatprep.subr.mxu0 0.0
    %1313 = vmatpush1.msra.mxu0 0.0
    %1314 = vmatprep.subr.mxu0 0.0
    %1315 = vmatpush1.msra.mxu0 0.0
    %1316 = vmatprep.subr.mxu0 0.0
    %1317 = vmatpush1.msra.mxu0 0.0
    %1318 = vmatprep.subr.mxu0 0.0
    %1319 = vmatpush1.msra.mxu0 0.0
    %1320 = vmatprep.subr.mxu0 0.0
    %1321 = vmatpush1.msra.mxu0 0.0
    %1322 = vmatprep.subr.mxu0 0.0
    %1323 = vmatpush1.msra.mxu0 0.0
    %1324 = vmatprep.subr.mxu0 0.0
    %1325 = vmatpush1.msra.mxu0 0.0
    %1326 = vmatprep.subr.mxu0 0.0
    %1327 = vmatpush1.msra.mxu0 0.0
    %1328 = vmatprep.subr.mxu0 0.0
    %1329 = vmatpush1.msra.mxu0 0.0
    %1330 = vmatprep.subr.mxu0 0.0
    %1331 = vmatpush1.msra.mxu0 0.0
    %1332 = vmatprep.subr.mxu0 0.0
    %1333 = vmatpush1.msra.mxu0 0.0
    %1334 = vmatprep.subr.mxu0 0.0
    %1335 = vmatpush1.msra.mxu0 0.0
    %1336 = vmatprep.subr.mxu0 0.0
    %1337 = vmatpush1.msra.mxu0 0.0
    %1338 = vmatprep.subr.mxu0 0.0
    %1339 = vmatpush1.msra.mxu0 0.0
    %1340 = vmatprep.mubr.f32.mxu0 0.0
    %1341 = vmatmul.mubr.f32.gmra.mrb[0].mxu0 %v1229
    %v1342 = vpop.f32.mrb[0].mxu0
    %v1343 = vadd.f32 0.0, %v1342
    %v1344 = vpop.f32.mrb[0].mxu0
    %v1345 = vadd.f32 0.0, %v1344
    %1346 = vmatprep.mubr.f32.mxu0 0.0
    %1347 = vmatmul.mubr.f32.gmra.mrb[0].mxu0 %v1232
    %v1348 = vpop.f32.mrb[0].mxu0
    %v1349 = vadd.f32 0.0, %v1348
    %v1350 = vpop.f32.mrb[0].mxu0
    %v1351 = vadd.f32 0.0, %v1350
    %1352 = vmatprep.mubr.f32.mxu0 0.0
    %1353 = vmatmul.mubr.f32.gmra.mrb[0].mxu0 %v1235
    %v1354 = vpop.f32.mrb[0].mxu0
    %v1355 = vadd.f32 0.0, %v1354
    %v1356 = vpop.f32.mrb[0].mxu0
    %v1357 = vadd.f32 0.0, %v1356
    %1358 = vmatprep.mubr.f32.mxu0 0.0
    %1359 = vmatmul.mubr.f32.gmra.mrb[0].mxu0 %v1238
    %v1360 = vpop.f32.mrb[0].mxu0
    %v1361 = vadd.f32 0.0, %v1360
    %v1362 = vpop.f32.mrb[0].mxu0
    %v1363 = vadd.f32 0.0, %v1362
    %1364 = vmatprep.mubr.f32.mxu0 0.0
    %1365 = vmatmul.mubr.f32.gmra.mrb[0].mxu0 %v1241
    %v1366 = vpop.f32.mrb[0].mxu0
    %v1367 = vadd.f32 0.0, %v1366
    %v1368 = vpop.f32.mrb[0].mxu0
    %v1369 = vadd.f32 0.0, %v1368
    %1370 = vmatprep.mubr.f32.mxu0 0.0
    %1371 = vmatmul.mubr.f32.gmra.mrb[0].mxu0 %v1244
    %v1372 = vpop.f32.mrb[0].mxu0
    %v1373 = vadd.f32 0.0, %v1372
    %v1374 = vpop.f32.mrb[0].mxu0
    %v1375 = vadd.f32 0.0, %v1374
    %1376 = vmatprep.mubr.f32.mxu0 0.0
    %1377 = vmatmul.mubr.f32.gmra.mrb[0].mxu0 %v1247
    %v1378 = vpop.f32.mrb[0].mxu0
    %v1379 = vadd.f32 0.0, %v1378
    %v1380 = vpop.f32.mrb[0].mxu0
    %v1381 = vadd.f32 0.0, %v1380
    %1382 = vmatprep.mubr.f32.mxu0 0.0
    %1383 = vmatmul.mubr.f32.gmra.mrb[0].mxu0 %v1250
    %v1384 = vpop.f32.mrb[0].mxu0
    %v1385 = vadd.f32 0.0, %v1384
    %v1386 = vpop.f32.mrb[0].mxu0
    %v1387 = vadd.f32 0.0, %v1386
    %1388 = vmatprep.mubr.f32.mxu0 0.0
    %1389 = vmatmul.mubr.f32.gmra.mrb[0].mxu0 %v1253
    %v1390 = vpop.f32.mrb[0].mxu0
    %v1391 = vadd.f32 0.0, %v1390
    %v1392 = vpop.f32.mrb[0].mxu0
    %v1393 = vadd.f32 0.0, %v1392
    %1394 = vmatprep.mubr.f32.mxu0 0.0
    %1395 = vmatmul.mubr.f32.gmra.mrb[0].mxu0 %v1256
    %v1396 = vpop.f32.mrb[0].mxu0
    %v1397 = vadd.f32 0.0, %v1396
    %v1398 = vpop.f32.mrb[0].mxu0
    %v1399 = vadd.f32 0.0, %v1398
    %1400 = vmatprep.mubr.f32.mxu0 0.0
    %1401 = vmatmul.mubr.f32.gmra.mrb[0].mxu0 %v1259
    %v1402 = vpop.f32.mrb[0].mxu0
    %v1403 = vadd.f32 0.0, %v1402
    %v1404 = vpop.f32.mrb[0].mxu0
    %v1405 = vadd.f32 0.0, %v1404
    %1406 = vmatprep.mubr.f32.mxu0 0.0
    %1407 = vmatmul.mubr.f32.gmra.mrb[0].mxu0 %v1262
    %v1408 = vpop.f32.mrb[0].mxu0
    %v1409 = vadd.f32 0.0, %v1408
    %v1410 = vpop.f32.mrb[0].mxu0
    %v1411 = vadd.f32 0.0, %v1410
    %1412 = vmatprep.mubr.f32.mxu0 0.0
    %1413 = vmatmul.mubr.f32.gmra.mrb[0].mxu0 %v1265
    %v1414 = vpop.f32.mrb[0].mxu0
    %v1415 = vadd.f32 0.0, %v1414
    %v1416 = vpop.f32.mrb[0].mxu0
    %v1417 = vadd.f32 0.0, %v1416
    %1418 = vmatprep.mubr.f32.mxu0 0.0
    %1419 = vmatmul.mubr.f32.gmra.mrb[0].mxu0 %v1268
    %v1420 = vpop.f32.mrb[0].mxu0
    %v1421 = vadd.f32 0.0, %v1420
    %v1422 = vpop.f32.mrb[0].mxu0
    %v1423 = vadd.f32 0.0, %v1422
    %1424 = vmatprep.mubr.f32.mxu0 0.0
    %1425 = vmatmul.mubr.f32.gmra.mrb[0].mxu0 %v1271
    %v1426 = vpop.f32.mrb[0].mxu0
    %v1427 = vadd.f32 0.0, %v1426
    %v1428 = vpop.f32.mrb[0].mxu0
    %v1429 = vadd.f32 0.0, %v1428
    %1430 = vmatprep.mubr.f32.mxu0 0.0
    %1431 = vmatmul.mubr.f32.gmra.mrb[0].mxu0 %v1274
    %v1432 = vpop.f32.mrb[0].mxu0
    %v1433 = vadd.f32 0.0, %v1432
    %v1434 = vpop.f32.mrb[0].mxu0
    %v1435 = vadd.f32 0.0, %v1434
    %1436 = vdwg.mxu0
    %v1437 = vadd.f32 %v167, %v1343
    %v1438 = vadd.f32 %v169, %v1345
    %v1439 = vadd.f32 %v173, %v1349
    %v1440 = vadd.f32 %v175, %v1351
    %v1441 = vadd.f32 %v179, %v1355
    %v1442 = vadd.f32 %v181, %v1357
    %v1443 = vadd.f32 %v185, %v1361
    %v1444 = vadd.f32 %v187, %v1363
    %v1445 = vadd.f32 %v191, %v1367
    %v1446 = vadd.f32 %v193, %v1369
    %v1447 = vadd.f32 %v197, %v1373
    %v1448 = vadd.f32 %v199, %v1375
    %v1449 = vadd.f32 %v203, %v1379
    %v1450 = vadd.f32 %v205, %v1381
    %v1451 = vadd.f32 %v209, %v1385
    %v1452 = vadd.f32 %v211, %v1387
    %v1453 = vadd.f32 %v215, %v1391
    %v1454 = vadd.f32 %v217, %v1393
    %v1455 = vadd.f32 %v221, %v1397
    %v1456 = vadd.f32 %v223, %v1399
    %v1457 = vadd.f32 %v227, %v1403
    %v1458 = vadd.f32 %v229, %v1405
    %v1459 = vadd.f32 %v233, %v1409
    %v1460 = vadd.f32 %v235, %v1411
    %v1461 = vadd.f32 %v239, %v1415
    %v1462 = vadd.f32 %v241, %v1417
    %v1463 = vadd.f32 %v245, %v1421
    %v1464 = vadd.f32 %v247, %v1423
    %v1465 = vadd.f32 %v251, %v1427
    %v1466 = vadd.f32 %v253, %v1429
    %v1467 = vadd.f32 %v257, %v1433
    %v1468 = vadd.f32 %v259, %v1435
    %s1469 = scalar_lea.vmem %s4, 4
    %v1470 = vld [vmem:[%s1469] sm:$0x3]
    %v1472 = vlaneseq
    %v1473 = vshrl.u32 %v1472, 7
    %v1474 = vsub.s32 0, %v1473
    %v1475 = vrot.slane %v1470, %v1474
    %v1476 = vlaneseq
    %v1477 = vshrl.u32 %v1476, 7
    %v1478 = vsub.s32 1, %v1477
    %v1479 = vrot.slane %v1470, %v1478
    %v1482 = vadd.f32 %v1437, %v1475
    %v1483 = vadd.f32 %v1438, %v1479
    %v1484 = vadd.f32 %v1439, %v1475
    %v1485 = vadd.f32 %v1440, %v1479
    %v1486 = vadd.f32 %v1441, %v1475
    %v1487 = vadd.f32 %v1442, %v1479
    %v1488 = vadd.f32 %v1443, %v1475
    %v1489 = vadd.f32 %v1444, %v1479
    %v1490 = vadd.f32 %v1445, %v1475
    %v1491 = vadd.f32 %v1446, %v1479
    %v1492 = vadd.f32 %v1447, %v1475
    %v1493 = vadd.f32 %v1448, %v1479
    %v1494 = vadd.f32 %v1449, %v1475
    %v1495 = vadd.f32 %v1450, %v1479
    %v1496 = vadd.f32 %v1451, %v1475
    %v1497 = vadd.f32 %v1452, %v1479
    %v1498 = vadd.f32 %v1453, %v1475
    %v1499 = vadd.f32 %v1454, %v1479
    %v1500 = vadd.f32 %v1455, %v1475
    %v1501 = vadd.f32 %v1456, %v1479
    %v1502 = vadd.f32 %v1457, %v1475
    %v1503 = vadd.f32 %v1458, %v1479
    %v1504 = vadd.f32 %v1459, %v1475
    %v1505 = vadd.f32 %v1460, %v1479
    %v1506 = vadd.f32 %v1461, %v1475
    %v1507 = vadd.f32 %v1462, %v1479
    %v1508 = vadd.f32 %v1463, %v1475
    %v1509 = vadd.f32 %v1464, %v1479
    %v1510 = vadd.f32 %v1465, %v1475
    %v1511 = vadd.f32 %v1466, %v1479
    %v1512 = vadd.f32 %v1467, %v1475
    %v1513 = vadd.f32 %v1468, %v1479
    %vm1514 = vcmp.ge.f32.partialorder %v1482, 0.0
    %vm1515 = vcmp.ge.f32.partialorder %v1483, 0.0
    %vm1516 = vcmp.ge.f32.partialorder %v1484, 0.0
    %vm1517 = vcmp.ge.f32.partialorder %v1485, 0.0
    %vm1518 = vcmp.ge.f32.partialorder %v1486, 0.0
    %vm1519 = vcmp.ge.f32.partialorder %v1487, 0.0
    %vm1520 = vcmp.ge.f32.partialorder %v1488, 0.0
    %vm1521 = vcmp.ge.f32.partialorder %v1489, 0.0
    %vm1522 = vcmp.ge.f32.partialorder %v1490, 0.0
    %vm1523 = vcmp.ge.f32.partialorder %v1491, 0.0
    %vm1524 = vcmp.ge.f32.partialorder %v1492, 0.0
    %vm1525 = vcmp.ge.f32.partialorder %v1493, 0.0
    %vm1526 = vcmp.ge.f32.partialorder %v1494, 0.0
    %vm1527 = vcmp.ge.f32.partialorder %v1495, 0.0
    %vm1528 = vcmp.ge.f32.partialorder %v1496, 0.0
    %vm1529 = vcmp.ge.f32.partialorder %v1497, 0.0
    %vm1530 = vcmp.ge.f32.partialorder %v1498, 0.0
    %vm1531 = vcmp.ge.f32.partialorder %v1499, 0.0
    %vm1532 = vcmp.ge.f32.partialorder %v1500, 0.0
    %vm1533 = vcmp.ge.f32.partialorder %v1501, 0.0
    %vm1534 = vcmp.ge.f32.partialorder %v1502, 0.0
    %vm1535 = vcmp.ge.f32.partialorder %v1503, 0.0
    %vm1536 = vcmp.ge.f32.partialorder %v1504, 0.0
    %vm1537 = vcmp.ge.f32.partialorder %v1505, 0.0
    %vm1538 = vcmp.ge.f32.partialorder %v1506, 0.0
    %vm1539 = vcmp.ge.f32.partialorder %v1507, 0.0
    %vm1540 = vcmp.ge.f32.partialorder %v1508, 0.0
    %vm1541 = vcmp.ge.f32.partialorder %v1509, 0.0
    %vm1542 = vcmp.ge.f32.partialorder %v1510, 0.0
    %vm1543 = vcmp.ge.f32.partialorder %v1511, 0.0
    %vm1544 = vcmp.ge.f32.partialorder %v1512, 0.0
    %vm1545 = vcmp.ge.f32.partialorder %v1513, 0.0
    %v1546 = vmul.f32 %v1482, 0.01
    %v1547 = vmul.f32 %v1483, 0.01
    %v1548 = vmul.f32 %v1484, 0.01
    %v1549 = vmul.f32 %v1485, 0.01
    %v1550 = vmul.f32 %v1486, 0.01
    %v1551 = vmul.f32 %v1487, 0.01
    %v1552 = vmul.f32 %v1488, 0.01
    %v1553 = vmul.f32 %v1489, 0.01
    %v1554 = vmul.f32 %v1490, 0.01
    %v1555 = vmul.f32 %v1491, 0.01
    %v1556 = vmul.f32 %v1492, 0.01
    %v1557 = vmul.f32 %v1493, 0.01
    %v1558 = vmul.f32 %v1494, 0.01
    %v1559 = vmul.f32 %v1495, 0.01
    %v1560 = vmul.f32 %v1496, 0.01
    %v1561 = vmul.f32 %v1497, 0.01
    %v1562 = vmul.f32 %v1498, 0.01
    %v1563 = vmul.f32 %v1499, 0.01
    %v1564 = vmul.f32 %v1500, 0.01
    %v1565 = vmul.f32 %v1501, 0.01
    %v1566 = vmul.f32 %v1502, 0.01
    %v1567 = vmul.f32 %v1503, 0.01
    %v1568 = vmul.f32 %v1504, 0.01
    %v1569 = vmul.f32 %v1505, 0.01
    %v1570 = vmul.f32 %v1506, 0.01
    %v1571 = vmul.f32 %v1507, 0.01
    %v1572 = vmul.f32 %v1508, 0.01
    %v1573 = vmul.f32 %v1509, 0.01
    %v1574 = vmul.f32 %v1510, 0.01
    %v1575 = vmul.f32 %v1511, 0.01
    %v1576 = vmul.f32 %v1512, 0.01
    %v1577 = vmul.f32 %v1513, 0.01
    %v1578 = vsel %vm1514, %v1482, %v1546
    %v1579 = vsel %vm1515, %v1483, %v1547
    %v1580 = vsel %vm1516, %v1484, %v1548
    %v1581 = vsel %vm1517, %v1485, %v1549
    %v1582 = vsel %vm1518, %v1486, %v1550
    %v1583 = vsel %vm1519, %v1487, %v1551
    %v1584 = vsel %vm1520, %v1488, %v1552
    %v1585 = vsel %vm1521, %v1489, %v1553
    %v1586 = vsel %vm1522, %v1490, %v1554
    %v1587 = vsel %vm1523, %v1491, %v1555
    %v1588 = vsel %vm1524, %v1492, %v1556
    %v1589 = vsel %vm1525, %v1493, %v1557
    %v1590 = vsel %vm1526, %v1494, %v1558
    %v1591 = vsel %vm1527, %v1495, %v1559
    %v1592 = vsel %vm1528, %v1496, %v1560
    %v1593 = vsel %vm1529, %v1497, %v1561
    %v1594 = vsel %vm1530, %v1498, %v1562
    %v1595 = vsel %vm1531, %v1499, %v1563
    %v1596 = vsel %vm1532, %v1500, %v1564
    %v1597 = vsel %vm1533, %v1501, %v1565
    %v1598 = vsel %vm1534, %v1502, %v1566
    %v1599 = vsel %vm1535, %v1503, %v1567
    %v1600 = vsel %vm1536, %v1504, %v1568
    %v1601 = vsel %vm1537, %v1505, %v1569
    %v1602 = vsel %vm1538, %v1506, %v1570
    %v1603 = vsel %vm1539, %v1507, %v1571
    %v1604 = vsel %vm1540, %v1508, %v1572
    %v1605 = vsel %vm1541, %v1509, %v1573
    %v1606 = vsel %vm1542, %v1510, %v1574
    %v1607 = vsel %vm1543, %v1511, %v1575
    %v1608 = vsel %vm1544, %v1512, %v1576
    %v1609 = vsel %vm1545, %v1513, %v1577
    %1610 = vmatprep.subr.mxu0 %v1579
    %1611 = vmatpush1.xpose.msra.mxu0 %v1578
    %1612 = vmatprep.subr.mxu0 %v1581
    %1613 = vmatpush1.xpose.msra.mxu0 %v1580
    %1614 = vmatprep.subr.mxu0 %v1583
    %1615 = vmatpush1.xpose.msra.mxu0 %v1582
    %1616 = vmatprep.subr.mxu0 %v1585
    %1617 = vmatpush1.xpose.msra.mxu0 %v1584
    %1618 = vmatprep.subr.mxu0 %v1587
    %1619 = vmatpush1.xpose.msra.mxu0 %v1586
    %1620 = vmatprep.subr.mxu0 %v1589
    %1621 = vmatpush1.xpose.msra.mxu0 %v1588
    %1622 = vmatprep.subr.mxu0 %v1591
    %1623 = vmatpush1.xpose.msra.mxu0 %v1590
    %1624 = vmatprep.subr.mxu0 %v1593
    %1625 = vmatpush1.xpose.msra.mxu0 %v1592
    %1626 = vmatprep.subr.mxu0 %v1595
    %1627 = vmatpush1.xpose.msra.mxu0 %v1594
    %1628 = vmatprep.subr.mxu0 %v1597
    %1629 = vmatpush1.xpose.msra.mxu0 %v1596
    %1630 = vmatprep.subr.mxu0 %v1599
    %1631 = vmatpush1.xpose.msra.mxu0 %v1598
    %1632 = vmatprep.subr.mxu0 %v1601
    %1633 = vmatpush1.xpose.msra.mxu0 %v1600
    %1634 = vmatprep.subr.mxu0 %v1603
    %1635 = vmatpush1.xpose.msra.mxu0 %v1602
    %1636 = vmatprep.subr.mxu0 %v1605
    %1637 = vmatpush1.xpose.msra.mxu0 %v1604
    %1638 = vmatprep.subr.mxu0 %v1607
    %1639 = vmatpush1.xpose.msra.mxu0 %v1606
    %1640 = vmatprep.subr.mxu0 %v1609
    %1641 = vmatpush1.xpose.msra.mxu0 %v1608
    %1642 = vmatprep.subr.mxu0 0.0
    %1643 = vmatpush1.xpose.msra.mxu0 0.0
    %1644 = vmatprep.subr.mxu0 0.0
    %1645 = vmatpush1.xpose.msra.mxu0 0.0
    %1646 = vmatprep.subr.mxu0 0.0
    %1647 = vmatpush1.xpose.msra.mxu0 0.0
    %1648 = vmatprep.subr.mxu0 0.0
    %1649 = vmatpush1.xpose.msra.mxu0 0.0
    %1650 = vmatprep.subr.mxu0 0.0
    %1651 = vmatpush1.xpose.msra.mxu0 0.0
    %1652 = vmatprep.subr.mxu0 0.0
    %1653 = vmatpush1.xpose.msra.mxu0 0.0
    %1654 = vmatprep.subr.mxu0 0.0
    %1655 = vmatpush1.xpose.msra.mxu0 0.0
    %1656 = vmatprep.subr.mxu0 0.0
    %1657 = vmatpush1.xpose.msra.mxu0 0.0
    %1658 = vmatprep.subr.mxu0 0.0
    %1659 = vmatpush1.xpose.msra.mxu0 0.0
    %1660 = vmatprep.subr.mxu0 0.0
    %1661 = vmatpush1.xpose.msra.mxu0 0.0
    %1662 = vmatprep.subr.mxu0 0.0
    %1663 = vmatpush1.xpose.msra.mxu0 0.0
    %1664 = vmatprep.subr.mxu0 0.0
    %1665 = vmatpush1.xpose.msra.mxu0 0.0
    %1666 = vmatprep.subr.mxu0 0.0
    %1667 = vmatpush1.xpose.msra.mxu0 0.0
    %1668 = vmatprep.subr.mxu0 0.0
    %1669 = vmatpush1.xpose.msra.mxu0 0.0
    %1670 = vmatprep.subr.mxu0 0.0
    %1671 = vmatpush1.xpose.msra.mxu0 0.0
    %1672 = vmatprep.subr.mxu0 0.0
    %1673 = vmatpush1.xpose.msra.mxu0 0.0
    %1674 = vmatprep.mubr.f32.mxu0 %v264
    %1675 = vmatmul.mubr.f32.gmra.mrb[0].mxu0 %v263
    %v1676 = vpop.f32.mrb[0].mxu0
    %v1677 = vadd.f32 %v667, %v1676
    %v1678 = vpop.f32.mrb[0].mxu0
    %1679 = vdwg.mxu0
    %s1680 = scalar_lea.vmem [#allocation2], 16
    %1681 = vst [vmem:[%s1680] sm:$0xff] %v1677
    %s1682 = scalar_lea.vmem %s1, 384
    %v1683 = vld [vmem:[%s1682] sm:$0xff]
    %v1684 = vld [vmem:[%s1682 + $0x8] sm:$0xff]
    %v1685 = vld [vmem:[%s1682 + $0x10] sm:$0xff]
    %v1686 = vld [vmem:[%s1682 + $0x18] sm:$0xff]
    %v1687 = vld [vmem:[%s1682 + $0x20] sm:$0xff]
    %v1688 = vld [vmem:[%s1682 + $0x28] sm:$0xff]
    %v1689 = vld [vmem:[%s1682 + $0x30] sm:$0xff]
    %v1690 = vld [vmem:[%s1682 + $0x38] sm:$0xff]
    %v1691 = vld [vmem:[%s1682 + $0x40] sm:$0xff]
    %v1692 = vld [vmem:[%s1682 + $0x48] sm:$0xff]
    %v1693 = vld [vmem:[%s1682 + $0x50] sm:$0xff]
    %v1694 = vld [vmem:[%s1682 + $0x58] sm:$0xff]
    %v1695 = vld [vmem:[%s1682 + $0x60] sm:$0xff]
    %v1696 = vld [vmem:[%s1682 + $0x68] sm:$0xff]
    %v1697 = vld [vmem:[%s1682 + $0x70] sm:$0xff]
    %v1698 = vld [vmem:[%s1682 + $0x78] sm:$0xff]
    %v1700 = vsel %vm282, %v1683, 0
    %v1703 = vsel %vm282, %v1684, 0
    %v1706 = vsel %vm282, %v1685, 0
    %v1709 = vsel %vm282, %v1686, 0
    %v1712 = vsel %vm282, %v1687, 0
    %v1715 = vsel %vm282, %v1688, 0
    %v1718 = vsel %vm282, %v1689, 0
    %v1721 = vsel %vm282, %v1690, 0
    %v1724 = vsel %vm282, %v1691, 0
    %v1727 = vsel %vm282, %v1692, 0
    %v1730 = vsel %vm282, %v1693, 0
    %v1733 = vsel %vm282, %v1694, 0
    %v1736 = vsel %vm282, %v1695, 0
    %v1739 = vsel %vm282, %v1696, 0
    %v1742 = vsel %vm282, %v1697, 0
    %v1745 = vsel %vm282, %v1698, 0
    %1747 = vmatprep.subr.mxu0 %v262
    %1748 = vmatpush1.msra.mxu0 %v261
    %1749 = vmatprep.subr.mxu0 0.0
    %1750 = vmatpush1.msra.mxu0 0.0
    %1751 = vmatprep.subr.mxu0 0.0
    %1752 = vmatpush1.msra.mxu0 0.0
    %1753 = vmatprep.subr.mxu0 0.0
    %1754 = vmatpush1.msra.mxu0 0.0
    %1755 = vmatprep.subr.mxu0 0.0
    %1756 = vmatpush1.msra.mxu0 0.0
    %1757 = vmatprep.subr.mxu0 0.0
    %1758 = vmatpush1.msra.mxu0 0.0
    %1759 = vmatprep.subr.mxu0 0.0
    %1760 = vmatpush1.msra.mxu0 0.0
    %1761 = vmatprep.subr.mxu0 0.0
    %1762 = vmatpush1.msra.mxu0 0.0
    %1763 = vmatprep.subr.mxu0 0.0
    %1764 = vmatpush1.msra.mxu0 0.0
    %1765 = vmatprep.subr.mxu0 0.0
    %1766 = vmatpush1.msra.mxu0 0.0
    %1767 = vmatprep.subr.mxu0 0.0
    %1768 = vmatpush1.msra.mxu0 0.0
    %1769 = vmatprep.subr.mxu0 0.0
    %1770 = vmatpush1.msra.mxu0 0.0
    %1771 = vmatprep.subr.mxu0 0.0
    %1772 = vmatpush1.msra.mxu0 0.0
    %1773 = vmatprep.subr.mxu0 0.0
    %1774 = vmatpush1.msra.mxu0 0.0
    %1775 = vmatprep.subr.mxu0 0.0
    %1776 = vmatpush1.msra.mxu0 0.0
    %1777 = vmatprep.subr.mxu0 0.0
    %1778 = vmatpush1.msra.mxu0 0.0
    %1779 = vmatprep.subr.mxu0 0.0
    %1780 = vmatpush1.msra.mxu0 0.0
    %1781 = vmatprep.subr.mxu0 0.0
    %1782 = vmatpush1.msra.mxu0 0.0
    %1783 = vmatprep.subr.mxu0 0.0
    %1784 = vmatpush1.msra.mxu0 0.0
    %1785 = vmatprep.subr.mxu0 0.0
    %1786 = vmatpush1.msra.mxu0 0.0
    %1787 = vmatprep.subr.mxu0 0.0
    %1788 = vmatpush1.msra.mxu0 0.0
    %1789 = vmatprep.subr.mxu0 0.0
    %1790 = vmatpush1.msra.mxu0 0.0
    %1791 = vmatprep.subr.mxu0 0.0
    %1792 = vmatpush1.msra.mxu0 0.0
    %1793 = vmatprep.subr.mxu0 0.0
    %1794 = vmatpush1.msra.mxu0 0.0
    %1795 = vmatprep.subr.mxu0 0.0
    %1796 = vmatpush1.msra.mxu0 0.0
    %1797 = vmatprep.subr.mxu0 0.0
    %1798 = vmatpush1.msra.mxu0 0.0
    %1799 = vmatprep.subr.mxu0 0.0
    %1800 = vmatpush1.msra.mxu0 0.0
    %1801 = vmatprep.subr.mxu0 0.0
    %1802 = vmatpush1.msra.mxu0 0.0
    %1803 = vmatprep.subr.mxu0 0.0
    %1804 = vmatpush1.msra.mxu0 0.0
    %1805 = vmatprep.subr.mxu0 0.0
    %1806 = vmatpush1.msra.mxu0 0.0
    %1807 = vmatprep.subr.mxu0 0.0
    %1808 = vmatpush1.msra.mxu0 0.0
    %1809 = vmatprep.subr.mxu0 0.0
    %1810 = vmatpush1.msra.mxu0 0.0
    %1811 = vmatprep.mubr.f32.mxu0 0.0
    %1812 = vmatmul.mubr.f32.gmra.mrb[0].mxu0 %v1700
    %v1813 = vpop.f32.mrb[0].mxu0
    %v1814 = vadd.f32 0.0, %v1813
    %v1815 = vpop.f32.mrb[0].mxu0
    %v1816 = vadd.f32 0.0, %v1815
    %1817 = vmatprep.mubr.f32.mxu0 0.0
    %1818 = vmatmul.mubr.f32.gmra.mrb[0].mxu0 %v1703
    %v1819 = vpop.f32.mrb[0].mxu0
    %v1820 = vadd.f32 0.0, %v1819
    %v1821 = vpop.f32.mrb[0].mxu0
    %v1822 = vadd.f32 0.0, %v1821
    %1823 = vmatprep.mubr.f32.mxu0 0.0
    %1824 = vmatmul.mubr.f32.gmra.mrb[0].mxu0 %v1706
    %v1825 = vpop.f32.mrb[0].mxu0
    %v1826 = vadd.f32 0.0, %v1825
    %v1827 = vpop.f32.mrb[0].mxu0
    %v1828 = vadd.f32 0.0, %v1827
    %1829 = vmatprep.mubr.f32.mxu0 0.0
    %1830 = vmatmul.mubr.f32.gmra.mrb[0].mxu0 %v1709
    %v1831 = vpop.f32.mrb[0].mxu0
    %v1832 = vadd.f32 0.0, %v1831
    %v1833 = vpop.f32.mrb[0].mxu0
    %v1834 = vadd.f32 0.0, %v1833
    %1835 = vmatprep.mubr.f32.mxu0 0.0
    %1836 = vmatmul.mubr.f32.gmra.mrb[0].mxu0 %v1712
    %v1837 = vpop.f32.mrb[0].mxu0
    %v1838 = vadd.f32 0.0, %v1837
    %v1839 = vpop.f32.mrb[0].mxu0
    %v1840 = vadd.f32 0.0, %v1839
    %1841 = vmatprep.mubr.f32.mxu0 0.0
    %1842 = vmatmul.mubr.f32.gmra.mrb[0].mxu0 %v1715
    %v1843 = vpop.f32.mrb[0].mxu0
    %v1844 = vadd.f32 0.0, %v1843
    %v1845 = vpop.f32.mrb[0].mxu0
    %v1846 = vadd.f32 0.0, %v1845
    %1847 = vmatprep.mubr.f32.mxu0 0.0
    %1848 = vmatmul.mubr.f32.gmra.mrb[0].mxu0 %v1718
    %v1849 = vpop.f32.mrb[0].mxu0
    %v1850 = vadd.f32 0.0, %v1849
    %v1851 = vpop.f32.mrb[0].mxu0
    %v1852 = vadd.f32 0.0, %v1851
    %1853 = vmatprep.mubr.f32.mxu0 0.0
    %1854 = vmatmul.mubr.f32.gmra.mrb[0].mxu0 %v1721
    %v1855 = vpop.f32.mrb[0].mxu0
    %v1856 = vadd.f32 0.0, %v1855
    %v1857 = vpop.f32.mrb[0].mxu0
    %v1858 = vadd.f32 0.0, %v1857
    %1859 = vmatprep.mubr.f32.mxu0 0.0
    %1860 = vmatmul.mubr.f32.gmra.mrb[0].mxu0 %v1724
    %v1861 = vpop.f32.mrb[0].mxu0
    %v1862 = vadd.f32 0.0, %v1861
    %v1863 = vpop.f32.mrb[0].mxu0
    %v1864 = vadd.f32 0.0, %v1863
    %1865 = vmatprep.mubr.f32.mxu0 0.0
    %1866 = vmatmul.mubr.f32.gmra.mrb[0].mxu0 %v1727
    %v1867 = vpop.f32.mrb[0].mxu0
    %v1868 = vadd.f32 0.0, %v1867
    %v1869 = vpop.f32.mrb[0].mxu0
    %v1870 = vadd.f32 0.0, %v1869
    %1871 = vmatprep.mubr.f32.mxu0 0.0
    %1872 = vmatmul.mubr.f32.gmra.mrb[0].mxu0 %v1730
    %v1873 = vpop.f32.mrb[0].mxu0
    %v1874 = vadd.f32 0.0, %v1873
    %v1875 = vpop.f32.mrb[0].mxu0
    %v1876 = vadd.f32 0.0, %v1875
    %1877 = vmatprep.mubr.f32.mxu0 0.0
    %1878 = vmatmul.mubr.f32.gmra.mrb[0].mxu0 %v1733
    %v1879 = vpop.f32.mrb[0].mxu0
    %v1880 = vadd.f32 0.0, %v1879
    %v1881 = vpop.f32.mrb[0].mxu0
    %v1882 = vadd.f32 0.0, %v1881
    %1883 = vmatprep.mubr.f32.mxu0 0.0
    %1884 = vmatmul.mubr.f32.gmra.mrb[0].mxu0 %v1736
    %v1885 = vpop.f32.mrb[0].mxu0
    %v1886 = vadd.f32 0.0, %v1885
    %v1887 = vpop.f32.mrb[0].mxu0
    %v1888 = vadd.f32 0.0, %v1887
    %1889 = vmatprep.mubr.f32.mxu0 0.0
    %1890 = vmatmul.mubr.f32.gmra.mrb[0].mxu0 %v1739
    %v1891 = vpop.f32.mrb[0].mxu0
    %v1892 = vadd.f32 0.0, %v1891
    %v1893 = vpop.f32.mrb[0].mxu0
    %v1894 = vadd.f32 0.0, %v1893
    %1895 = vmatprep.mubr.f32.mxu0 0.0
    %1896 = vmatmul.mubr.f32.gmra.mrb[0].mxu0 %v1742
    %v1897 = vpop.f32.mrb[0].mxu0
    %v1898 = vadd.f32 0.0, %v1897
    %v1899 = vpop.f32.mrb[0].mxu0
    %v1900 = vadd.f32 0.0, %v1899
    %1901 = vmatprep.mubr.f32.mxu0 0.0
    %1902 = vmatmul.mubr.f32.gmra.mrb[0].mxu0 %v1745
    %v1903 = vpop.f32.mrb[0].mxu0
    %v1904 = vadd.f32 0.0, %v1903
    %v1905 = vpop.f32.mrb[0].mxu0
    %v1906 = vadd.f32 0.0, %v1905
    %1907 = vdwg.mxu0
    %v1908 = vadd.f32 %v167, %v1814
    %v1909 = vadd.f32 %v169, %v1816
    %v1910 = vadd.f32 %v173, %v1820
    %v1911 = vadd.f32 %v175, %v1822
    %v1912 = vadd.f32 %v179, %v1826
    %v1913 = vadd.f32 %v181, %v1828
    %v1914 = vadd.f32 %v185, %v1832
    %v1915 = vadd.f32 %v187, %v1834
    %v1916 = vadd.f32 %v191, %v1838
    %v1917 = vadd.f32 %v193, %v1840
    %v1918 = vadd.f32 %v197, %v1844
    %v1919 = vadd.f32 %v199, %v1846
    %v1920 = vadd.f32 %v203, %v1850
    %v1921 = vadd.f32 %v205, %v1852
    %v1922 = vadd.f32 %v209, %v1856
    %v1923 = vadd.f32 %v211, %v1858
    %v1924 = vadd.f32 %v215, %v1862
    %v1925 = vadd.f32 %v217, %v1864
    %v1926 = vadd.f32 %v221, %v1868
    %v1927 = vadd.f32 %v223, %v1870
    %v1928 = vadd.f32 %v227, %v1874
    %v1929 = vadd.f32 %v229, %v1876
    %v1930 = vadd.f32 %v233, %v1880
    %v1931 = vadd.f32 %v235, %v1882
    %v1932 = vadd.f32 %v239, %v1886
    %v1933 = vadd.f32 %v241, %v1888
    %v1934 = vadd.f32 %v245, %v1892
    %v1935 = vadd.f32 %v247, %v1894
    %v1936 = vadd.f32 %v251, %v1898
    %v1937 = vadd.f32 %v253, %v1900
    %v1938 = vadd.f32 %v257, %v1904
    %v1939 = vadd.f32 %v259, %v1906
    %v1940 = vld [vmem:[%s4] sm:$0x3]
    %v1942 = vlaneseq
    %v1943 = vshrl.u32 %v1942, 7
    %v1944 = vsub.s32 0, %v1943
    %v1945 = vrot.slane %v1940, %v1944
    %v1946 = vlaneseq
    %v1947 = vshrl.u32 %v1946, 7
    %v1948 = vsub.s32 1, %v1947
    %v1949 = vrot.slane %v1940, %v1948
    %v1952 = vadd.f32 %v1908, %v1945
    %v1953 = vadd.f32 %v1909, %v1949
    %v1954 = vadd.f32 %v1910, %v1945
    %v1955 = vadd.f32 %v1911, %v1949
    %v1956 = vadd.f32 %v1912, %v1945
    %v1957 = vadd.f32 %v1913, %v1949
    %v1958 = vadd.f32 %v1914, %v1945
    %v1959 = vadd.f32 %v1915, %v1949
    %v1960 = vadd.f32 %v1916, %v1945
    %v1961 = vadd.f32 %v1917, %v1949
    %v1962 = vadd.f32 %v1918, %v1945
    %v1963 = vadd.f32 %v1919, %v1949
    %v1964 = vadd.f32 %v1920, %v1945
    %v1965 = vadd.f32 %v1921, %v1949
    %v1966 = vadd.f32 %v1922, %v1945
    %v1967 = vadd.f32 %v1923, %v1949
    %v1968 = vadd.f32 %v1924, %v1945
    %v1969 = vadd.f32 %v1925, %v1949
    %v1970 = vadd.f32 %v1926, %v1945
    %v1971 = vadd.f32 %v1927, %v1949
    %v1972 = vadd.f32 %v1928, %v1945
    %v1973 = vadd.f32 %v1929, %v1949
    %v1974 = vadd.f32 %v1930, %v1945
    %v1975 = vadd.f32 %v1931, %v1949
    %v1976 = vadd.f32 %v1932, %v1945
    %v1977 = vadd.f32 %v1933, %v1949
    %v1978 = vadd.f32 %v1934, %v1945
    %v1979 = vadd.f32 %v1935, %v1949
    %v1980 = vadd.f32 %v1936, %v1945
    %v1981 = vadd.f32 %v1937, %v1949
    %v1982 = vadd.f32 %v1938, %v1945
    %v1983 = vadd.f32 %v1939, %v1949
    %vm1984 = vcmp.ge.f32.partialorder %v1952, 0.0
    %vm1985 = vcmp.ge.f32.partialorder %v1953, 0.0
    %vm1986 = vcmp.ge.f32.partialorder %v1954, 0.0
    %vm1987 = vcmp.ge.f32.partialorder %v1955, 0.0
    %vm1988 = vcmp.ge.f32.partialorder %v1956, 0.0
    %vm1989 = vcmp.ge.f32.partialorder %v1957, 0.0
    %vm1990 = vcmp.ge.f32.partialorder %v1958, 0.0
    %vm1991 = vcmp.ge.f32.partialorder %v1959, 0.0
    %vm1992 = vcmp.ge.f32.partialorder %v1960, 0.0
    %vm1993 = vcmp.ge.f32.partialorder %v1961, 0.0
    %vm1994 = vcmp.ge.f32.partialorder %v1962, 0.0
    %vm1995 = vcmp.ge.f32.partialorder %v1963, 0.0
    %vm1996 = vcmp.ge.f32.partialorder %v1964, 0.0
    %vm1997 = vcmp.ge.f32.partialorder %v1965, 0.0
    %vm1998 = vcmp.ge.f32.partialorder %v1966, 0.0
    %vm1999 = vcmp.ge.f32.partialorder %v1967, 0.0
    %vm2000 = vcmp.ge.f32.partialorder %v1968, 0.0
    %vm2001 = vcmp.ge.f32.partialorder %v1969, 0.0
    %vm2002 = vcmp.ge.f32.partialorder %v1970, 0.0
    %vm2003 = vcmp.ge.f32.partialorder %v1971, 0.0
    %vm2004 = vcmp.ge.f32.partialorder %v1972, 0.0
    %vm2005 = vcmp.ge.f32.partialorder %v1973, 0.0
    %vm2006 = vcmp.ge.f32.partialorder %v1974, 0.0
    %vm2007 = vcmp.ge.f32.partialorder %v1975, 0.0
    %vm2008 = vcmp.ge.f32.partialorder %v1976, 0.0
    %vm2009 = vcmp.ge.f32.partialorder %v1977, 0.0
    %vm2010 = vcmp.ge.f32.partialorder %v1978, 0.0
    %vm2011 = vcmp.ge.f32.partialorder %v1979, 0.0
    %vm2012 = vcmp.ge.f32.partialorder %v1980, 0.0
    %vm2013 = vcmp.ge.f32.partialorder %v1981, 0.0
    %vm2014 = vcmp.ge.f32.partialorder %v1982, 0.0
    %vm2015 = vcmp.ge.f32.partialorder %v1983, 0.0
    %v2016 = vmul.f32 %v1952, 0.01
    %v2017 = vmul.f32 %v1953, 0.01
    %v2018 = vmul.f32 %v1954, 0.01
    %v2019 = vmul.f32 %v1955, 0.01
    %v2020 = vmul.f32 %v1956, 0.01
    %v2021 = vmul.f32 %v1957, 0.01
    %v2022 = vmul.f32 %v1958, 0.01
    %v2023 = vmul.f32 %v1959, 0.01
    %v2024 = vmul.f32 %v1960, 0.01
    %v2025 = vmul.f32 %v1961, 0.01
    %v2026 = vmul.f32 %v1962, 0.01
    %v2027 = vmul.f32 %v1963, 0.01
    %v2028 = vmul.f32 %v1964, 0.01
    %v2029 = vmul.f32 %v1965, 0.01
    %v2030 = vmul.f32 %v1966, 0.01
    %v2031 = vmul.f32 %v1967, 0.01
    %v2032 = vmul.f32 %v1968, 0.01
    %v2033 = vmul.f32 %v1969, 0.01
    %v2034 = vmul.f32 %v1970, 0.01
    %v2035 = vmul.f32 %v1971, 0.01
    %v2036 = vmul.f32 %v1972, 0.01
    %v2037 = vmul.f32 %v1973, 0.01
    %v2038 = vmul.f32 %v1974, 0.01
    %v2039 = vmul.f32 %v1975, 0.01
    %v2040 = vmul.f32 %v1976, 0.01
    %v2041 = vmul.f32 %v1977, 0.01
    %v2042 = vmul.f32 %v1978, 0.01
    %v2043 = vmul.f32 %v1979, 0.01
    %v2044 = vmul.f32 %v1980, 0.01
    %v2045 = vmul.f32 %v1981, 0.01
    %v2046 = vmul.f32 %v1982, 0.01
    %v2047 = vmul.f32 %v1983, 0.01
    %v2048 = vsel %vm1984, %v1952, %v2016
    %v2049 = vsel %vm1985, %v1953, %v2017
    %v2050 = vsel %vm1986, %v1954, %v2018
    %v2051 = vsel %vm1987, %v1955, %v2019
    %v2052 = vsel %vm1988, %v1956, %v2020
    %v2053 = vsel %vm1989, %v1957, %v2021
    %v2054 = vsel %vm1990, %v1958, %v2022
    %v2055 = vsel %vm1991, %v1959, %v2023
    %v2056 = vsel %vm1992, %v1960, %v2024
    %v2057 = vsel %vm1993, %v1961, %v2025
    %v2058 = vsel %vm1994, %v1962, %v2026
    %v2059 = vsel %vm1995, %v1963, %v2027
    %v2060 = vsel %vm1996, %v1964, %v2028
    %v2061 = vsel %vm1997, %v1965, %v2029
    %v2062 = vsel %vm1998, %v1966, %v2030
    %v2063 = vsel %vm1999, %v1967, %v2031
    %v2064 = vsel %vm2000, %v1968, %v2032
    %v2065 = vsel %vm2001, %v1969, %v2033
    %v2066 = vsel %vm2002, %v1970, %v2034
    %v2067 = vsel %vm2003, %v1971, %v2035
    %v2068 = vsel %vm2004, %v1972, %v2036
    %v2069 = vsel %vm2005, %v1973, %v2037
    %v2070 = vsel %vm2006, %v1974, %v2038
    %v2071 = vsel %vm2007, %v1975, %v2039
    %v2072 = vsel %vm2008, %v1976, %v2040
    %v2073 = vsel %vm2009, %v1977, %v2041
    %v2074 = vsel %vm2010, %v1978, %v2042
    %v2075 = vsel %vm2011, %v1979, %v2043
    %v2076 = vsel %vm2012, %v1980, %v2044
    %v2077 = vsel %vm2013, %v1981, %v2045
    %v2078 = vsel %vm2014, %v1982, %v2046
    %v2079 = vsel %vm2015, %v1983, %v2047
    %2080 = vmatprep.subr.mxu0 %v2049
    %2081 = vmatpush1.xpose.msra.mxu0 %v2048
    %2082 = vmatprep.subr.mxu0 %v2051
    %2083 = vmatpush1.xpose.msra.mxu0 %v2050
    %2084 = vmatprep.subr.mxu0 %v2053
    %2085 = vmatpush1.xpose.msra.mxu0 %v2052
    %2086 = vmatprep.subr.mxu0 %v2055
    %2087 = vmatpush1.xpose.msra.mxu0 %v2054
    %2088 = vmatprep.subr.mxu0 %v2057
    %2089 = vmatpush1.xpose.msra.mxu0 %v2056
    %2090 = vmatprep.subr.mxu0 %v2059
    %2091 = vmatpush1.xpose.msra.mxu0 %v2058
    %2092 = vmatprep.subr.mxu0 %v2061
    %2093 = vmatpush1.xpose.msra.mxu0 %v2060
    %2094 = vmatprep.subr.mxu0 %v2063
    %2095 = vmatpush1.xpose.msra.mxu0 %v2062
    %2096 = vmatprep.subr.mxu0 %v2065
    %2097 = vmatpush1.xpose.msra.mxu0 %v2064
    %2098 = vmatprep.subr.mxu0 %v2067
    %2099 = vmatpush1.xpose.msra.mxu0 %v2066
    %2100 = vmatprep.subr.mxu0 %v2069
    %2101 = vmatpush1.xpose.msra.mxu0 %v2068
    %2102 = vmatprep.subr.mxu0 %v2071
    %2103 = vmatpush1.xpose.msra.mxu0 %v2070
    %2104 = vmatprep.subr.mxu0 %v2073
    %2105 = vmatpush1.xpose.msra.mxu0 %v2072
    %2106 = vmatprep.subr.mxu0 %v2075
    %2107 = vmatpush1.xpose.msra.mxu0 %v2074
    %2108 = vmatprep.subr.mxu0 %v2077
    %2109 = vmatpush1.xpose.msra.mxu0 %v2076
    %2110 = vmatprep.subr.mxu0 %v2079
    %2111 = vmatpush1.xpose.msra.mxu0 %v2078
    %2112 = vmatprep.subr.mxu0 0.0
    %2113 = vmatpush1.xpose.msra.mxu0 0.0
    %2114 = vmatprep.subr.mxu0 0.0
    %2115 = vmatpush1.xpose.msra.mxu0 0.0
    %2116 = vmatprep.subr.mxu0 0.0
    %2117 = vmatpush1.xpose.msra.mxu0 0.0
    %2118 = vmatprep.subr.mxu0 0.0
    %2119 = vmatpush1.xpose.msra.mxu0 0.0
    %2120 = vmatprep.subr.mxu0 0.0
    %2121 = vmatpush1.xpose.msra.mxu0 0.0
    %2122 = vmatprep.subr.mxu0 0.0
    %2123 = vmatpush1.xpose.msra.mxu0 0.0
    %2124 = vmatprep.subr.mxu0 0.0
    %2125 = vmatpush1.xpose.msra.mxu0 0.0
    %2126 = vmatprep.subr.mxu0 0.0
    %2127 = vmatpush1.xpose.msra.mxu0 0.0
    %2128 = vmatprep.subr.mxu0 0.0
    %2129 = vmatpush1.xpose.msra.mxu0 0.0
    %2130 = vmatprep.subr.mxu0 0.0
    %2131 = vmatpush1.xpose.msra.mxu0 0.0
    %2132 = vmatprep.subr.mxu0 0.0
    %2133 = vmatpush1.xpose.msra.mxu0 0.0
    %2134 = vmatprep.subr.mxu0 0.0
    %2135 = vmatpush1.xpose.msra.mxu0 0.0
    %2136 = vmatprep.subr.mxu0 0.0
    %2137 = vmatpush1.xpose.msra.mxu0 0.0
    %2138 = vmatprep.subr.mxu0 0.0
    %2139 = vmatpush1.xpose.msra.mxu0 0.0
    %2140 = vmatprep.subr.mxu0 0.0
    %2141 = vmatpush1.xpose.msra.mxu0 0.0
    %2142 = vmatprep.subr.mxu0 0.0
    %2143 = vmatpush1.xpose.msra.mxu0 0.0
    %2144 = vmatprep.mubr.f32.mxu0 %v264
    %2145 = vmatmul.mubr.f32.gmra.mrb[0].mxu0 %v263
    %v2146 = vpop.f32.mrb[0].mxu0
    %v2147 = vadd.f32 %v667, %v2146
    %v2148 = vpop.f32.mrb[0].mxu0
    %2149 = vdwg.mxu0
    %s2150 = scalar_lea.vmem [#allocation2], 24
    %2151 = vst [vmem:[%s2150] sm:$0xff] %v2147
    %s2152 = scalar_lea.vmem %s1, 512
    %v2153 = vld [vmem:[%s2152] sm:$0xff]
    %v2154 = vld [vmem:[%s2152 + $0x8] sm:$0xff]
    %v2155 = vld [vmem:[%s2152 + $0x10] sm:$0xff]
    %v2156 = vld [vmem:[%s2152 + $0x18] sm:$0xff]
    %v2157 = vld [vmem:[%s2152 + $0x20] sm:$0xff]
    %v2158 = vld [vmem:[%s2152 + $0x28] sm:$0xff]
    %v2159 = vld [vmem:[%s2152 + $0x30] sm:$0xff]
    %v2160 = vld [vmem:[%s2152 + $0x38] sm:$0xff]
    %v2161 = vld [vmem:[%s2152 + $0x40] sm:$0xff]
    %v2162 = vld [vmem:[%s2152 + $0x48] sm:$0xff]
    %v2163 = vld [vmem:[%s2152 + $0x50] sm:$0xff]
    %v2164 = vld [vmem:[%s2152 + $0x58] sm:$0xff]
    %v2165 = vld [vmem:[%s2152 + $0x60] sm:$0xff]
    %v2166 = vld [vmem:[%s2152 + $0x68] sm:$0xff]
    %v2167 = vld [vmem:[%s2152 + $0x70] sm:$0xff]
    %v2168 = vld [vmem:[%s2152 + $0x78] sm:$0xff]
    %v2170 = vsel %vm282, %v2153, 0
    %v2173 = vsel %vm282, %v2154, 0
    %v2176 = vsel %vm282, %v2155, 0
    %v2179 = vsel %vm282, %v2156, 0
    %v2182 = vsel %vm282, %v2157, 0
    %v2185 = vsel %vm282, %v2158, 0
    %v2188 = vsel %vm282, %v2159, 0
    %v2191 = vsel %vm282, %v2160, 0
    %v2194 = vsel %vm282, %v2161, 0
    %v2197 = vsel %vm282, %v2162, 0
    %v2200 = vsel %vm282, %v2163, 0
    %v2203 = vsel %vm282, %v2164, 0
    %v2206 = vsel %vm282, %v2165, 0
    %v2209 = vsel %vm282, %v2166, 0
    %v2212 = vsel %vm282, %v2167, 0
    %v2215 = vsel %vm282, %v2168, 0
    %2217 = vmatprep.subr.mxu0 %v262
    %2218 = vmatpush1.msra.mxu0 %v261
    %2219 = vmatprep.subr.mxu0 0.0
    %2220 = vmatpush1.msra.mxu0 0.0
    %2221 = vmatprep.subr.mxu0 0.0
    %2222 = vmatpush1.msra.mxu0 0.0
    %2223 = vmatprep.subr.mxu0 0.0
    %2224 = vmatpush1.msra.mxu0 0.0
    %2225 = vmatprep.subr.mxu0 0.0
    %2226 = vmatpush1.msra.mxu0 0.0
    %2227 = vmatprep.subr.mxu0 0.0
    %2228 = vmatpush1.msra.mxu0 0.0
    %2229 = vmatprep.subr.mxu0 0.0
    %2230 = vmatpush1.msra.mxu0 0.0
    %2231 = vmatprep.subr.mxu0 0.0
    %2232 = vmatpush1.msra.mxu0 0.0
    %2233 = vmatprep.subr.mxu0 0.0
    %2234 = vmatpush1.msra.mxu0 0.0
    %2235 = vmatprep.subr.mxu0 0.0
    %2236 = vmatpush1.msra.mxu0 0.0
    %2237 = vmatprep.subr.mxu0 0.0
    %2238 = vmatpush1.msra.mxu0 0.0
    %2239 = vmatprep.subr.mxu0 0.0
    %2240 = vmatpush1.msra.mxu0 0.0
    %2241 = vmatprep.subr.mxu0 0.0
    %2242 = vmatpush1.msra.mxu0 0.0
    %2243 = vmatprep.subr.mxu0 0.0
    %2244 = vmatpush1.msra.mxu0 0.0
    %2245 = vmatprep.subr.mxu0 0.0
    %2246 = vmatpush1.msra.mxu0 0.0
    %2247 = vmatprep.subr.mxu0 0.0
    %2248 = vmatpush1.msra.mxu0 0.0
    %2249 = vmatprep.subr.mxu0 0.0
    %2250 = vmatpush1.msra.mxu0 0.0
    %2251 = vmatprep.subr.mxu0 0.0
    %2252 = vmatpush1.msra.mxu0 0.0
    %2253 = vmatprep.subr.mxu0 0.0
    %2254 = vmatpush1.msra.mxu0 0.0
    %2255 = vmatprep.subr.mxu0 0.0
    %2256 = vmatpush1.msra.mxu0 0.0
    %2257 = vmatprep.subr.mxu0 0.0
    %2258 = vmatpush1.msra.mxu0 0.0
    %2259 = vmatprep.subr.mxu0 0.0
    %2260 = vmatpush1.msra.mxu0 0.0
    %2261 = vmatprep.subr.mxu0 0.0
    %2262 = vmatpush1.msra.mxu0 0.0
    %2263 = vmatprep.subr.mxu0 0.0
    %2264 = vmatpush1.msra.mxu0 0.0
    %2265 = vmatprep.subr.mxu0 0.0
    %2266 = vmatpush1.msra.mxu0 0.0
    %2267 = vmatprep.subr.mxu0 0.0
    %2268 = vmatpush1.msra.mxu0 0.0
    %2269 = vmatprep.subr.mxu0 0.0
    %2270 = vmatpush1.msra.mxu0 0.0
    %2271 = vmatprep.subr.mxu0 0.0
    %2272 = vmatpush1.msra.mxu0 0.0
    %2273 = vmatprep.subr.mxu0 0.0
    %2274 = vmatpush1.msra.mxu0 0.0
    %2275 = vmatprep.subr.mxu0 0.0
    %2276 = vmatpush1.msra.mxu0 0.0
    %2277 = vmatprep.subr.mxu0 0.0
    %2278 = vmatpush1.msra.mxu0 0.0
    %2279 = vmatprep.subr.mxu0 0.0
    %2280 = vmatpush1.msra.mxu0 0.0
    %2281 = vmatprep.mubr.f32.mxu0 0.0
    %2282 = vmatmul.mubr.f32.gmra.mrb[0].mxu0 %v2170
    %v2283 = vpop.f32.mrb[0].mxu0
    %v2284 = vadd.f32 0.0, %v2283
    %v2285 = vpop.f32.mrb[0].mxu0
    %v2286 = vadd.f32 0.0, %v2285
    %2287 = vmatprep.mubr.f32.mxu0 0.0
    %2288 = vmatmul.mubr.f32.gmra.mrb[0].mxu0 %v2173
    %v2289 = vpop.f32.mrb[0].mxu0
    %v2290 = vadd.f32 0.0, %v2289
    %v2291 = vpop.f32.mrb[0].mxu0
    %v2292 = vadd.f32 0.0, %v2291
    %2293 = vmatprep.mubr.f32.mxu0 0.0
    %2294 = vmatmul.mubr.f32.gmra.mrb[0].mxu0 %v2176
    %v2295 = vpop.f32.mrb[0].mxu0
    %v2296 = vadd.f32 0.0, %v2295
    %v2297 = vpop.f32.mrb[0].mxu0
    %v2298 = vadd.f32 0.0, %v2297
    %2299 = vmatprep.mubr.f32.mxu0 0.0
    %2300 = vmatmul.mubr.f32.gmra.mrb[0].mxu0 %v2179
    %v2301 = vpop.f32.mrb[0].mxu0
    %v2302 = vadd.f32 0.0, %v2301
    %v2303 = vpop.f32.mrb[0].mxu0
    %v2304 = vadd.f32 0.0, %v2303
    %2305 = vmatprep.mubr.f32.mxu0 0.0
    %2306 = vmatmul.mubr.f32.gmra.mrb[0].mxu0 %v2182
    %v2307 = vpop.f32.mrb[0].mxu0
    %v2308 = vadd.f32 0.0, %v2307
    %v2309 = vpop.f32.mrb[0].mxu0
    %v2310 = vadd.f32 0.0, %v2309
    %2311 = vmatprep.mubr.f32.mxu0 0.0
    %2312 = vmatmul.mubr.f32.gmra.mrb[0].mxu0 %v2185
    %v2313 = vpop.f32.mrb[0].mxu0
    %v2314 = vadd.f32 0.0, %v2313
    %v2315 = vpop.f32.mrb[0].mxu0
    %v2316 = vadd.f32 0.0, %v2315
    %2317 = vmatprep.mubr.f32.mxu0 0.0
    %2318 = vmatmul.mubr.f32.gmra.mrb[0].mxu0 %v2188
    %v2319 = vpop.f32.mrb[0].mxu0
    %v2320 = vadd.f32 0.0, %v2319
    %v2321 = vpop.f32.mrb[0].mxu0
    %v2322 = vadd.f32 0.0, %v2321
    %2323 = vmatprep.mubr.f32.mxu0 0.0
    %2324 = vmatmul.mubr.f32.gmra.mrb[0].mxu0 %v2191
    %v2325 = vpop.f32.mrb[0].mxu0
    %v2326 = vadd.f32 0.0, %v2325
    %v2327 = vpop.f32.mrb[0].mxu0
    %v2328 = vadd.f32 0.0, %v2327
    %2329 = vmatprep.mubr.f32.mxu0 0.0
    %2330 = vmatmul.mubr.f32.gmra.mrb[0].mxu0 %v2194
    %v2331 = vpop.f32.mrb[0].mxu0
    %v2332 = vadd.f32 0.0, %v2331
    %v2333 = vpop.f32.mrb[0].mxu0
    %v2334 = vadd.f32 0.0, %v2333
    %2335 = vmatprep.mubr.f32.mxu0 0.0
    %2336 = vmatmul.mubr.f32.gmra.mrb[0].mxu0 %v2197
    %v2337 = vpop.f32.mrb[0].mxu0
    %v2338 = vadd.f32 0.0, %v2337
    %v2339 = vpop.f32.mrb[0].mxu0
    %v2340 = vadd.f32 0.0, %v2339
    %2341 = vmatprep.mubr.f32.mxu0 0.0
    %2342 = vmatmul.mubr.f32.gmra.mrb[0].mxu0 %v2200
    %v2343 = vpop.f32.mrb[0].mxu0
    %v2344 = vadd.f32 0.0, %v2343
    %v2345 = vpop.f32.mrb[0].mxu0
    %v2346 = vadd.f32 0.0, %v2345
    %2347 = vmatprep.mubr.f32.mxu0 0.0
    %2348 = vmatmul.mubr.f32.gmra.mrb[0].mxu0 %v2203
    %v2349 = vpop.f32.mrb[0].mxu0
    %v2350 = vadd.f32 0.0, %v2349
    %v2351 = vpop.f32.mrb[0].mxu0
    %v2352 = vadd.f32 0.0, %v2351
    %2353 = vmatprep.mubr.f32.mxu0 0.0
    %2354 = vmatmul.mubr.f32.gmra.mrb[0].mxu0 %v2206
    %v2355 = vpop.f32.mrb[0].mxu0
    %v2356 = vadd.f32 0.0, %v2355
    %v2357 = vpop.f32.mrb[0].mxu0
    %v2358 = vadd.f32 0.0, %v2357
    %2359 = vmatprep.mubr.f32.mxu0 0.0
    %2360 = vmatmul.mubr.f32.gmra.mrb[0].mxu0 %v2209
    %v2361 = vpop.f32.mrb[0].mxu0
    %v2362 = vadd.f32 0.0, %v2361
    %v2363 = vpop.f32.mrb[0].mxu0
    %v2364 = vadd.f32 0.0, %v2363
    %2365 = vmatprep.mubr.f32.mxu0 0.0
    %2366 = vmatmul.mubr.f32.gmra.mrb[0].mxu0 %v2212
    %v2367 = vpop.f32.mrb[0].mxu0
    %v2368 = vadd.f32 0.0, %v2367
    %v2369 = vpop.f32.mrb[0].mxu0
    %v2370 = vadd.f32 0.0, %v2369
    %2371 = vmatprep.mubr.f32.mxu0 0.0
    %2372 = vmatmul.mubr.f32.gmra.mrb[0].mxu0 %v2215
    %v2373 = vpop.f32.mrb[0].mxu0
    %v2374 = vadd.f32 0.0, %v2373
    %v2375 = vpop.f32.mrb[0].mxu0
    %v2376 = vadd.f32 0.0, %v2375
    %2377 = vdwg.mxu0
    %v2378 = vadd.f32 %v167, %v2284
    %v2379 = vadd.f32 %v169, %v2286
    %v2380 = vadd.f32 %v173, %v2290
    %v2381 = vadd.f32 %v175, %v2292
    %v2382 = vadd.f32 %v179, %v2296
    %v2383 = vadd.f32 %v181, %v2298
    %v2384 = vadd.f32 %v185, %v2302
    %v2385 = vadd.f32 %v187, %v2304
    %v2386 = vadd.f32 %v191, %v2308
    %v2387 = vadd.f32 %v193, %v2310
    %v2388 = vadd.f32 %v197, %v2314
    %v2389 = vadd.f32 %v199, %v2316
    %v2390 = vadd.f32 %v203, %v2320
    %v2391 = vadd.f32 %v205, %v2322
    %v2392 = vadd.f32 %v209, %v2326
    %v2393 = vadd.f32 %v211, %v2328
    %v2394 = vadd.f32 %v215, %v2332
    %v2395 = vadd.f32 %v217, %v2334
    %v2396 = vadd.f32 %v221, %v2338
    %v2397 = vadd.f32 %v223, %v2340
    %v2398 = vadd.f32 %v227, %v2344
    %v2399 = vadd.f32 %v229, %v2346
    %v2400 = vadd.f32 %v233, %v2350
    %v2401 = vadd.f32 %v235, %v2352
    %v2402 = vadd.f32 %v239, %v2356
    %v2403 = vadd.f32 %v241, %v2358
    %v2404 = vadd.f32 %v245, %v2362
    %v2405 = vadd.f32 %v247, %v2364
    %v2406 = vadd.f32 %v251, %v2368
    %v2407 = vadd.f32 %v253, %v2370
    %v2408 = vadd.f32 %v257, %v2374
    %v2409 = vadd.f32 %v259, %v2376
    %v2410 = vld [vmem:[%s998] sm:$0x3]
    %v2412 = vlaneseq
    %v2413 = vshrl.u32 %v2412, 7
    %v2414 = vsub.s32 0, %v2413
    %v2415 = vrot.slane %v2410, %v2414
    %v2416 = vlaneseq
    %v2417 = vshrl.u32 %v2416, 7
    %v2418 = vsub.s32 1, %v2417
    %v2419 = vrot.slane %v2410, %v2418
    %v2422 = vadd.f32 %v2378, %v2415
    %v2423 = vadd.f32 %v2379, %v2419
    %v2424 = vadd.f32 %v2380, %v2415
    %v2425 = vadd.f32 %v2381, %v2419
    %v2426 = vadd.f32 %v2382, %v2415
    %v2427 = vadd.f32 %v2383, %v2419
    %v2428 = vadd.f32 %v2384, %v2415
    %v2429 = vadd.f32 %v2385, %v2419
    %v2430 = vadd.f32 %v2386, %v2415
    %v2431 = vadd.f32 %v2387, %v2419
    %v2432 = vadd.f32 %v2388, %v2415
    %v2433 = vadd.f32 %v2389, %v2419
    %v2434 = vadd.f32 %v2390, %v2415
    %v2435 = vadd.f32 %v2391, %v2419
    %v2436 = vadd.f32 %v2392, %v2415
    %v2437 = vadd.f32 %v2393, %v2419
    %v2438 = vadd.f32 %v2394, %v2415
    %v2439 = vadd.f32 %v2395, %v2419
    %v2440 = vadd.f32 %v2396, %v2415
    %v2441 = vadd.f32 %v2397, %v2419
    %v2442 = vadd.f32 %v2398, %v2415
    %v2443 = vadd.f32 %v2399, %v2419
    %v2444 = vadd.f32 %v2400, %v2415
    %v2445 = vadd.f32 %v2401, %v2419
    %v2446 = vadd.f32 %v2402, %v2415
    %v2447 = vadd.f32 %v2403, %v2419
    %v2448 = vadd.f32 %v2404, %v2415
    %v2449 = vadd.f32 %v2405, %v2419
    %v2450 = vadd.f32 %v2406, %v2415
    %v2451 = vadd.f32 %v2407, %v2419
    %v2452 = vadd.f32 %v2408, %v2415
    %v2453 = vadd.f32 %v2409, %v2419
    %vm2454 = vcmp.ge.f32.partialorder %v2422, 0.0
    %vm2455 = vcmp.ge.f32.partialorder %v2423, 0.0
    %vm2456 = vcmp.ge.f32.partialorder %v2424, 0.0
    %vm2457 = vcmp.ge.f32.partialorder %v2425, 0.0
    %vm2458 = vcmp.ge.f32.partialorder %v2426, 0.0
    %vm2459 = vcmp.ge.f32.partialorder %v2427, 0.0
    %vm2460 = vcmp.ge.f32.partialorder %v2428, 0.0
    %vm2461 = vcmp.ge.f32.partialorder %v2429, 0.0
    %vm2462 = vcmp.ge.f32.partialorder %v2430, 0.0
    %vm2463 = vcmp.ge.f32.partialorder %v2431, 0.0
    %vm2464 = vcmp.ge.f32.partialorder %v2432, 0.0
    %vm2465 = vcmp.ge.f32.partialorder %v2433, 0.0
    %vm2466 = vcmp.ge.f32.partialorder %v2434, 0.0
    %vm2467 = vcmp.ge.f32.partialorder %v2435, 0.0
    %vm2468 = vcmp.ge.f32.partialorder %v2436, 0.0
    %vm2469 = vcmp.ge.f32.partialorder %v2437, 0.0
    %vm2470 = vcmp.ge.f32.partialorder %v2438, 0.0
    %vm2471 = vcmp.ge.f32.partialorder %v2439, 0.0
    %vm2472 = vcmp.ge.f32.partialorder %v2440, 0.0
    %vm2473 = vcmp.ge.f32.partialorder %v2441, 0.0
    %vm2474 = vcmp.ge.f32.partialorder %v2442, 0.0
    %vm2475 = vcmp.ge.f32.partialorder %v2443, 0.0
    %vm2476 = vcmp.ge.f32.partialorder %v2444, 0.0
    %vm2477 = vcmp.ge.f32.partialorder %v2445, 0.0
    %vm2478 = vcmp.ge.f32.partialorder %v2446, 0.0
    %vm2479 = vcmp.ge.f32.partialorder %v2447, 0.0
    %vm2480 = vcmp.ge.f32.partialorder %v2448, 0.0
    %vm2481 = vcmp.ge.f32.partialorder %v2449, 0.0
    %vm2482 = vcmp.ge.f32.partialorder %v2450, 0.0
    %vm2483 = vcmp.ge.f32.partialorder %v2451, 0.0
    %vm2484 = vcmp.ge.f32.partialorder %v2452, 0.0
    %vm2485 = vcmp.ge.f32.partialorder %v2453, 0.0
    %v2486 = vmul.f32 %v2422, 0.01
    %v2487 = vmul.f32 %v2423, 0.01
    %v2488 = vmul.f32 %v2424, 0.01
    %v2489 = vmul.f32 %v2425, 0.01
    %v2490 = vmul.f32 %v2426, 0.01
    %v2491 = vmul.f32 %v2427, 0.01
    %v2492 = vmul.f32 %v2428, 0.01
    %v2493 = vmul.f32 %v2429, 0.01
    %v2494 = vmul.f32 %v2430, 0.01
    %v2495 = vmul.f32 %v2431, 0.01
    %v2496 = vmul.f32 %v2432, 0.01
    %v2497 = vmul.f32 %v2433, 0.01
    %v2498 = vmul.f32 %v2434, 0.01
    %v2499 = vmul.f32 %v2435, 0.01
    %v2500 = vmul.f32 %v2436, 0.01
    %v2501 = vmul.f32 %v2437, 0.01
    %v2502 = vmul.f32 %v2438, 0.01
    %v2503 = vmul.f32 %v2439, 0.01
    %v2504 = vmul.f32 %v2440, 0.01
    %v2505 = vmul.f32 %v2441, 0.01
    %v2506 = vmul.f32 %v2442, 0.01
    %v2507 = vmul.f32 %v2443, 0.01
    %v2508 = vmul.f32 %v2444, 0.01
    %v2509 = vmul.f32 %v2445, 0.01
    %v2510 = vmul.f32 %v2446, 0.01
    %v2511 = vmul.f32 %v2447, 0.01
    %v2512 = vmul.f32 %v2448, 0.01
    %v2513 = vmul.f32 %v2449, 0.01
    %v2514 = vmul.f32 %v2450, 0.01
    %v2515 = vmul.f32 %v2451, 0.01
    %v2516 = vmul.f32 %v2452, 0.01
    %v2517 = vmul.f32 %v2453, 0.01
    %v2518 = vsel %vm2454, %v2422, %v2486
    %v2519 = vsel %vm2455, %v2423, %v2487
    %v2520 = vsel %vm2456, %v2424, %v2488
    %v2521 = vsel %vm2457, %v2425, %v2489
    %v2522 = vsel %vm2458, %v2426, %v2490
    %v2523 = vsel %vm2459, %v2427, %v2491
    %v2524 = vsel %vm2460, %v2428, %v2492
    %v2525 = vsel %vm2461, %v2429, %v2493
    %v2526 = vsel %vm2462, %v2430, %v2494
    %v2527 = vsel %vm2463, %v2431, %v2495
    %v2528 = vsel %vm2464, %v2432, %v2496
    %v2529 = vsel %vm2465, %v2433, %v2497
    %v2530 = vsel %vm2466, %v2434, %v2498
    %v2531 = vsel %vm2467, %v2435, %v2499
    %v2532 = vsel %vm2468, %v2436, %v2500
    %v2533 = vsel %vm2469, %v2437, %v2501
    %v2534 = vsel %vm2470, %v2438, %v2502
    %v2535 = vsel %vm2471, %v2439, %v2503
    %v2536 = vsel %vm2472, %v2440, %v2504
    %v2537 = vsel %vm2473, %v2441, %v2505
    %v2538 = vsel %vm2474, %v2442, %v2506
    %v2539 = vsel %vm2475, %v2443, %v2507
    %v2540 = vsel %vm2476, %v2444, %v2508
    %v2541 = vsel %vm2477, %v2445, %v2509
    %v2542 = vsel %vm2478, %v2446, %v2510
    %v2543 = vsel %vm2479, %v2447, %v2511
    %v2544 = vsel %vm2480, %v2448, %v2512
    %v2545 = vsel %vm2481, %v2449, %v2513
    %v2546 = vsel %vm2482, %v2450, %v2514
    %v2547 = vsel %vm2483, %v2451, %v2515
    %v2548 = vsel %vm2484, %v2452, %v2516
    %v2549 = vsel %vm2485, %v2453, %v2517
    %2550 = vmatprep.subr.mxu0 %v2519
    %2551 = vmatpush1.xpose.msra.mxu0 %v2518
    %2552 = vmatprep.subr.mxu0 %v2521
    %2553 = vmatpush1.xpose.msra.mxu0 %v2520
    %2554 = vmatprep.subr.mxu0 %v2523
    %2555 = vmatpush1.xpose.msra.mxu0 %v2522
    %2556 = vmatprep.subr.mxu0 %v2525
    %2557 = vmatpush1.xpose.msra.mxu0 %v2524
    %2558 = vmatprep.subr.mxu0 %v2527
    %2559 = vmatpush1.xpose.msra.mxu0 %v2526
    %2560 = vmatprep.subr.mxu0 %v2529
    %2561 = vmatpush1.xpose.msra.mxu0 %v2528
    %2562 = vmatprep.subr.mxu0 %v2531
    %2563 = vmatpush1.xpose.msra.mxu0 %v2530
    %2564 = vmatprep.subr.mxu0 %v2533
    %2565 = vmatpush1.xpose.msra.mxu0 %v2532
    %2566 = vmatprep.subr.mxu0 %v2535
    %2567 = vmatpush1.xpose.msra.mxu0 %v2534
    %2568 = vmatprep.subr.mxu0 %v2537
    %2569 = vmatpush1.xpose.msra.mxu0 %v2536
    %2570 = vmatprep.subr.mxu0 %v2539
    %2571 = vmatpush1.xpose.msra.mxu0 %v2538
    %2572 = vmatprep.subr.mxu0 %v2541
    %2573 = vmatpush1.xpose.msra.mxu0 %v2540
    %2574 = vmatprep.subr.mxu0 %v2543
    %2575 = vmatpush1.xpose.msra.mxu0 %v2542
    %2576 = vmatprep.subr.mxu0 %v2545
    %2577 = vmatpush1.xpose.msra.mxu0 %v2544
    %2578 = vmatprep.subr.mxu0 %v2547
    %2579 = vmatpush1.xpose.msra.mxu0 %v2546
    %2580 = vmatprep.subr.mxu0 %v2549
    %2581 = vmatpush1.xpose.msra.mxu0 %v2548
    %2582 = vmatprep.subr.mxu0 0.0
    %2583 = vmatpush1.xpose.msra.mxu0 0.0
    %2584 = vmatprep.subr.mxu0 0.0
    %2585 = vmatpush1.xpose.msra.mxu0 0.0
    %2586 = vmatprep.subr.mxu0 0.0
    %2587 = vmatpush1.xpose.msra.mxu0 0.0
    %2588 = vmatprep.subr.mxu0 0.0
    %2589 = vmatpush1.xpose.msra.mxu0 0.0
    %2590 = vmatprep.subr.mxu0 0.0
    %2591 = vmatpush1.xpose.msra.mxu0 0.0
    %2592 = vmatprep.subr.mxu0 0.0
    %2593 = vmatpush1.xpose.msra.mxu0 0.0
    %2594 = vmatprep.subr.mxu0 0.0
    %2595 = vmatpush1.xpose.msra.mxu0 0.0
    %2596 = vmatprep.subr.mxu0 0.0
    %2597 = vmatpush1.xpose.msra.mxu0 0.0
    %2598 = vmatprep.subr.mxu0 0.0
    %2599 = vmatpush1.xpose.msra.mxu0 0.0
    %2600 = vmatprep.subr.mxu0 0.0
    %2601 = vmatpush1.xpose.msra.mxu0 0.0
    %2602 = vmatprep.subr.mxu0 0.0
    %2603 = vmatpush1.xpose.msra.mxu0 0.0
    %2604 = vmatprep.subr.mxu0 0.0
    %2605 = vmatpush1.xpose.msra.mxu0 0.0
    %2606 = vmatprep.subr.mxu0 0.0
    %2607 = vmatpush1.xpose.msra.mxu0 0.0
    %2608 = vmatprep.subr.mxu0 0.0
    %2609 = vmatpush1.xpose.msra.mxu0 0.0
    %2610 = vmatprep.subr.mxu0 0.0
    %2611 = vmatpush1.xpose.msra.mxu0 0.0
    %2612 = vmatprep.subr.mxu0 0.0
    %2613 = vmatpush1.xpose.msra.mxu0 0.0
    %2614 = vmatprep.mubr.f32.mxu0 %v264
    %2615 = vmatmul.mubr.f32.gmra.mrb[0].mxu0 %v263
    %v2616 = vpop.f32.mrb[0].mxu0
    %v2617 = vadd.f32 %v667, %v2616
    %v2618 = vpop.f32.mrb[0].mxu0
    %2619 = vdwg.mxu0
    %s2620 = scalar_lea.vmem [#allocation2], 32
    %2621 = vst [vmem:[%s2620] sm:$0xff] %v2617
    %s2622 = scalar_lea.vmem %s1, 640
    %v2623 = vld [vmem:[%s2622] sm:$0xff]
    %v2624 = vld [vmem:[%s2622 + $0x8] sm:$0xff]
    %v2625 = vld [vmem:[%s2622 + $0x10] sm:$0xff]
    %v2626 = vld [vmem:[%s2622 + $0x18] sm:$0xff]
    %v2627 = vld [vmem:[%s2622 + $0x20] sm:$0xff]
    %v2628 = vld [vmem:[%s2622 + $0x28] sm:$0xff]
    %v2629 = vld [vmem:[%s2622 + $0x30] sm:$0xff]
    %v2630 = vld [vmem:[%s2622 + $0x38] sm:$0xff]
    %v2631 = vld [vmem:[%s2622 + $0x40] sm:$0xff]
    %v2632 = vld [vmem:[%s2622 + $0x48] sm:$0xff]
    %v2633 = vld [vmem:[%s2622 + $0x50] sm:$0xff]
    %v2634 = vld [vmem:[%s2622 + $0x58] sm:$0xff]
    %v2635 = vld [vmem:[%s2622 + $0x60] sm:$0xff]
    %v2636 = vld [vmem:[%s2622 + $0x68] sm:$0xff]
    %v2637 = vld [vmem:[%s2622 + $0x70] sm:$0xff]
    %v2638 = vld [vmem:[%s2622 + $0x78] sm:$0xff]
    %v2640 = vsel %vm282, %v2623, 0
    %v2643 = vsel %vm282, %v2624, 0
    %v2646 = vsel %vm282, %v2625, 0
    %v2649 = vsel %vm282, %v2626, 0
    %v2652 = vsel %vm282, %v2627, 0
    %v2655 = vsel %vm282, %v2628, 0
    %v2658 = vsel %vm282, %v2629, 0
    %v2661 = vsel %vm282, %v2630, 0
    %v2664 = vsel %vm282, %v2631, 0
    %v2667 = vsel %vm282, %v2632, 0
    %v2670 = vsel %vm282, %v2633, 0
    %v2673 = vsel %vm282, %v2634, 0
    %v2676 = vsel %vm282, %v2635, 0
    %v2679 = vsel %vm282, %v2636, 0
    %v2682 = vsel %vm282, %v2637, 0
    %v2685 = vsel %vm282, %v2638, 0
    %2687 = vmatprep.subr.mxu0 %v262
    %2688 = vmatpush1.msra.mxu0 %v261
    %2689 = vmatprep.subr.mxu0 0.0
    %2690 = vmatpush1.msra.mxu0 0.0
    %2691 = vmatprep.subr.mxu0 0.0
    %2692 = vmatpush1.msra.mxu0 0.0
    %2693 = vmatprep.subr.mxu0 0.0
    %2694 = vmatpush1.msra.mxu0 0.0
    %2695 = vmatprep.subr.mxu0 0.0
    %2696 = vmatpush1.msra.mxu0 0.0
    %2697 = vmatprep.subr.mxu0 0.0
    %2698 = vmatpush1.msra.mxu0 0.0
    %2699 = vmatprep.subr.mxu0 0.0
    %2700 = vmatpush1.msra.mxu0 0.0
    %2701 = vmatprep.subr.mxu0 0.0
    %2702 = vmatpush1.msra.mxu0 0.0
    %2703 = vmatprep.subr.mxu0 0.0
    %2704 = vmatpush1.msra.mxu0 0.0
    %2705 = vmatprep.subr.mxu0 0.0
    %2706 = vmatpush1.msra.mxu0 0.0
    %2707 = vmatprep.subr.mxu0 0.0
    %2708 = vmatpush1.msra.mxu0 0.0
    %2709 = vmatprep.subr.mxu0 0.0
    %2710 = vmatpush1.msra.mxu0 0.0
    %2711 = vmatprep.subr.mxu0 0.0
    %2712 = vmatpush1.msra.mxu0 0.0
    %2713 = vmatprep.subr.mxu0 0.0
    %2714 = vmatpush1.msra.mxu0 0.0
    %2715 = vmatprep.subr.mxu0 0.0
    %2716 = vmatpush1.msra.mxu0 0.0
    %2717 = vmatprep.subr.mxu0 0.0
    %2718 = vmatpush1.msra.mxu0 0.0
    %2719 = vmatprep.subr.mxu0 0.0
    %2720 = vmatpush1.msra.mxu0 0.0
    %2721 = vmatprep.subr.mxu0 0.0
    %2722 = vmatpush1.msra.mxu0 0.0
    %2723 = vmatprep.subr.mxu0 0.0
    %2724 = vmatpush1.msra.mxu0 0.0
    %2725 = vmatprep.subr.mxu0 0.0
    %2726 = vmatpush1.msra.mxu0 0.0
    %2727 = vmatprep.subr.mxu0 0.0
    %2728 = vmatpush1.msra.mxu0 0.0
    %2729 = vmatprep.subr.mxu0 0.0
    %2730 = vmatpush1.msra.mxu0 0.0
    %2731 = vmatprep.subr.mxu0 0.0
    %2732 = vmatpush1.msra.mxu0 0.0
    %2733 = vmatprep.subr.mxu0 0.0
    %2734 = vmatpush1.msra.mxu0 0.0
    %2735 = vmatprep.subr.mxu0 0.0
    %2736 = vmatpush1.msra.mxu0 0.0
    %2737 = vmatprep.subr.mxu0 0.0
    %2738 = vmatpush1.msra.mxu0 0.0
    %2739 = vmatprep.subr.mxu0 0.0
    %2740 = vmatpush1.msra.mxu0 0.0
    %2741 = vmatprep.subr.mxu0 0.0
    %2742 = vmatpush1.msra.mxu0 0.0
    %2743 = vmatprep.subr.mxu0 0.0
    %2744 = vmatpush1.msra.mxu0 0.0
    %2745 = vmatprep.subr.mxu0 0.0
    %2746 = vmatpush1.msra.mxu0 0.0
    %2747 = vmatprep.subr.mxu0 0.0
    %2748 = vmatpush1.msra.mxu0 0.0
    %2749 = vmatprep.subr.mxu0 0.0
    %2750 = vmatpush1.msra.mxu0 0.0
    %2751 = vmatprep.mubr.f32.mxu0 0.0
    %2752 = vmatmul.mubr.f32.gmra.mrb[0].mxu0 %v2640
    %v2753 = vpop.f32.mrb[0].mxu0
    %v2754 = vadd.f32 0.0, %v2753
    %v2755 = vpop.f32.mrb[0].mxu0
    %v2756 = vadd.f32 0.0, %v2755
    %2757 = vmatprep.mubr.f32.mxu0 0.0
    %2758 = vmatmul.mubr.f32.gmra.mrb[0].mxu0 %v2643
    %v2759 = vpop.f32.mrb[0].mxu0
    %v2760 = vadd.f32 0.0, %v2759
    %v2761 = vpop.f32.mrb[0].mxu0
    %v2762 = vadd.f32 0.0, %v2761
    %2763 = vmatprep.mubr.f32.mxu0 0.0
    %2764 = vmatmul.mubr.f32.gmra.mrb[0].mxu0 %v2646
    %v2765 = vpop.f32.mrb[0].mxu0
    %v2766 = vadd.f32 0.0, %v2765
    %v2767 = vpop.f32.mrb[0].mxu0
    %v2768 = vadd.f32 0.0, %v2767
    %2769 = vmatprep.mubr.f32.mxu0 0.0
    %2770 = vmatmul.mubr.f32.gmra.mrb[0].mxu0 %v2649
    %v2771 = vpop.f32.mrb[0].mxu0
    %v2772 = vadd.f32 0.0, %v2771
    %v2773 = vpop.f32.mrb[0].mxu0
    %v2774 = vadd.f32 0.0, %v2773
    %2775 = vmatprep.mubr.f32.mxu0 0.0
    %2776 = vmatmul.mubr.f32.gmra.mrb[0].mxu0 %v2652
    %v2777 = vpop.f32.mrb[0].mxu0
    %v2778 = vadd.f32 0.0, %v2777
    %v2779 = vpop.f32.mrb[0].mxu0
    %v2780 = vadd.f32 0.0, %v2779
    %2781 = vmatprep.mubr.f32.mxu0 0.0
    %2782 = vmatmul.mubr.f32.gmra.mrb[0].mxu0 %v2655
    %v2783 = vpop.f32.mrb[0].mxu0
    %v2784 = vadd.f32 0.0, %v2783
    %v2785 = vpop.f32.mrb[0].mxu0
    %v2786 = vadd.f32 0.0, %v2785
    %2787 = vmatprep.mubr.f32.mxu0 0.0
    %2788 = vmatmul.mubr.f32.gmra.mrb[0].mxu0 %v2658
    %v2789 = vpop.f32.mrb[0].mxu0
    %v2790 = vadd.f32 0.0, %v2789
    %v2791 = vpop.f32.mrb[0].mxu0
    %v2792 = vadd.f32 0.0, %v2791
    %2793 = vmatprep.mubr.f32.mxu0 0.0
    %2794 = vmatmul.mubr.f32.gmra.mrb[0].mxu0 %v2661
    %v2795 = vpop.f32.mrb[0].mxu0
    %v2796 = vadd.f32 0.0, %v2795
    %v2797 = vpop.f32.mrb[0].mxu0
    %v2798 = vadd.f32 0.0, %v2797
    %2799 = vmatprep.mubr.f32.mxu0 0.0
    %2800 = vmatmul.mubr.f32.gmra.mrb[0].mxu0 %v2664
    %v2801 = vpop.f32.mrb[0].mxu0
    %v2802 = vadd.f32 0.0, %v2801
    %v2803 = vpop.f32.mrb[0].mxu0
    %v2804 = vadd.f32 0.0, %v2803
    %2805 = vmatprep.mubr.f32.mxu0 0.0
    %2806 = vmatmul.mubr.f32.gmra.mrb[0].mxu0 %v2667
    %v2807 = vpop.f32.mrb[0].mxu0
    %v2808 = vadd.f32 0.0, %v2807
    %v2809 = vpop.f32.mrb[0].mxu0
    %v2810 = vadd.f32 0.0, %v2809
    %2811 = vmatprep.mubr.f32.mxu0 0.0
    %2812 = vmatmul.mubr.f32.gmra.mrb[0].mxu0 %v2670
    %v2813 = vpop.f32.mrb[0].mxu0
    %v2814 = vadd.f32 0.0, %v2813
    %v2815 = vpop.f32.mrb[0].mxu0
    %v2816 = vadd.f32 0.0, %v2815
    %2817 = vmatprep.mubr.f32.mxu0 0.0
    %2818 = vmatmul.mubr.f32.gmra.mrb[0].mxu0 %v2673
    %v2819 = vpop.f32.mrb[0].mxu0
    %v2820 = vadd.f32 0.0, %v2819
    %v2821 = vpop.f32.mrb[0].mxu0
    %v2822 = vadd.f32 0.0, %v2821
    %2823 = vmatprep.mubr.f32.mxu0 0.0
    %2824 = vmatmul.mubr.f32.gmra.mrb[0].mxu0 %v2676
    %v2825 = vpop.f32.mrb[0].mxu0
    %v2826 = vadd.f32 0.0, %v2825
    %v2827 = vpop.f32.mrb[0].mxu0
    %v2828 = vadd.f32 0.0, %v2827
    %2829 = vmatprep.mubr.f32.mxu0 0.0
    %2830 = vmatmul.mubr.f32.gmra.mrb[0].mxu0 %v2679
    %v2831 = vpop.f32.mrb[0].mxu0
    %v2832 = vadd.f32 0.0, %v2831
    %v2833 = vpop.f32.mrb[0].mxu0
    %v2834 = vadd.f32 0.0, %v2833
    %2835 = vmatprep.mubr.f32.mxu0 0.0
    %2836 = vmatmul.mubr.f32.gmra.mrb[0].mxu0 %v2682
    %v2837 = vpop.f32.mrb[0].mxu0
    %v2838 = vadd.f32 0.0, %v2837
    %v2839 = vpop.f32.mrb[0].mxu0
    %v2840 = vadd.f32 0.0, %v2839
    %2841 = vmatprep.mubr.f32.mxu0 0.0
    %2842 = vmatmul.mubr.f32.gmra.mrb[0].mxu0 %v2685
    %v2843 = vpop.f32.mrb[0].mxu0
    %v2844 = vadd.f32 0.0, %v2843
    %v2845 = vpop.f32.mrb[0].mxu0
    %v2846 = vadd.f32 0.0, %v2845
    %2847 = vdwg.mxu0
    %v2848 = vadd.f32 %v167, %v2754
    %v2849 = vadd.f32 %v169, %v2756
    %v2850 = vadd.f32 %v173, %v2760
    %v2851 = vadd.f32 %v175, %v2762
    %v2852 = vadd.f32 %v179, %v2766
    %v2853 = vadd.f32 %v181, %v2768
    %v2854 = vadd.f32 %v185, %v2772
    %v2855 = vadd.f32 %v187, %v2774
    %v2856 = vadd.f32 %v191, %v2778
    %v2857 = vadd.f32 %v193, %v2780
    %v2858 = vadd.f32 %v197, %v2784
    %v2859 = vadd.f32 %v199, %v2786
    %v2860 = vadd.f32 %v203, %v2790
    %v2861 = vadd.f32 %v205, %v2792
    %v2862 = vadd.f32 %v209, %v2796
    %v2863 = vadd.f32 %v211, %v2798
    %v2864 = vadd.f32 %v215, %v2802
    %v2865 = vadd.f32 %v217, %v2804
    %v2866 = vadd.f32 %v221, %v2808
    %v2867 = vadd.f32 %v223, %v2810
    %v2868 = vadd.f32 %v227, %v2814
    %v2869 = vadd.f32 %v229, %v2816
    %v2870 = vadd.f32 %v233, %v2820
    %v2871 = vadd.f32 %v235, %v2822
    %v2872 = vadd.f32 %v239, %v2826
    %v2873 = vadd.f32 %v241, %v2828
    %v2874 = vadd.f32 %v245, %v2832
    %v2875 = vadd.f32 %v247, %v2834
    %v2876 = vadd.f32 %v251, %v2838
    %v2877 = vadd.f32 %v253, %v2840
    %v2878 = vadd.f32 %v257, %v2844
    %v2879 = vadd.f32 %v259, %v2846
    %v2880 = vld [vmem:[%s1469] sm:$0x3]
    %v2882 = vlaneseq
    %v2883 = vshrl.u32 %v2882, 7
    %v2884 = vsub.s32 0, %v2883
    %v2885 = vrot.slane %v2880, %v2884
    %v2886 = vlaneseq
    %v2887 = vshrl.u32 %v2886, 7
    %v2888 = vsub.s32 1, %v2887
    %v2889 = vrot.slane %v2880, %v2888
    %v2892 = vadd.f32 %v2848, %v2885
    %v2893 = vadd.f32 %v2849, %v2889
    %v2894 = vadd.f32 %v2850, %v2885
    %v2895 = vadd.f32 %v2851, %v2889
    %v2896 = vadd.f32 %v2852, %v2885
    %v2897 = vadd.f32 %v2853, %v2889
    %v2898 = vadd.f32 %v2854, %v2885
    %v2899 = vadd.f32 %v2855, %v2889
    %v2900 = vadd.f32 %v2856, %v2885
    %v2901 = vadd.f32 %v2857, %v2889
    %v2902 = vadd.f32 %v2858, %v2885
    %v2903 = vadd.f32 %v2859, %v2889
    %v2904 = vadd.f32 %v2860, %v2885
    %v2905 = vadd.f32 %v2861, %v2889
    %v2906 = vadd.f32 %v2862, %v2885
    %v2907 = vadd.f32 %v2863, %v2889
    %v2908 = vadd.f32 %v2864, %v2885
    %v2909 = vadd.f32 %v2865, %v2889
    %v2910 = vadd.f32 %v2866, %v2885
    %v2911 = vadd.f32 %v2867, %v2889
    %v2912 = vadd.f32 %v2868, %v2885
    %v2913 = vadd.f32 %v2869, %v2889
    %v2914 = vadd.f32 %v2870, %v2885
    %v2915 = vadd.f32 %v2871, %v2889
    %v2916 = vadd.f32 %v2872, %v2885
    %v2917 = vadd.f32 %v2873, %v2889
    %v2918 = vadd.f32 %v2874, %v2885
    %v2919 = vadd.f32 %v2875, %v2889
    %v2920 = vadd.f32 %v2876, %v2885
    %v2921 = vadd.f32 %v2877, %v2889
    %v2922 = vadd.f32 %v2878, %v2885
    %v2923 = vadd.f32 %v2879, %v2889
    %vm2924 = vcmp.ge.f32.partialorder %v2892, 0.0
    %vm2925 = vcmp.ge.f32.partialorder %v2893, 0.0
    %vm2926 = vcmp.ge.f32.partialorder %v2894, 0.0
    %vm2927 = vcmp.ge.f32.partialorder %v2895, 0.0
    %vm2928 = vcmp.ge.f32.partialorder %v2896, 0.0
    %vm2929 = vcmp.ge.f32.partialorder %v2897, 0.0
    %vm2930 = vcmp.ge.f32.partialorder %v2898, 0.0
    %vm2931 = vcmp.ge.f32.partialorder %v2899, 0.0
    %vm2932 = vcmp.ge.f32.partialorder %v2900, 0.0
    %vm2933 = vcmp.ge.f32.partialorder %v2901, 0.0
    %vm2934 = vcmp.ge.f32.partialorder %v2902, 0.0
    %vm2935 = vcmp.ge.f32.partialorder %v2903, 0.0
    %vm2936 = vcmp.ge.f32.partialorder %v2904, 0.0
    %vm2937 = vcmp.ge.f32.partialorder %v2905, 0.0
    %vm2938 = vcmp.ge.f32.partialorder %v2906, 0.0
    %vm2939 = vcmp.ge.f32.partialorder %v2907, 0.0
    %vm2940 = vcmp.ge.f32.partialorder %v2908, 0.0
    %vm2941 = vcmp.ge.f32.partialorder %v2909, 0.0
    %vm2942 = vcmp.ge.f32.partialorder %v2910, 0.0
    %vm2943 = vcmp.ge.f32.partialorder %v2911, 0.0
    %vm2944 = vcmp.ge.f32.partialorder %v2912, 0.0
    %vm2945 = vcmp.ge.f32.partialorder %v2913, 0.0
    %vm2946 = vcmp.ge.f32.partialorder %v2914, 0.0
    %vm2947 = vcmp.ge.f32.partialorder %v2915, 0.0
    %vm2948 = vcmp.ge.f32.partialorder %v2916, 0.0
    %vm2949 = vcmp.ge.f32.partialorder %v2917, 0.0
    %vm2950 = vcmp.ge.f32.partialorder %v2918, 0.0
    %vm2951 = vcmp.ge.f32.partialorder %v2919, 0.0
    %vm2952 = vcmp.ge.f32.partialorder %v2920, 0.0
    %vm2953 = vcmp.ge.f32.partialorder %v2921, 0.0
    %vm2954 = vcmp.ge.f32.partialorder %v2922, 0.0
    %vm2955 = vcmp.ge.f32.partialorder %v2923, 0.0
    %v2956 = vmul.f32 %v2892, 0.01
    %v2957 = vmul.f32 %v2893, 0.01
    %v2958 = vmul.f32 %v2894, 0.01
    %v2959 = vmul.f32 %v2895, 0.01
    %v2960 = vmul.f32 %v2896, 0.01
    %v2961 = vmul.f32 %v2897, 0.01
    %v2962 = vmul.f32 %v2898, 0.01
    %v2963 = vmul.f32 %v2899, 0.01
    %v2964 = vmul.f32 %v2900, 0.01
    %v2965 = vmul.f32 %v2901, 0.01
    %v2966 = vmul.f32 %v2902, 0.01
    %v2967 = vmul.f32 %v2903, 0.01
    %v2968 = vmul.f32 %v2904, 0.01
    %v2969 = vmul.f32 %v2905, 0.01
    %v2970 = vmul.f32 %v2906, 0.01
    %v2971 = vmul.f32 %v2907, 0.01
    %v2972 = vmul.f32 %v2908, 0.01
    %v2973 = vmul.f32 %v2909, 0.01
    %v2974 = vmul.f32 %v2910, 0.01
    %v2975 = vmul.f32 %v2911, 0.01
    %v2976 = vmul.f32 %v2912, 0.01
    %v2977 = vmul.f32 %v2913, 0.01
    %v2978 = vmul.f32 %v2914, 0.01
    %v2979 = vmul.f32 %v2915, 0.01
    %v2980 = vmul.f32 %v2916, 0.01
    %v2981 = vmul.f32 %v2917, 0.01
    %v2982 = vmul.f32 %v2918, 0.01
    %v2983 = vmul.f32 %v2919, 0.01
    %v2984 = vmul.f32 %v2920, 0.01
    %v2985 = vmul.f32 %v2921, 0.01
    %v2986 = vmul.f32 %v2922, 0.01
    %v2987 = vmul.f32 %v2923, 0.01
    %v2988 = vsel %vm2924, %v2892, %v2956
    %v2989 = vsel %vm2925, %v2893, %v2957
    %v2990 = vsel %vm2926, %v2894, %v2958
    %v2991 = vsel %vm2927, %v2895, %v2959
    %v2992 = vsel %vm2928, %v2896, %v2960
    %v2993 = vsel %vm2929, %v2897, %v2961
    %v2994 = vsel %vm2930, %v2898, %v2962
    %v2995 = vsel %vm2931, %v2899, %v2963
    %v2996 = vsel %vm2932, %v2900, %v2964
    %v2997 = vsel %vm2933, %v2901, %v2965
    %v2998 = vsel %vm2934, %v2902, %v2966
    %v2999 = vsel %vm2935, %v2903, %v2967
    %v3000 = vsel %vm2936, %v2904, %v2968
    %v3001 = vsel %vm2937, %v2905, %v2969
    %v3002 = vsel %vm2938, %v2906, %v2970
    %v3003 = vsel %vm2939, %v2907, %v2971
    %v3004 = vsel %vm2940, %v2908, %v2972
    %v3005 = vsel %vm2941, %v2909, %v2973
    %v3006 = vsel %vm2942, %v2910, %v2974
    %v3007 = vsel %vm2943, %v2911, %v2975
    %v3008 = vsel %vm2944, %v2912, %v2976
    %v3009 = vsel %vm2945, %v2913, %v2977
    %v3010 = vsel %vm2946, %v2914, %v2978
    %v3011 = vsel %vm2947, %v2915, %v2979
    %v3012 = vsel %vm2948, %v2916, %v2980
    %v3013 = vsel %vm2949, %v2917, %v2981
    %v3014 = vsel %vm2950, %v2918, %v2982
    %v3015 = vsel %vm2951, %v2919, %v2983
    %v3016 = vsel %vm2952, %v2920, %v2984
    %v3017 = vsel %vm2953, %v2921, %v2985
    %v3018 = vsel %vm2954, %v2922, %v2986
    %v3019 = vsel %vm2955, %v2923, %v2987
    %3020 = vmatprep.subr.mxu0 %v2989
    %3021 = vmatpush1.xpose.msra.mxu0 %v2988
    %3022 = vmatprep.subr.mxu0 %v2991
    %3023 = vmatpush1.xpose.msra.mxu0 %v2990
    %3024 = vmatprep.subr.mxu0 %v2993
    %3025 = vmatpush1.xpose.msra.mxu0 %v2992
    %3026 = vmatprep.subr.mxu0 %v2995
    %3027 = vmatpush1.xpose.msra.mxu0 %v2994
    %3028 = vmatprep.subr.mxu0 %v2997
    %3029 = vmatpush1.xpose.msra.mxu0 %v2996
    %3030 = vmatprep.subr.mxu0 %v2999
    %3031 = vmatpush1.xpose.msra.mxu0 %v2998
    %3032 = vmatprep.subr.mxu0 %v3001
    %3033 = vmatpush1.xpose.msra.mxu0 %v3000
    %3034 = vmatprep.subr.mxu0 %v3003
    %3035 = vmatpush1.xpose.msra.mxu0 %v3002
    %3036 = vmatprep.subr.mxu0 %v3005
    %3037 = vmatpush1.xpose.msra.mxu0 %v3004
    %3038 = vmatprep.subr.mxu0 %v3007
    %3039 = vmatpush1.xpose.msra.mxu0 %v3006
    %3040 = vmatprep.subr.mxu0 %v3009
    %3041 = vmatpush1.xpose.msra.mxu0 %v3008
    %3042 = vmatprep.subr.mxu0 %v3011
    %3043 = vmatpush1.xpose.msra.mxu0 %v3010
    %3044 = vmatprep.subr.mxu0 %v3013
    %3045 = vmatpush1.xpose.msra.mxu0 %v3012
    %3046 = vmatprep.subr.mxu0 %v3015
    %3047 = vmatpush1.xpose.msra.mxu0 %v3014
    %3048 = vmatprep.subr.mxu0 %v3017
    %3049 = vmatpush1.xpose.msra.mxu0 %v3016
    %3050 = vmatprep.subr.mxu0 %v3019
    %3051 = vmatpush1.xpose.msra.mxu0 %v3018
    %3052 = vmatprep.subr.mxu0 0.0
    %3053 = vmatpush1.xpose.msra.mxu0 0.0
    %3054 = vmatprep.subr.mxu0 0.0
    %3055 = vmatpush1.xpose.msra.mxu0 0.0
    %3056 = vmatprep.subr.mxu0 0.0
    %3057 = vmatpush1.xpose.msra.mxu0 0.0
    %3058 = vmatprep.subr.mxu0 0.0
    %3059 = vmatpush1.xpose.msra.mxu0 0.0
    %3060 = vmatprep.subr.mxu0 0.0
    %3061 = vmatpush1.xpose.msra.mxu0 0.0
    %3062 = vmatprep.subr.mxu0 0.0
    %3063 = vmatpush1.xpose.msra.mxu0 0.0
    %3064 = vmatprep.subr.mxu0 0.0
    %3065 = vmatpush1.xpose.msra.mxu0 0.0
    %3066 = vmatprep.subr.mxu0 0.0
    %3067 = vmatpush1.xpose.msra.mxu0 0.0
    %3068 = vmatprep.subr.mxu0 0.0
    %3069 = vmatpush1.xpose.msra.mxu0 0.0
    %3070 = vmatprep.subr.mxu0 0.0
    %3071 = vmatpush1.xpose.msra.mxu0 0.0
    %3072 = vmatprep.subr.mxu0 0.0
    %3073 = vmatpush1.xpose.msra.mxu0 0.0
    %3074 = vmatprep.subr.mxu0 0.0
    %3075 = vmatpush1.xpose.msra.mxu0 0.0
    %3076 = vmatprep.subr.mxu0 0.0
    %3077 = vmatpush1.xpose.msra.mxu0 0.0
    %3078 = vmatprep.subr.mxu0 0.0
    %3079 = vmatpush1.xpose.msra.mxu0 0.0
    %3080 = vmatprep.subr.mxu0 0.0
    %3081 = vmatpush1.xpose.msra.mxu0 0.0
    %3082 = vmatprep.subr.mxu0 0.0
    %3083 = vmatpush1.xpose.msra.mxu0 0.0
    %3084 = vmatprep.mubr.f32.mxu0 %v264
    %3085 = vmatmul.mubr.f32.gmra.mrb[0].mxu0 %v263
    %v3086 = vpop.f32.mrb[0].mxu0
    %v3087 = vadd.f32 %v667, %v3086
    %v3088 = vpop.f32.mrb[0].mxu0
    %3089 = vdwg.mxu0
    %s3090 = scalar_lea.vmem [#allocation2], 40
    %3091 = vst [vmem:[%s3090] sm:$0xff] %v3087
    // Predicated region
    $region30: #{tpu_custom_call.1} parent=1 // pred_check
      _
    $region31: #{tpu_custom_call.1} parent=1 // pred_check_branch
      %3093 = sbr.rel (0) target = $region33
    $region32: #{tpu_custom_call.1} parent=1 // pred_region
      %s3095 = ssub.s32 768, 768
      %3096 = vsyncadd [#allocation3], %s3095
      %s3097 = sshll.u32 [#allocation2], 4
      %s3098 = int_to_ptr.vmem [resolvable:$true] %s3097
      %3103 = dma.vmem_to_hbm [thread:$0]  %s3098, 768, %s7, [#allocation3], 128, 128, 8
    $region33: #{tpu_custom_call.1} parent=1 // pred_fallthru
      _
    // Predicated region
    $region34: #{tpu_custom_call.1} parent=1 // pred_check
      _
    $region35: #{tpu_custom_call.1} parent=1 // pred_check_branch
      %3105 = sbr.rel (0) target = $region37
    $region36: #{tpu_custom_call.1} parent=1 // pred_region
      %3106 = dma.done [#allocation3], 768
    $region37: #{tpu_custom_call.1} parent=1 // pred_fallthru
      _
    %3107 = vsyncpa [#allocation3], 1

</llo_original>
